<compile_context>
chip_gen: v7x
topology: tpu7x:2x2x1
jax: 0.10.0
libtpu: 0.0.40
codegen_flags: <defaults>
</compile_context>

<pallas_src>
import functools

import jax
import jax.numpy as jnp
from jax import lax
from jax.experimental import pallas as pl
from jax.experimental.pallas import tpu as pltpu

NEG_SLOPE = 0.2      # act('LeakyReLU') in the DIP helpers = nn.LeakyReLU(0.2)
BN_EPS = 1e-5
HI = lax.Precision.HIGHEST


def _leaky(v):
    return jnp.where(v >= 0, v, NEG_SLOPE * v)


def _upsample_matrix(L):
    """(2L, L) bilinear interpolation matrix: scale_factor=2, align_corners=True (PyTorch)."""
    Lo = 2 * L
    i = jnp.arange(Lo, dtype=jnp.float32)
    src = i * (L - 1) / (Lo - 1)
    i0 = jnp.clip(jnp.floor(src).astype(jnp.int32), 0, L - 2)
    frac = src - i0.astype(jnp.float32)
    rows = jnp.arange(Lo)
    U = jnp.zeros((Lo, L), jnp.float32)
    U = U.at[rows, i0].add(1.0 - frac)
    U = U.at[rows, i0 + 1].add(frac)
    return U


# --------------------------------- fused Pallas kernel ---------------------------------
def _drm_kernel(guide_ref, x_ref, ut_ref, m3_ref, mwm_ref, mup_ref, gstat_ref,
                bwm_ref, g_wm_ref, g_up_ref, be_up_ref, g_out_ref, be_out_ref,
                out_ref, taps_ref, *, cn, w2, s2):
    def dot(a, b):
        # HIGHEST -> fp32 MXU contraction; matches the f32 reference / PyTorch numerics.
        return jnp.dot(a, b, preferred_element_type=jnp.float32, precision=HI)

    gstat = gstat_ref[...]                         # (CN, CN) = kron(I_C, 1_{NxN}) / (N*S2)

    def bn_stats(p):
        """Training-mode BN stats of stacked (CN, S2) planes, single pass.

        Group-sum+broadcast over the N rows of each channel is one lane-dense MXU matmul;
        the lane reduction is one XLU reduce; var = E[x^2] - mean^2."""
        mean = jnp.sum(dot(gstat, p), axis=1, keepdims=True)        # (CN, 1)
        ex2 = jnp.sum(dot(gstat, p * p), axis=1, keepdims=True)     # (CN, 1)
        return mean, ex2 - mean * mean

    def bn_apply(p, mean, var, gamma, beta):
        return (p - mean) * (gamma * lax.rsqrt(var + BN_EPS)) + beta

    # ---- flat-index masks for the in-register 1-px reflection pad ----------------------
    flat = lax.broadcasted_iota(jnp.int32, (cn, s2), 1)
    col = jnp.bitwise_and(flat, w2 - 1)            # w2 is a power of two (checked in wrapper)
    col_first = col == 0
    col_last = col == w2 - 1
    row_first = flat < w2
    row_last = flat >= s2 - w2

    # ===== weight_map branch: ReflectPad1 + Conv3x3 -> BN -> Conv1x1 -> Sigmoid ==========
    # pltpu.roll convention hardcoded (out[..., i] = in[..., (i - shift) mod s2], i.e. the
    # jnp.roll convention); validated by the reference comparison below, not a runtime probe.
    g = guide_ref[...]                                       # (CN, S2) stacked channel planes
    lft = pltpu.roll(g, shift=1, axis=1)                     # value at flat index i-1
    rgt = pltpu.roll(g, shift=s2 - 1, axis=1)                # value at flat index i+1
    col_taps = (jnp.where(col_first, rgt, lft),              # dw = 0 (reflect at col 0)
                g,                                           # dw = 1
                jnp.where(col_last, lft, rgt))               # dw = 2 (reflect at col 2W-1)
    for dw in range(3):
        q = col_taps[dw]
        up = pltpu.roll(q, shift=w2, axis=1)                 # value at flat index i-W2
        dn = pltpu.roll(q, shift=s2 - w2, axis=1)            # value at flat index i+W2
        row_taps = (jnp.where(row_first, dn, up),            # dh = 0 (reflect at row 0)
                    q,                                       # dh = 1
                    jnp.where(row_last, up, dn))             # dh = 2 (reflect at row 2H-1)
        for dh in range(3):
            t = dh * 3 + dw
            taps_ref[pl.ds(t * cn, cn), :] = row_taps[dh]    # aligned (CN, S2) tile store

    # 3x3 conv over (taps, channels) = ONE MXU matmul against kron(w3, I_N).
    # Conv bias b3 skipped: a per-channel constant is cancelled by the BatchNorm mean.
    conv3 = dot(m3_ref[...], taps_ref[...])                  # (CN, 9*CN) @ (9*CN, S2)
    mean_w, var_w = bn_stats(conv3)
    scale_w = g_wm_ref[...] * lax.rsqrt(var_w + BN_EPS)      # (CN, 1)
    # BN beta + conv bias are pre-folded in the wrapper (bwm_ref = b_wm + w_wm @ be_wm),
    # so only the data-dependent centre/scale is applied before the 1x1-conv matmul.
    pre = dot(mwm_ref[...], (conv3 - mean_w) * scale_w) + bwm_ref[...]
    weight = pl.reciprocal(1.0 + jnp.exp(-pre), approx=False)   # sigmoid via EUP reciprocal

    # ===== upsample branch: bilinear x2 -> Conv1x1 -> BN -> LeakyReLU(0.2) ===============
    # TODO(synk): switch to separable U_h / U_w matmuls before scaling H,W up — the kron
    # upsample matrix is 4*(H*W)^2 bytes and would exhaust v7x's 64 MiB VMEM at large sizes.
    xup = dot(x_ref[...], ut_ref[...])                       # (CN, HW) @ (HW, S2)
    xb = dot(mup_ref[...], xup)                              # 1x1 conv; bias b_up dead (BN next)
    mean_u, var_u = bn_stats(xb)
    xbranch = _leaky(bn_apply(xb, mean_u, var_u, g_up_ref[...], be_up_ref[...]))

    # ===== combine + final BatchNorm; single full-width unmasked (CN, S2) store ==========
    comb = xbranch + weight
    mean_o, var_o = bn_stats(comb)
    out_ref[...] = bn_apply(comb, mean_o, var_o, g_out_ref[...], be_out_ref[...])


# --------------------------------- wrapper ---------------------------------------------
def drm_forward(guide_nchw, x_nchw, params):
    """Fused DRM forward. guide: (N, C, 2H, 2W), x: (N, C, H, W); NCHW like PyTorch."""
    N, C, H2, W2 = guide_nchw.shape
    _, _, H, W = x_nchw.shape
    if (H2, W2) != (2 * H, 2 * W):
        raise ValueError("guide must be at the 2x-upsampled resolution of x")
    if W2 & (W2 - 1):
        raise ValueError("kernel uses a bitmask for the flat->column map; needs power-of-two width")
    S2, S1, CN = H2 * W2, H * W, C * N

    # Sublane-packed channel-plane layout: (channel, batch) stacked on the sublane axis,
    # flattened 2Hx2W spatial on the lane axis -> full (8,128)-tiled vregs, unmasked stores.
    # (Layout plumbing only, done once outside the kernel.)
    guide_s = jnp.transpose(guide_nchw, (1, 0, 2, 3)).reshape(CN, S2)
    x_s = jnp.transpose(x_nchw, (1, 0, 2, 3)).reshape(CN, S1)

    eye_n = jnp.eye(N, dtype=jnp.float32)
    # bilinear x2 / align_corners=True as a single (H*W -> 2H*2W) linear map
    ut = jnp.kron(_upsample_matrix(H), _upsample_matrix(W)).T                   # (S1, S2)
    # channel/tap mixing matrices for the stacked (channel, batch) row layout
    m3 = jnp.kron(jnp.transpose(params['w3'], (0, 2, 3, 1)).reshape(C, 9 * C), eye_n)   # (CN, 9CN)
    mwm = jnp.kron(params['w_wm'], eye_n)                                       # (CN, CN)
    mup = jnp.kron(params['w_up'], eye_n)                                       # (CN, CN)
    # per-channel group-average matrix for the in-kernel BatchNorm statistics
    gstat = jnp.kron(jnp.eye(C, dtype=jnp.float32),
                     jnp.ones((N, N), jnp.float32)) / float(N * S2)             # (CN, CN)

    def rows(v):                                                                # (C,) -> (CN, 1)
        return jnp.repeat(v.astype(jnp.float32), N).reshape(CN, 1)

    # fold BN beta of the weight_map branch through the 1x1 conv at trace time
    bwm_eff = rows(params['b_wm'] + params['w_wm'] @ params['be_wm'])

    vmem = pl.BlockSpec(memory_space=pltpu.MemorySpace.VMEM)
    out_s = pl.pallas_call(
        functools.partial(_drm_kernel, cn=CN, w2=W2, s2=S2),
        out_shape=jax.ShapeDtypeStruct((CN, S2), jnp.float32),
        in_specs=[vmem] * 13,
        out_specs=vmem,
        scratch_shapes=[pltpu.VMEM((9 * CN, S2), jnp.float32)],   # stacked 3x3 tap planes
    )(guide_s, x_s, ut, m3, mwm, mup, gstat,
      bwm_eff, rows(params['g_wm']), rows(params['g_up']), rows(params['be_up']),
      rows(params['g_out']), rows(params['be_out']))
    # TODO(synk): if DRM is called repeatedly, batch the invocations into one pallas_call with
    # a leading grid axis (dimension_semantics=('parallel',)) to amortize launch overhead and
    # use both v7x TensorCores.

    return jnp.transpose(out_s.reshape(C, N, H2, W2), (1, 0, 2, 3))


# --------------------------------- parameters -------------------------------------------
def init_params(key, C):
    ks = jax.random.split(key, 12)

    def rnd(k, shape, scale=0.2):
        return scale * jax.random.normal(k, shape, jnp.float32)

    return dict(
        # weight_map = conv3x3(reflect pad 1) -> bn -> conv1x1 -> sigmoid
        w3=rnd(ks[0], (C, C, 3, 3)),          # OIHW
        b3=rnd(ks[1], (C,)),                  # dead after BN (reference-only; verifies identity)
        g_wm=1.0 + rnd(ks[2], (C,), 0.1),
        be_wm=rnd(ks[3], (C,), 0.1),
        w_wm=rnd(ks[4], (C, C)),              # (out, in)
        b_wm=rnd(ks[5], (C,)),
        # upsample_norm = upsample x2 -> conv1x1 -> bn -> LeakyReLU
        w_up=rnd(ks[6], (C, C)),              # (out, in)
        b_up=rnd(ks[7], (C,)),                # dead after BN (reference-only; verifies identity)
        g_up=1.0 + rnd(ks[8], (C,), 0.1),
        be_up=rnd(ks[9], (C,), 0.1),
        # final norm
        g_out=1.0 + rnd(ks[10], (C,), 0.1),
        be_out=rnd(ks[11], (C,), 0.1),
    )


# --------------------------------- pure-JAX reference -----------------------------------
def drm_reference(guide, x, params):
    """Reference DRM forward (NCHW, training-mode BatchNorm); includes the dead biases."""
    C = guide.shape[1]

    def bn(v, g, b):
        m = jnp.mean(v, axis=(0, 2, 3), keepdims=True)
        var = jnp.mean(jnp.square(v - m), axis=(0, 2, 3), keepdims=True)
        return (v - m) * lax.rsqrt(var + BN_EPS) * g.reshape(1, C, 1, 1) + b.reshape(1, C, 1, 1)

    def conv1x1(v, w_oi, b):
        return jnp.einsum('nihw,oi->nohw', v, w_oi, precision=HI) + b.reshape(1, C, 1, 1)

    # weight_map(guide)
    gpad = jnp.pad(guide, ((0, 0), (0, 0), (1, 1), (1, 1)), mode='reflect')
    wmap = lax.conv_general_dilated(gpad, params['w3'], (1, 1), 'VALID',
                                    dimension_numbers=('NCHW', 'OIHW', 'NCHW'), precision=HI)
    wmap = wmap + params['b3'].reshape(1, C, 1, 1)
    wmap = bn(wmap, params['g_wm'], params['be_wm'])
    wmap = 1.0 / (1.0 + jnp.exp(-conv1x1(wmap, params['w_wm'], params['b_wm'])))

    # upsample_norm(x)
    H, W = x.shape[2], x.shape[3]
    xu = jnp.einsum('ip,jq,ncpq->ncij', _upsample_matrix(H), _upsample_matrix(W), x, precision=HI)
    xu = conv1x1(xu, params['w_up'], params['b_up'])
    xu = _leaky(bn(xu, params['g_up'], params['be_up']))

    return bn(xu + wmap, params['g_out'], params['be_out'])


if __name__ == "__main__":
    # x is the low-res feature map; guide is at the 2x-upsampled resolution (as required
    # by the module: out = upsample_norm(x) + weight_map(guide)).
    N, C, H, W = 2, 4, 8, 8
    key = jax.random.PRNGKey(0)
    kg, kx, kp = jax.random.split(key, 3)

    guide = jax.random.normal(kg, (N, C, 2 * H, 2 * W), jnp.float32)   # NCHW, like PyTorch
    x = jax.random.normal(kx, (N, C, H, W), jnp.float32)
    params = init_params(kp, C)

    out = jax.block_until_ready(drm_forward(guide, x, params))
    ref = drm_reference(guide, x, params)

    err = float(jnp.max(jnp.abs(out - ref)))
    # With precision=HIGHEST on every in-kernel matmul the expected error is ~1e-5; any
    # semantic mistake (e.g. a flipped reflection) would show up as O(0.1) or larger.
    ok = bool(jnp.all(jnp.isfinite(out))) and out.shape == ref.shape and err < 5e-3
    print("KERNEL_OK" if ok else f"MISMATCH max_abs_err={err} shape={out.shape}")
</pallas_src>

<mosaic_0001>
module attributes {stable_mosaic.version = 11 : i64} {
  func.func @_drm_kernel(%arg0: memref<8x256xf32, #tpu.memory_space<vmem>>, %arg1: memref<8x64xf32, #tpu.memory_space<vmem>>, %arg2: memref<64x256xf32, #tpu.memory_space<vmem>>, %arg3: memref<8x72xf32, #tpu.memory_space<vmem>>, %arg4: memref<8x8xf32, #tpu.memory_space<vmem>>, %arg5: memref<8x8xf32, #tpu.memory_space<vmem>>, %arg6: memref<8x8xf32, #tpu.memory_space<vmem>>, %arg7: memref<8x1xf32, #tpu.memory_space<vmem>>, %arg8: memref<8x1xf32, #tpu.memory_space<vmem>>, %arg9: memref<8x1xf32, #tpu.memory_space<vmem>>, %arg10: memref<8x1xf32, #tpu.memory_space<vmem>>, %arg11: memref<8x1xf32, #tpu.memory_space<vmem>>, %arg12: memref<8x1xf32, #tpu.memory_space<vmem>>, %arg13: memref<8x256xf32, #tpu.memory_space<vmem>>, %arg14: memref<72x256xf32, #tpu.memory_space<vmem>>) attributes {dimension_semantics = [], scalar_prefetch = 0 : i64, scratch_operands = 1 : i64, tpu.core_type = #tpu.core_type<tc>} {
    %c0 = arith.constant 0 : index
    %c0_0 = arith.constant 0 : index
    %0 = vector.load %arg6[%c0, %c0_0] : memref<8x8xf32, #tpu.memory_space<vmem>>, vector<8x8xf32>
    %1 = tpu.iota {dimensions = array<i32: 1>} : vector<8x256xi32>
    %c15_i32 = arith.constant 15 : i32
    %2 = vector.broadcast %c15_i32 : i32 to vector<8x256xi32>
    %3 = arith.andi %1, %2 : vector<8x256xi32>
    %c0_i32 = arith.constant 0 : i32
    %4 = vector.broadcast %c0_i32 : i32 to vector<8x256xi32>
    %5 = arith.cmpi eq, %3, %4 : vector<8x256xi32>
    %c15_i32_1 = arith.constant 15 : i32
    %6 = vector.broadcast %c15_i32_1 : i32 to vector<8x256xi32>
    %7 = arith.cmpi eq, %3, %6 : vector<8x256xi32>
    %c16_i32 = arith.constant 16 : i32
    %8 = vector.broadcast %c16_i32 : i32 to vector<8x256xi32>
    %9 = arith.cmpi slt, %1, %8 : vector<8x256xi32>
    %c240_i32 = arith.constant 240 : i32
    %10 = vector.broadcast %c240_i32 : i32 to vector<8x256xi32>
    %11 = arith.cmpi sge, %1, %10 : vector<8x256xi32>
    %c0_2 = arith.constant 0 : index
    %c0_3 = arith.constant 0 : index
    %12 = vector.load %arg0[%c0_2, %c0_3] : memref<8x256xf32, #tpu.memory_space<vmem>>, vector<8x256xf32>
    %c1_i32 = arith.constant 1 : i32
    %13 = tpu.dynamic_rotate %12 by %c1_i32 dim 1 : vector<8x256xf32>, i32 -> vector<8x256xf32>
    %c255_i32 = arith.constant 255 : i32
    %14 = tpu.dynamic_rotate %12 by %c255_i32 dim 1 : vector<8x256xf32>, i32 -> vector<8x256xf32>
    %15 = arith.select %5, %14, %13 : vector<8x256xi1>, vector<8x256xf32>
    %16 = arith.select %7, %13, %14 : vector<8x256xi1>, vector<8x256xf32>
    %c16_i32_4 = arith.constant 16 : i32
    %17 = tpu.dynamic_rotate %15 by %c16_i32_4 dim 1 : vector<8x256xf32>, i32 -> vector<8x256xf32>
    %c240_i32_5 = arith.constant 240 : i32
    %18 = tpu.dynamic_rotate %15 by %c240_i32_5 dim 1 : vector<8x256xf32>, i32 -> vector<8x256xf32>
    %19 = arith.select %9, %18, %17 : vector<8x256xi1>, vector<8x256xf32>
    %20 = arith.select %11, %17, %18 : vector<8x256xi1>, vector<8x256xf32>
    %c0_6 = arith.constant 0 : index
    %c0_7 = arith.constant 0 : index
    %21 = vector.load %arg14[%c0_6, %c0_7] : memref<72x256xf32, #tpu.memory_space<vmem>>, vector<8x256xf32>
    tpu.vector_store %arg14[%c0_6, %c0_7], %19 {strides = array<i32>} : memref<72x256xf32, #tpu.memory_space<vmem>>, vector<8x256xf32>,
    %c24 = arith.constant 24 : index
    %c0_8 = arith.constant 0 : index
    %22 = vector.load %arg14[%c24, %c0_8] : memref<72x256xf32, #tpu.memory_space<vmem>>, vector<8x256xf32>
    tpu.vector_store %arg14[%c24, %c0_8], %15 {strides = array<i32>} : memref<72x256xf32, #tpu.memory_space<vmem>>, vector<8x256xf32>,
    %c48 = arith.constant 48 : index
    %c0_9 = arith.constant 0 : index
    %23 = vector.load %arg14[%c48, %c0_9] : memref<72x256xf32, #tpu.memory_space<vmem>>, vector<8x256xf32>
    tpu.vector_store %arg14[%c48, %c0_9], %20 {strides = array<i32>} : memref<72x256xf32, #tpu.memory_space<vmem>>, vector<8x256xf32>,
    %c16_i32_10 = arith.constant 16 : i32
    %24 = tpu.dynamic_rotate %12 by %c16_i32_10 dim 1 : vector<8x256xf32>, i32 -> vector<8x256xf32>
    %c240_i32_11 = arith.constant 240 : i32
    %25 = tpu.dynamic_rotate %12 by %c240_i32_11 dim 1 : vector<8x256xf32>, i32 -> vector<8x256xf32>
    %26 = arith.select %9, %25, %24 : vector<8x256xi1>, vector<8x256xf32>
    %27 = arith.select %11, %24, %25 : vector<8x256xi1>, vector<8x256xf32>
    %c8 = arith.constant 8 : index
    %c0_12 = arith.constant 0 : index
    %28 = vector.load %arg14[%c8, %c0_12] : memref<72x256xf32, #tpu.memory_space<vmem>>, vector<8x256xf32>
    tpu.vector_store %arg14[%c8, %c0_12], %26 {strides = array<i32>} : memref<72x256xf32, #tpu.memory_space<vmem>>, vector<8x256xf32>,
    %c32 = arith.constant 32 : index
    %c0_13 = arith.constant 0 : index
    %29 = vector.load %arg14[%c32, %c0_13] : memref<72x256xf32, #tpu.memory_space<vmem>>, vector<8x256xf32>
    tpu.vector_store %arg14[%c32, %c0_13], %12 {strides = array<i32>} : memref<72x256xf32, #tpu.memory_space<vmem>>, vector<8x256xf32>,
    %c56 = arith.constant 56 : index
    %c0_14 = arith.constant 0 : index
    %30 = vector.load %arg14[%c56, %c0_14] : memref<72x256xf32, #tpu.memory_space<vmem>>, vector<8x256xf32>
    tpu.vector_store %arg14[%c56, %c0_14], %27 {strides = array<i32>} : memref<72x256xf32, #tpu.memory_space<vmem>>, vector<8x256xf32>,
    %c16_i32_15 = arith.constant 16 : i32
    %31 = tpu.dynamic_rotate %16 by %c16_i32_15 dim 1 : vector<8x256xf32>, i32 -> vector<8x256xf32>
    %c240_i32_16 = arith.constant 240 : i32
    %32 = tpu.dynamic_rotate %16 by %c240_i32_16 dim 1 : vector<8x256xf32>, i32 -> vector<8x256xf32>
    %33 = arith.select %9, %32, %31 : vector<8x256xi1>, vector<8x256xf32>
    %34 = arith.select %11, %31, %32 : vector<8x256xi1>, vector<8x256xf32>
    %c16 = arith.constant 16 : index
    %c0_17 = arith.constant 0 : index
    %35 = vector.load %arg14[%c16, %c0_17] : memref<72x256xf32, #tpu.memory_space<vmem>>, vector<8x256xf32>
    tpu.vector_store %arg14[%c16, %c0_17], %33 {strides = array<i32>} : memref<72x256xf32, #tpu.memory_space<vmem>>, vector<8x256xf32>,
    %c40 = arith.constant 40 : index
    %c0_18 = arith.constant 0 : index
    %36 = vector.load %arg14[%c40, %c0_18] : memref<72x256xf32, #tpu.memory_space<vmem>>, vector<8x256xf32>
    tpu.vector_store %arg14[%c40, %c0_18], %16 {strides = array<i32>} : memref<72x256xf32, #tpu.memory_space<vmem>>, vector<8x256xf32>,
    %c64 = arith.constant 64 : index
    %c0_19 = arith.constant 0 : index
    %37 = vector.load %arg14[%c64, %c0_19] : memref<72x256xf32, #tpu.memory_space<vmem>>, vector<8x256xf32>
    tpu.vector_store %arg14[%c64, %c0_19], %34 {strides = array<i32>} : memref<72x256xf32, #tpu.memory_space<vmem>>, vector<8x256xf32>,
    %c0_20 = arith.constant 0 : index
    %c0_21 = arith.constant 0 : index
    %38 = vector.load %arg3[%c0_20, %c0_21] : memref<8x72xf32, #tpu.memory_space<vmem>>, vector<8x72xf32>
    %c0_22 = arith.constant 0 : index
    %c0_23 = arith.constant 0 : index
    %39 = vector.load %arg14[%c0_22, %c0_23] : memref<72x256xf32, #tpu.memory_space<vmem>>, vector<72x256xf32>
    %cst = arith.constant dense<0.000000e+00> : vector<8x256xf32>
    %40 = tpu.matmul %38, %39, %cst {dimension_numbers = #tpu.dot_dimension_numbers<[1], [0], [0], [1], [0, 0, 1, 1], [], []>, precision = #tpu.contract_precision<fp32>} : vector<8x72xf32>, vector<72x256xf32>, vector<8x256xf32> -> vector<8x256xf32>
    %cst_24 = arith.constant dense<0.000000e+00> : vector<8x256xf32>
    %41 = tpu.matmul %0, %40, %cst_24 {dimension_numbers = #tpu.dot_dimension_numbers<[1], [0], [0], [1], [0, 0, 1, 1], [], []>, precision = #tpu.contract_precision<fp32>} : vector<8x8xf32>, vector<8x256xf32>, vector<8x256xf32> -> vector<8x256xf32>
    %cst_25 = arith.constant dense<0.000000e+00> : vector<8xf32>
    %42 = vector.multi_reduction <add>, %41, %cst_25 [1] : vector<8x256xf32> to vector<8xf32>
    %43 = vector.shape_cast %42 : vector<8xf32> to vector<8x1xf32>
    %44 = arith.mulf %40, %40 : vector<8x256xf32>
    %cst_26 = arith.constant dense<0.000000e+00> : vector<8x256xf32>
    %45 = tpu.matmul %0, %44, %cst_26 {dimension_numbers = #tpu.dot_dimension_numbers<[1], [0], [0], [1], [0, 0, 1, 1], [], []>, precision = #tpu.contract_precision<fp32>} : vector<8x8xf32>, vector<8x256xf32>, vector<8x256xf32> -> vector<8x256xf32>
    %cst_27 = arith.constant dense<0.000000e+00> : vector<8xf32>
    %46 = vector.multi_reduction <add>, %45, %cst_27 [1] : vector<8x256xf32> to vector<8xf32>
    %47 = vector.shape_cast %46 : vector<8xf32> to vector<8x1xf32>
    %48 = arith.mulf %43, %43 : vector<8x1xf32>
    %49 = arith.subf %47, %48 : vector<8x1xf32>
    %c0_28 = arith.constant 0 : index
    %c0_29 = arith.constant 0 : index
    %50 = vector.load %arg8[%c0_28, %c0_29] : memref<8x1xf32, #tpu.memory_space<vmem>>, vector<8x1xf32>
    %cst_30 = arith.constant 9.99999974E-6 : f32
    %51 = vector.broadcast %cst_30 : f32 to vector<8x1xf32>
    %52 = arith.addf %49, %51 : vector<8x1xf32>
    %53 = math.rsqrt %52 : vector<8x1xf32>
    %54 = arith.mulf %50, %53 : vector<8x1xf32>
    %c0_31 = arith.constant 0 : index
    %c0_32 = arith.constant 0 : index
    %55 = vector.load %arg4[%c0_31, %c0_32] : memref<8x8xf32, #tpu.memory_space<vmem>>, vector<8x8xf32>
    %56 = vector.broadcast %43 : vector<8x1xf32> to vector<8x256xf32>
    %57 = arith.subf %40, %56 : vector<8x256xf32>
    %58 = vector.broadcast %54 : vector<8x1xf32> to vector<8x256xf32>
    %59 = arith.mulf %57, %58 : vector<8x256xf32>
    %cst_33 = arith.constant dense<0.000000e+00> : vector<8x256xf32>
    %60 = tpu.matmul %55, %59, %cst_33 {dimension_numbers = #tpu.dot_dimension_numbers<[1], [0], [0], [1], [0, 0, 1, 1], [], []>, precision = #tpu.contract_precision<fp32>} : vector<8x8xf32>, vector<8x256xf32>, vector<8x256xf32> -> vector<8x256xf32>
    %c0_34 = arith.constant 0 : index
    %c0_35 = arith.constant 0 : index
    %61 = vector.load %arg7[%c0_34, %c0_35] : memref<8x1xf32, #tpu.memory_space<vmem>>, vector<8x1xf32>
    %62 = vector.broadcast %61 : vector<8x1xf32> to vector<8x256xf32>
    %63 = arith.addf %60, %62 : vector<8x256xf32>
    %cst_36 = arith.constant 0.000000e+00 : f32
    %64 = vector.broadcast %cst_36 : f32 to vector<8x256xf32>
    %65 = arith.subf %64, %63 : vector<8x256xf32>
    %66 = math.exp %65 : vector<8x256xf32>
    %cst_37 = arith.constant 1.000000e+00 : f32
    %67 = vector.broadcast %cst_37 : f32 to vector<8x256xf32>
    %68 = arith.addf %67, %66 : vector<8x256xf32>
    %69 = tpu.reciprocal %68 : vector<8x256xf32> -> vector<8x256xf32>
    %c0_38 = arith.constant 0 : index
    %c0_39 = arith.constant 0 : index
    %70 = vector.load %arg1[%c0_38, %c0_39] : memref<8x64xf32, #tpu.memory_space<vmem>>, vector<8x64xf32>
    %c0_40 = arith.constant 0 : index
    %c0_41 = arith.constant 0 : index
    %71 = vector.load %arg2[%c0_40, %c0_41] : memref<64x256xf32, #tpu.memory_space<vmem>>, vector<64x256xf32>
    %cst_42 = arith.constant dense<0.000000e+00> : vector<8x256xf32>
    %72 = tpu.matmul %70, %71, %cst_42 {dimension_numbers = #tpu.dot_dimension_numbers<[1], [0], [0], [1], [0, 0, 1, 1], [], []>, precision = #tpu.contract_precision<fp32>} : vector<8x64xf32>, vector<64x256xf32>, vector<8x256xf32> -> vector<8x256xf32>
    %c0_43 = arith.constant 0 : index
    %c0_44 = arith.constant 0 : index
    %73 = vector.load %arg5[%c0_43, %c0_44] : memref<8x8xf32, #tpu.memory_space<vmem>>, vector<8x8xf32>
    %cst_45 = arith.constant dense<0.000000e+00> : vector<8x256xf32>
    %74 = tpu.matmul %73, %72, %cst_45 {dimension_numbers = #tpu.dot_dimension_numbers<[1], [0], [0], [1], [0, 0, 1, 1], [], []>, precision = #tpu.contract_precision<fp32>} : vector<8x8xf32>, vector<8x256xf32>, vector<8x256xf32> -> vector<8x256xf32>
    %cst_46 = arith.constant dense<0.000000e+00> : vector<8x256xf32>
    %75 = tpu.matmul %0, %74, %cst_46 {dimension_numbers = #tpu.dot_dimension_numbers<[1], [0], [0], [1], [0, 0, 1, 1], [], []>, precision = #tpu.contract_precision<fp32>} : vector<8x8xf32>, vector<8x256xf32>, vector<8x256xf32> -> vector<8x256xf32>
    %cst_47 = arith.constant dense<0.000000e+00> : vector<8xf32>
    %76 = vector.multi_reduction <add>, %75, %cst_47 [1] : vector<8x256xf32> to vector<8xf32>
    %77 = vector.shape_cast %76 : vector<8xf32> to vector<8x1xf32>
    %78 = arith.mulf %74, %74 : vector<8x256xf32>
    %cst_48 = arith.constant dense<0.000000e+00> : vector<8x256xf32>
    %79 = tpu.matmul %0, %78, %cst_48 {dimension_numbers = #tpu.dot_dimension_numbers<[1], [0], [0], [1], [0, 0, 1, 1], [], []>, precision = #tpu.contract_precision<fp32>} : vector<8x8xf32>, vector<8x256xf32>, vector<8x256xf32> -> vector<8x256xf32>
    %cst_49 = arith.constant dense<0.000000e+00> : vector<8xf32>
    %80 = vector.multi_reduction <add>, %79, %cst_49 [1] : vector<8x256xf32> to vector<8xf32>
    %81 = vector.shape_cast %80 : vector<8xf32> to vector<8x1xf32>
    %82 = arith.mulf %77, %77 : vector<8x1xf32>
    %83 = arith.subf %81, %82 : vector<8x1xf32>
    %c0_50 = arith.constant 0 : index
    %c0_51 = arith.constant 0 : index
    %84 = vector.load %arg9[%c0_50, %c0_51] : memref<8x1xf32, #tpu.memory_space<vmem>>, vector<8x1xf32>
    %c0_52 = arith.constant 0 : index
    %c0_53 = arith.constant 0 : index
    %85 = vector.load %arg10[%c0_52, %c0_53] : memref<8x1xf32, #tpu.memory_space<vmem>>, vector<8x1xf32>
    %86 = vector.broadcast %77 : vector<8x1xf32> to vector<8x256xf32>
    %87 = arith.subf %74, %86 : vector<8x256xf32>
    %cst_54 = arith.constant 9.99999974E-6 : f32
    %88 = vector.broadcast %cst_54 : f32 to vector<8x1xf32>
    %89 = arith.addf %83, %88 : vector<8x1xf32>
    %90 = math.rsqrt %89 : vector<8x1xf32>
    %91 = arith.mulf %84, %90 : vector<8x1xf32>
    %92 = vector.broadcast %91 : vector<8x1xf32> to vector<8x256xf32>
    %93 = arith.mulf %87, %92 : vector<8x256xf32>
    %94 = vector.broadcast %85 : vector<8x1xf32> to vector<8x256xf32>
    %95 = arith.addf %93, %94 : vector<8x256xf32>
    %cst_55 = arith.constant 0.000000e+00 : f32
    %96 = vector.broadcast %cst_55 : f32 to vector<8x256xf32>
    %97 = arith.cmpf oge, %95, %96 : vector<8x256xf32>
    %cst_56 = arith.constant 2.000000e-01 : f32
    %98 = vector.broadcast %cst_56 : f32 to vector<8x256xf32>
    %99 = arith.mulf %98, %95 : vector<8x256xf32>
    %100 = arith.select %97, %95, %99 : vector<8x256xi1>, vector<8x256xf32>
    %101 = arith.addf %100, %69 : vector<8x256xf32>
    %cst_57 = arith.constant dense<0.000000e+00> : vector<8x256xf32>
    %102 = tpu.matmul %0, %101, %cst_57 {dimension_numbers = #tpu.dot_dimension_numbers<[1], [0], [0], [1], [0, 0, 1, 1], [], []>, precision = #tpu.contract_precision<fp32>} : vector<8x8xf32>, vector<8x256xf32>, vector<8x256xf32> -> vector<8x256xf32>
    %cst_58 = arith.constant dense<0.000000e+00> : vector<8xf32>
    %103 = vector.multi_reduction <add>, %102, %cst_58 [1] : vector<8x256xf32> to vector<8xf32>
    %104 = vector.shape_cast %103 : vector<8xf32> to vector<8x1xf32>
    %105 = arith.mulf %101, %101 : vector<8x256xf32>
    %cst_59 = arith.constant dense<0.000000e+00> : vector<8x256xf32>
    %106 = tpu.matmul %0, %105, %cst_59 {dimension_numbers = #tpu.dot_dimension_numbers<[1], [0], [0], [1], [0, 0, 1, 1], [], []>, precision = #tpu.contract_precision<fp32>} : vector<8x8xf32>, vector<8x256xf32>, vector<8x256xf32> -> vector<8x256xf32>
    %cst_60 = arith.constant dense<0.000000e+00> : vector<8xf32>
    %107 = vector.multi_reduction <add>, %106, %cst_60 [1] : vector<8x256xf32> to vector<8xf32>
    %108 = vector.shape_cast %107 : vector<8xf32> to vector<8x1xf32>
    %109 = arith.mulf %104, %104 : vector<8x1xf32>
    %110 = arith.subf %108, %109 : vector<8x1xf32>
    %c0_61 = arith.constant 0 : index
    %c0_62 = arith.constant 0 : index
    %111 = vector.load %arg11[%c0_61, %c0_62] : memref<8x1xf32, #tpu.memory_space<vmem>>, vector<8x1xf32>
    %c0_63 = arith.constant 0 : index
    %c0_64 = arith.constant 0 : index
    %112 = vector.load %arg12[%c0_63, %c0_64] : memref<8x1xf32, #tpu.memory_space<vmem>>, vector<8x1xf32>
    %113 = vector.broadcast %104 : vector<8x1xf32> to vector<8x256xf32>
    %114 = arith.subf %101, %113 : vector<8x256xf32>
    %cst_65 = arith.constant 9.99999974E-6 : f32
    %115 = vector.broadcast %cst_65 : f32 to vector<8x1xf32>
    %116 = arith.addf %110, %115 : vector<8x1xf32>
    %117 = math.rsqrt %116 : vector<8x1xf32>
    %118 = arith.mulf %111, %117 : vector<8x1xf32>
    %119 = vector.broadcast %118 : vector<8x1xf32> to vector<8x256xf32>
    %120 = arith.mulf %114, %119 : vector<8x256xf32>
    %121 = vector.broadcast %112 : vector<8x1xf32> to vector<8x256xf32>
    %122 = arith.addf %120, %121 : vector<8x256xf32>
    %c0_66 = arith.constant 0 : index
    %c0_67 = arith.constant 0 : index
    %123 = vector.load %arg13[%c0_66, %c0_67] : memref<8x256xf32, #tpu.memory_space<vmem>>, vector<8x256xf32>
    tpu.vector_store %arg13[%c0_66, %c0_67], %122 {strides = array<i32>} : memref<8x256xf32, #tpu.memory_space<vmem>>, vector<8x256xf32>,
    return
  }
}

</mosaic_0001>

<llo_original>
// kernel: tpu_custom_call.1
$region0: #{tpu_custom_call.1}
  #allocation0 [shape = 'u32[]', space=smem, size = 0x4, offset = 0x4, fixed_abs, tag = 'smem constant byte address 0x4 - core index']
  #allocation1 [shape = 'u32[144,128]{1,0:T(1,128)}', space=vmem, size = 0x12000, scoped, tag = 'internal scratch']
  #allocation2 [shape = 'f32[72,256]{1,0:T(8,128)}', space=vmem, size = 0x12000, scoped, tag = 'scratch operand']
  %s0 = inlined_call_operand.vmem [shape: f32[8,256], index: 0, kind: input, shape index: {}]
  %s1 = inlined_call_operand.vmem [shape: f32[8,64], index: 1, kind: input, shape index: {}]
  %s2 = inlined_call_operand.hbm [shape: f32[64,256], index: 2, kind: input, shape index: {}]
  %s3 = inlined_call_operand.vmem [shape: f32[8,72], index: 3, kind: input, shape index: {}]
  %s4 = inlined_call_operand.vmem [shape: f32[8,8], index: 4, kind: input, shape index: {}]
  %s5 = inlined_call_operand.vmem [shape: f32[8,8], index: 5, kind: input, shape index: {}]
  %s6 = inlined_call_operand.vmem [shape: f32[8,8], index: 6, kind: input, shape index: {}]
  %s7 = inlined_call_operand.vmem [shape: f32[8,1], index: 7, kind: input, shape index: {}]
  %s8 = inlined_call_operand.vmem [shape: f32[8,1], index: 8, kind: input, shape index: {}]
  %s9 = inlined_call_operand.vmem [shape: f32[8,1], index: 9, kind: input, shape index: {}]
  %s10 = inlined_call_operand.vmem [shape: f32[8,1], index: 10, kind: input, shape index: {}]
  %s11 = inlined_call_operand.vmem [shape: f32[8,1], index: 11, kind: input, shape index: {}]
  %s12 = inlined_call_operand.vmem [shape: f32[8,1], index: 12, kind: input, shape index: {}]
  %s13 = inlined_call_operand.hbm [shape: f32[8,256], index: 13, kind: output, shape index: {}]
  %s14 = sld [smem:[#allocation0]]
  $region66: #{tpu_custom_call.1} parent=0
    _
  %s16 = ssub.s32 1, %s14
  %s17 = scalar_select 0, %s16, %s14
  $region1: #{tpu_custom_call.1} parent=0
    #allocation3 [shape = 'u8[65536]{0}', space=vmem, size = 0x10000, scoped, tag = 'input window, operand 2, single buffered']
    #allocation4 [shape = 's32[1]{0}', space=sflag, size = 0x4, scoped, tag = 'scoped memory for tpu_custom_call.1']
    #allocation5 [shape = 's32[1]{0}', space=sflag, size = 0x4, scoped, tag = 'scoped memory for tpu_custom_call.1']
    #allocation6 [shape = 'u8[8192]{0}', space=vmem, size = 0x2000, scoped, tag = 'output window, operand 0, single buffered']
    %18 = vsyncpa [#allocation4], 0
    %19 = vsyncpa [#allocation5], 0
    // Predicated region
    $region2: #{tpu_custom_call.1} parent=1 // pred_check
      _
    $region3: #{tpu_custom_call.1} parent=1 // pred_check_branch
      %21 = sbr.rel (0) target = $region5
    $region4: #{tpu_custom_call.1} parent=1 // pred_region
      _
    $region5: #{tpu_custom_call.1} parent=1 // pred_fallthru
      _
    // Predicated region
    $region6: #{tpu_custom_call.1} parent=1 // pred_check
      _
    $region7: #{tpu_custom_call.1} parent=1 // pred_check_branch
      %23 = sbr.rel (0) target = $region9
    $region8: #{tpu_custom_call.1} parent=1 // pred_region
      _
    $region9: #{tpu_custom_call.1} parent=1 // pred_fallthru
      _
    // Predicated region
    $region10: #{tpu_custom_call.1} parent=1 // pred_check
      _
    $region11: #{tpu_custom_call.1} parent=1 // pred_check_branch
      %25 = sbr.rel (0) target = $region13
    $region12: #{tpu_custom_call.1} parent=1 // pred_region
      %s27 = ssub.s32 2048, 2048
      %28 = vsyncadd [#allocation4], %s27
      %s29 = sshll.u32 [#allocation3], 4
      %s30 = int_to_ptr.vmem [resolvable:$true] %s29
      %35 = dma.hbm_to_vmem [thread:$0]  %s2, 2048, %s30, [#allocation4], 256, 256, 16
    $region13: #{tpu_custom_call.1} parent=1 // pred_fallthru
      _
    // Predicated region
    $region14: #{tpu_custom_call.1} parent=1 // pred_check
      _
    $region15: #{tpu_custom_call.1} parent=1 // pred_check_branch
      %37 = sbr.rel (0) target = $region17
    $region16: #{tpu_custom_call.1} parent=1 // pred_region
      _
    $region17: #{tpu_custom_call.1} parent=1 // pred_fallthru
      _
    // Predicated region
    $region18: #{tpu_custom_call.1} parent=1 // pred_check
      _
    $region19: #{tpu_custom_call.1} parent=1 // pred_check_branch
      %39 = sbr.rel (0) target = $region21
    $region20: #{tpu_custom_call.1} parent=1 // pred_region
      _
    $region21: #{tpu_custom_call.1} parent=1 // pred_fallthru
      _
    // Predicated region
    $region22: #{tpu_custom_call.1} parent=1 // pred_check
      _
    $region23: #{tpu_custom_call.1} parent=1 // pred_check_branch
      %41 = sbr.rel (0) target = $region25
    $region24: #{tpu_custom_call.1} parent=1 // pred_region
      _
    $region25: #{tpu_custom_call.1} parent=1 // pred_fallthru
      _
    // Predicated region
    $region26: #{tpu_custom_call.1} parent=1 // pred_check
      _
    $region27: #{tpu_custom_call.1} parent=1 // pred_check_branch
      %43 = sbr.rel (0) target = $region29
    $region28: #{tpu_custom_call.1} parent=1 // pred_region
      _
    $region29: #{tpu_custom_call.1} parent=1 // pred_fallthru
      _
    // Predicated region
    $region30: #{tpu_custom_call.1} parent=1 // pred_check
      _
    $region31: #{tpu_custom_call.1} parent=1 // pred_check_branch
      %45 = sbr.rel (0) target = $region33
    $region32: #{tpu_custom_call.1} parent=1 // pred_region
      _
    $region33: #{tpu_custom_call.1} parent=1 // pred_fallthru
      _
    // Predicated region
    $region34: #{tpu_custom_call.1} parent=1 // pred_check
      _
    $region35: #{tpu_custom_call.1} parent=1 // pred_check_branch
      %47 = sbr.rel (0) target = $region37
    $region36: #{tpu_custom_call.1} parent=1 // pred_region
      _
    $region37: #{tpu_custom_call.1} parent=1 // pred_fallthru
      _
    // Predicated region
    $region38: #{tpu_custom_call.1} parent=1 // pred_check
      _
    $region39: #{tpu_custom_call.1} parent=1 // pred_check_branch
      %49 = sbr.rel (0) target = $region41
    $region40: #{tpu_custom_call.1} parent=1 // pred_region
      _
    $region41: #{tpu_custom_call.1} parent=1 // pred_fallthru
      _
    // Predicated region
    $region42: #{tpu_custom_call.1} parent=1 // pred_check
      _
    $region43: #{tpu_custom_call.1} parent=1 // pred_check_branch
      %51 = sbr.rel (0) target = $region45
    $region44: #{tpu_custom_call.1} parent=1 // pred_region
      _
    $region45: #{tpu_custom_call.1} parent=1 // pred_fallthru
      _
    // Predicated region
    $region46: #{tpu_custom_call.1} parent=1 // pred_check
      _
    $region47: #{tpu_custom_call.1} parent=1 // pred_check_branch
      %53 = sbr.rel (0) target = $region49
    $region48: #{tpu_custom_call.1} parent=1 // pred_region
      _
    $region49: #{tpu_custom_call.1} parent=1 // pred_fallthru
      _
    // Predicated region
    $region50: #{tpu_custom_call.1} parent=1 // pred_check
      _
    $region51: #{tpu_custom_call.1} parent=1 // pred_check_branch
      %55 = sbr.rel (0) target = $region53
    $region52: #{tpu_custom_call.1} parent=1 // pred_region
      _
    $region53: #{tpu_custom_call.1} parent=1 // pred_fallthru
      _
    // Predicated region
    $region54: #{tpu_custom_call.1} parent=1 // pred_check
      _
    $region55: #{tpu_custom_call.1} parent=1 // pred_check_branch
      %57 = sbr.rel (0) target = $region57
    $region56: #{tpu_custom_call.1} parent=1 // pred_region
      %58 = dma.done [#allocation4], 2048
    $region57: #{tpu_custom_call.1} parent=1 // pred_fallthru
      _
    %v59 = vld [vmem:[%s6] sm:$0xff]
    %v60 = vlaneseq
    %v61 = vand.u32 %v60, 127
    %v62 = vadd.s32 %v61, 128
    %v63 = vand.u32 %v61, 15
    %v64 = vand.u32 %v62, 15
    %vm65 = vcmp.eq.s32.totalorder %v63, 0
    %vm66 = vcmp.eq.s32.totalorder %v64, 0
    %vm67 = vcmp.eq.s32.totalorder %v63, 15
    %vm68 = vcmp.eq.s32.totalorder %v64, 15
    %vm69 = vcmp.lt.s32.totalorder %v61, 16
    %vm70 = vcmp.lt.s32.totalorder %v62, 16
    %vm71 = vcmp.ge.s32.totalorder %v61, 240
    %vm72 = vcmp.ge.s32.totalorder %v62, 240
    %v73 = vld [vmem:[%s0] sm:$0xff]
    %v74 = vld [vmem:[%s0 + $0x8] sm:$0xff]
    %75 = vrot.lane.b32.xlu0 %v73, 1
    %v76 = vpop.permute.xlu0 %75
    %77 = vrot.lane.b32.xlu0 %v74, 1
    %v78 = vpop.permute.xlu0 %77
    %vm79 = vcmp.lt.s32.totalorder %v61, 1
    %v80 = vsel %vm79, %v76, %v78
    %v81 = vsel %vm79, %v78, %v76
    %82 = vrot.lane.b32.xlu0 %v73, 127
    %v83 = vpop.permute.xlu0 %82
    %84 = vrot.lane.b32.xlu0 %v74, 127
    %v85 = vpop.permute.xlu0 %84
    %vm86 = vcmp.lt.s32.totalorder %v61, 127
    %v87 = vsel %vm86, %v83, %v85
    %v88 = vsel %vm86, %v85, %v83
    %v89 = vsel %vm65, %v87, %v81
    %v90 = vsel %vm66, %v88, %v80
    %v91 = vsel %vm67, %v81, %v87
    %v92 = vsel %vm68, %v80, %v88
    %93 = vrot.lane.b32.xlu0 %v89, 16
    %v94 = vpop.permute.xlu0 %93
    %95 = vrot.lane.b32.xlu0 %v90, 16
    %v96 = vpop.permute.xlu0 %95
    %v97 = vsel %vm69, %v94, %v96
    %v98 = vsel %vm69, %v96, %v94
    %99 = vrot.lane.b32.xlu0 %v89, 112
    %v100 = vpop.permute.xlu0 %99
    %101 = vrot.lane.b32.xlu0 %v90, 112
    %v102 = vpop.permute.xlu0 %101
    %vm103 = vcmp.lt.s32.totalorder %v61, 112
    %v104 = vsel %vm103, %v100, %v102
    %v105 = vsel %vm103, %v102, %v100
    %v106 = vsel %vm69, %v104, %v98
    %v107 = vsel %vm70, %v105, %v97
    %v108 = vsel %vm71, %v98, %v104
    %v109 = vsel %vm72, %v97, %v105
    %110 = vst [vmem:[#allocation2] sm:$0xff] %v106
    %111 = vst [vmem:[#allocation2 + $0x8] sm:$0xff] %v107
    %112 = vst [vmem:[#allocation2 + $0x30] sm:$0xff] %v89
    %113 = vst [vmem:[#allocation2 + $0x38] sm:$0xff] %v90
    %114 = vst [vmem:[#allocation2 + $0x60] sm:$0xff] %v108
    %115 = vst [vmem:[#allocation2 + $0x68] sm:$0xff] %v109
    %116 = vrot.lane.b32.xlu0 %v73, 16
    %v117 = vpop.permute.xlu0 %116
    %118 = vrot.lane.b32.xlu0 %v74, 16
    %v119 = vpop.permute.xlu0 %118
    %v120 = vsel %vm69, %v117, %v119
    %v121 = vsel %vm69, %v119, %v117
    %122 = vrot.lane.b32.xlu0 %v73, 112
    %v123 = vpop.permute.xlu0 %122
    %124 = vrot.lane.b32.xlu0 %v74, 112
    %v125 = vpop.permute.xlu0 %124
    %v126 = vsel %vm103, %v123, %v125
    %v127 = vsel %vm103, %v125, %v123
    %v128 = vsel %vm69, %v126, %v121
    %v129 = vsel %vm70, %v127, %v120
    %v130 = vsel %vm71, %v121, %v126
    %v131 = vsel %vm72, %v120, %v127
    %132 = vst [vmem:[#allocation2 + $0x10] sm:$0xff] %v128
    %133 = vst [vmem:[#allocation2 + $0x18] sm:$0xff] %v129
    %134 = vst [vmem:[#allocation2 + $0x40] sm:$0xff] %v73
    %135 = vst [vmem:[#allocation2 + $0x48] sm:$0xff] %v74
    %136 = vst [vmem:[#allocation2 + $0x70] sm:$0xff] %v130
    %137 = vst [vmem:[#allocation2 + $0x78] sm:$0xff] %v131
    %138 = vrot.lane.b32.xlu0 %v91, 16
    %v139 = vpop.permute.xlu0 %138
    %140 = vrot.lane.b32.xlu0 %v92, 16
    %v141 = vpop.permute.xlu0 %140
    %v142 = vsel %vm69, %v139, %v141
    %v143 = vsel %vm69, %v141, %v139
    %144 = vrot.lane.b32.xlu0 %v91, 112
    %v145 = vpop.permute.xlu0 %144
    %146 = vrot.lane.b32.xlu0 %v92, 112
    %v147 = vpop.permute.xlu0 %146
    %v148 = vsel %vm103, %v145, %v147
    %v149 = vsel %vm103, %v147, %v145
    %v150 = vsel %vm69, %v148, %v143
    %v151 = vsel %vm70, %v149, %v142
    %v152 = vsel %vm71, %v143, %v148
    %v153 = vsel %vm72, %v142, %v149
    %154 = vst [vmem:[#allocation2 + $0x20] sm:$0xff] %v150
    %155 = vst [vmem:[#allocation2 + $0x28] sm:$0xff] %v151
    %156 = vst [vmem:[#allocation2 + $0x50] sm:$0xff] %v91
    %157 = vst [vmem:[#allocation2 + $0x58] sm:$0xff] %v92
    %158 = vst [vmem:[#allocation2 + $0x80] sm:$0xff] %v152
    %159 = vst [vmem:[#allocation2 + $0x88] sm:$0xff] %v153
    %v160 = vld [vmem:[%s3] sm:$0xff]
    %v161 = vld [vmem:[#allocation2] sm:$0xff]
    %v162 = vld [vmem:[#allocation2 + $0x8] sm:$0xff]
    %v163 = vld [vmem:[#allocation2 + $0x10] sm:$0xff]
    %v164 = vld [vmem:[#allocation2 + $0x18] sm:$0xff]
    %v165 = vld [vmem:[#allocation2 + $0x20] sm:$0xff]
    %v166 = vld [vmem:[#allocation2 + $0x28] sm:$0xff]
    %v167 = vld [vmem:[#allocation2 + $0x30] sm:$0xff]
    %v168 = vld [vmem:[#allocation2 + $0x38] sm:$0xff]
    %v169 = vld [vmem:[#allocation2 + $0x40] sm:$0xff]
    %v170 = vld [vmem:[#allocation2 + $0x48] sm:$0xff]
    %v171 = vld [vmem:[#allocation2 + $0x50] sm:$0xff]
    %v172 = vld [vmem:[#allocation2 + $0x58] sm:$0xff]
    %v173 = vld [vmem:[#allocation2 + $0x60] sm:$0xff]
    %v174 = vld [vmem:[#allocation2 + $0x68] sm:$0xff]
    %v175 = vld [vmem:[#allocation2 + $0x70] sm:$0xff]
    %v176 = vld [vmem:[#allocation2 + $0x78] sm:$0xff]
    %v177 = vld [vmem:[#allocation2 + $0x80] sm:$0xff]
    %v178 = vld [vmem:[#allocation2 + $0x88] sm:$0xff]
    %vm179 = vcmask 588800
    %v181 = vsel %vm179, %v160, 0
    %v183 = vand.u32 %v162, 4294901760
    %184 = vmatprep.subr.mxu0 %v183
    %v185 = vand.u32 %v161, 4294901760
    %186 = vmatpush1.msra.mxu0 %v185
    %v187 = vand.u32 %v164, 4294901760
    %188 = vmatprep.subr.mxu0 %v187
    %v189 = vand.u32 %v163, 4294901760
    %190 = vmatpush1.msra.mxu0 %v189
    %v191 = vand.u32 %v166, 4294901760
    %192 = vmatprep.subr.mxu0 %v191
    %v193 = vand.u32 %v165, 4294901760
    %194 = vmatpush1.msra.mxu0 %v193
    %v195 = vand.u32 %v168, 4294901760
    %196 = vmatprep.subr.mxu0 %v195
    %v197 = vand.u32 %v167, 4294901760
    %198 = vmatpush1.msra.mxu0 %v197
    %v199 = vand.u32 %v170, 4294901760
    %200 = vmatprep.subr.mxu0 %v199
    %v201 = vand.u32 %v169, 4294901760
    %202 = vmatpush1.msra.mxu0 %v201
    %v203 = vand.u32 %v172, 4294901760
    %204 = vmatprep.subr.mxu0 %v203
    %v205 = vand.u32 %v171, 4294901760
    %206 = vmatpush1.msra.mxu0 %v205
    %v207 = vand.u32 %v174, 4294901760
    %208 = vmatprep.subr.mxu0 %v207
    %v209 = vand.u32 %v173, 4294901760
    %210 = vmatpush1.msra.mxu0 %v209
    %v211 = vand.u32 %v176, 4294901760
    %212 = vmatprep.subr.mxu0 %v211
    %v213 = vand.u32 %v175, 4294901760
    %214 = vmatpush1.msra.mxu0 %v213
    %v215 = vand.u32 %v178, 4294901760
    %216 = vmatprep.subr.mxu0 %v215
    %v217 = vand.u32 %v177, 4294901760
    %218 = vmatpush1.msra.mxu0 %v217
    %219 = vmatprep.subr.mxu0 0.0
    %220 = vmatpush1.msra.mxu0 0.0
    %221 = vmatprep.subr.mxu0 0.0
    %222 = vmatpush1.msra.mxu0 0.0
    %223 = vmatprep.subr.mxu0 0.0
    %224 = vmatpush1.msra.mxu0 0.0
    %225 = vmatprep.subr.mxu0 0.0
    %226 = vmatpush1.msra.mxu0 0.0
    %227 = vmatprep.subr.mxu0 0.0
    %228 = vmatpush1.msra.mxu0 0.0
    %229 = vmatprep.subr.mxu0 0.0
    %230 = vmatpush1.msra.mxu0 0.0
    %231 = vmatprep.subr.mxu0 0.0
    %232 = vmatpush1.msra.mxu0 0.0
    %233 = vmatprep.subr.mxu0 0.0
    %234 = vmatpush1.msra.mxu0 0.0
    %235 = vmatprep.subr.mxu0 0.0
    %236 = vmatpush1.msra.mxu0 0.0
    %237 = vmatprep.subr.mxu0 0.0
    %238 = vmatpush1.msra.mxu0 0.0
    %239 = vmatprep.subr.mxu0 0.0
    %240 = vmatpush1.msra.mxu0 0.0
    %241 = vmatprep.subr.mxu0 0.0
    %242 = vmatpush1.msra.mxu0 0.0
    %243 = vmatprep.subr.mxu0 0.0
    %244 = vmatpush1.msra.mxu0 0.0
    %245 = vmatprep.subr.mxu0 0.0
    %246 = vmatpush1.msra.mxu0 0.0
    %247 = vmatprep.subr.mxu0 0.0
    %248 = vmatpush1.msra.mxu0 0.0
    %249 = vmatprep.subr.mxu0 0.0
    %250 = vmatpush1.msra.mxu0 0.0
    %251 = vmatprep.subr.mxu0 0.0
    %252 = vmatpush1.msra.mxu0 0.0
    %253 = vmatprep.subr.mxu0 0.0
    %254 = vmatpush1.msra.mxu0 0.0
    %255 = vmatprep.subr.mxu0 0.0
    %256 = vmatpush1.msra.mxu0 0.0
    %257 = vmatprep.subr.mxu0 0.0
    %258 = vmatpush1.msra.mxu0 0.0
    %259 = vmatprep.subr.mxu0 0.0
    %260 = vmatpush1.msra.mxu0 0.0
    %261 = vmatprep.subr.mxu0 0.0
    %262 = vmatpush1.msra.mxu0 0.0
    %263 = vmatprep.subr.mxu0 0.0
    %264 = vmatpush1.msra.mxu0 0.0
    %265 = vmatprep.mubr.f32.mxu0 0.0
    %v266 = vand.u32 %v181, 4294901760
    %v267 = vsub.f32 %v181, %v266
    %v268 = vand.u32 %v267, 4294901760
    %v269 = vsub.f32 %v267, %v268
    %v270 = vand.u32 %v269, 4294901760
    %271 = vmatmul.mubr.f32.gmra.mrb[0].mxu0 %v270
    %v272 = vpop.f32.mrb[0].mxu0
    %v273 = vadd.f32 0.0, %v272
    %v274 = vpop.f32.mrb[0].mxu0
    %v275 = vadd.f32 0.0, %v274
    %276 = vdwg.mxu0
    %v277 = vand.u32 %v162, 4294901760
    %v278 = vsub.f32 %v162, %v277
    %v279 = vand.u32 %v278, 4294901760
    %v280 = vsub.f32 %v278, %v279
    %v281 = vand.u32 %v280, 4294901760
    %282 = vmatprep.subr.mxu0 %v281
    %v283 = vand.u32 %v161, 4294901760
    %v284 = vsub.f32 %v161, %v283
    %v285 = vand.u32 %v284, 4294901760
    %v286 = vsub.f32 %v284, %v285
    %v287 = vand.u32 %v286, 4294901760
    %288 = vmatpush1.msra.mxu0 %v287
    %v289 = vand.u32 %v164, 4294901760
    %v290 = vsub.f32 %v164, %v289
    %v291 = vand.u32 %v290, 4294901760
    %v292 = vsub.f32 %v290, %v291
    %v293 = vand.u32 %v292, 4294901760
    %294 = vmatprep.subr.mxu0 %v293
    %v295 = vand.u32 %v163, 4294901760
    %v296 = vsub.f32 %v163, %v295
    %v297 = vand.u32 %v296, 4294901760
    %v298 = vsub.f32 %v296, %v297
    %v299 = vand.u32 %v298, 4294901760
    %300 = vmatpush1.msra.mxu0 %v299
    %v301 = vand.u32 %v166, 4294901760
    %v302 = vsub.f32 %v166, %v301
    %v303 = vand.u32 %v302, 4294901760
    %v304 = vsub.f32 %v302, %v303
    %v305 = vand.u32 %v304, 4294901760
    %306 = vmatprep.subr.mxu0 %v305
    %v307 = vand.u32 %v165, 4294901760
    %v308 = vsub.f32 %v165, %v307
    %v309 = vand.u32 %v308, 4294901760
    %v310 = vsub.f32 %v308, %v309
    %v311 = vand.u32 %v310, 4294901760
    %312 = vmatpush1.msra.mxu0 %v311
    %v313 = vand.u32 %v168, 4294901760
    %v314 = vsub.f32 %v168, %v313
    %v315 = vand.u32 %v314, 4294901760
    %v316 = vsub.f32 %v314, %v315
    %v317 = vand.u32 %v316, 4294901760
    %318 = vmatprep.subr.mxu0 %v317
    %v319 = vand.u32 %v167, 4294901760
    %v320 = vsub.f32 %v167, %v319
    %v321 = vand.u32 %v320, 4294901760
    %v322 = vsub.f32 %v320, %v321
    %v323 = vand.u32 %v322, 4294901760
    %324 = vmatpush1.msra.mxu0 %v323
    %v325 = vand.u32 %v170, 4294901760
    %v326 = vsub.f32 %v170, %v325
    %v327 = vand.u32 %v326, 4294901760
    %v328 = vsub.f32 %v326, %v327
    %v329 = vand.u32 %v328, 4294901760
    %330 = vmatprep.subr.mxu0 %v329
    %v331 = vand.u32 %v169, 4294901760
    %v332 = vsub.f32 %v169, %v331
    %v333 = vand.u32 %v332, 4294901760
    %v334 = vsub.f32 %v332, %v333
    %v335 = vand.u32 %v334, 4294901760
    %336 = vmatpush1.msra.mxu0 %v335
    %v337 = vand.u32 %v172, 4294901760
    %v338 = vsub.f32 %v172, %v337
    %v339 = vand.u32 %v338, 4294901760
    %v340 = vsub.f32 %v338, %v339
    %v341 = vand.u32 %v340, 4294901760
    %342 = vmatprep.subr.mxu0 %v341
    %v343 = vand.u32 %v171, 4294901760
    %v344 = vsub.f32 %v171, %v343
    %v345 = vand.u32 %v344, 4294901760
    %v346 = vsub.f32 %v344, %v345
    %v347 = vand.u32 %v346, 4294901760
    %348 = vmatpush1.msra.mxu0 %v347
    %v349 = vand.u32 %v174, 4294901760
    %v350 = vsub.f32 %v174, %v349
    %v351 = vand.u32 %v350, 4294901760
    %v352 = vsub.f32 %v350, %v351
    %v353 = vand.u32 %v352, 4294901760
    %354 = vmatprep.subr.mxu0 %v353
    %v355 = vand.u32 %v173, 4294901760
    %v356 = vsub.f32 %v173, %v355
    %v357 = vand.u32 %v356, 4294901760
    %v358 = vsub.f32 %v356, %v357
    %v359 = vand.u32 %v358, 4294901760
    %360 = vmatpush1.msra.mxu0 %v359
    %v361 = vand.u32 %v176, 4294901760
    %v362 = vsub.f32 %v176, %v361
    %v363 = vand.u32 %v362, 4294901760
    %v364 = vsub.f32 %v362, %v363
    %v365 = vand.u32 %v364, 4294901760
    %366 = vmatprep.subr.mxu0 %v365
    %v367 = vand.u32 %v175, 4294901760
    %v368 = vsub.f32 %v175, %v367
    %v369 = vand.u32 %v368, 4294901760
    %v370 = vsub.f32 %v368, %v369
    %v371 = vand.u32 %v370, 4294901760
    %372 = vmatpush1.msra.mxu0 %v371
    %v373 = vand.u32 %v178, 4294901760
    %v374 = vsub.f32 %v178, %v373
    %v375 = vand.u32 %v374, 4294901760
    %v376 = vsub.f32 %v374, %v375
    %v377 = vand.u32 %v376, 4294901760
    %378 = vmatprep.subr.mxu0 %v377
    %v379 = vand.u32 %v177, 4294901760
    %v380 = vsub.f32 %v177, %v379
    %v381 = vand.u32 %v380, 4294901760
    %v382 = vsub.f32 %v380, %v381
    %v383 = vand.u32 %v382, 4294901760
    %384 = vmatpush1.msra.mxu0 %v383
    %385 = vmatprep.subr.mxu0 0.0
    %386 = vmatpush1.msra.mxu0 0.0
    %387 = vmatprep.subr.mxu0 0.0
    %388 = vmatpush1.msra.mxu0 0.0
    %389 = vmatprep.subr.mxu0 0.0
    %390 = vmatpush1.msra.mxu0 0.0
    %391 = vmatprep.subr.mxu0 0.0
    %392 = vmatpush1.msra.mxu0 0.0
    %393 = vmatprep.subr.mxu0 0.0
    %394 = vmatpush1.msra.mxu0 0.0
    %395 = vmatprep.subr.mxu0 0.0
    %396 = vmatpush1.msra.mxu0 0.0
    %397 = vmatprep.subr.mxu0 0.0
    %398 = vmatpush1.msra.mxu0 0.0
    %399 = vmatprep.subr.mxu0 0.0
    %400 = vmatpush1.msra.mxu0 0.0
    %401 = vmatprep.subr.mxu0 0.0
    %402 = vmatpush1.msra.mxu0 0.0
    %403 = vmatprep.subr.mxu0 0.0
    %404 = vmatpush1.msra.mxu0 0.0
    %405 = vmatprep.subr.mxu0 0.0
    %406 = vmatpush1.msra.mxu0 0.0
    %407 = vmatprep.subr.mxu0 0.0
    %408 = vmatpush1.msra.mxu0 0.0
    %409 = vmatprep.subr.mxu0 0.0
    %410 = vmatpush1.msra.mxu0 0.0
    %411 = vmatprep.subr.mxu0 0.0
    %412 = vmatpush1.msra.mxu0 0.0
    %413 = vmatprep.subr.mxu0 0.0
    %414 = vmatpush1.msra.mxu0 0.0
    %415 = vmatprep.subr.mxu0 0.0
    %416 = vmatpush1.msra.mxu0 0.0
    %417 = vmatprep.subr.mxu0 0.0
    %418 = vmatpush1.msra.mxu0 0.0
    %419 = vmatprep.subr.mxu0 0.0
    %420 = vmatpush1.msra.mxu0 0.0
    %421 = vmatprep.subr.mxu0 0.0
    %422 = vmatpush1.msra.mxu0 0.0
    %423 = vmatprep.subr.mxu0 0.0
    %424 = vmatpush1.msra.mxu0 0.0
    %425 = vmatprep.subr.mxu0 0.0
    %426 = vmatpush1.msra.mxu0 0.0
    %427 = vmatprep.subr.mxu0 0.0
    %428 = vmatpush1.msra.mxu0 0.0
    %429 = vmatprep.subr.mxu0 0.0
    %430 = vmatpush1.msra.mxu0 0.0
    %431 = vmatprep.mubr.f32.mxu0 0.0
    %v432 = vand.u32 %v181, 4294901760
    %433 = vmatmul.mubr.f32.gmra.mrb[0].mxu0 %v432
    %v434 = vpop.f32.mrb[0].mxu0
    %v435 = vadd.f32 %v273, %v434
    %v436 = vpop.f32.mrb[0].mxu0
    %v437 = vadd.f32 %v275, %v436
    %438 = vdwg.mxu0
    %v439 = vand.u32 %v162, 4294901760
    %v440 = vsub.f32 %v162, %v439
    %441 = vmatprep.subr.mxu0 %v440
    %v442 = vand.u32 %v161, 4294901760
    %v443 = vsub.f32 %v161, %v442
    %444 = vmatpush1.msra.mxu0 %v443
    %v445 = vand.u32 %v164, 4294901760
    %v446 = vsub.f32 %v164, %v445
    %447 = vmatprep.subr.mxu0 %v446
    %v448 = vand.u32 %v163, 4294901760
    %v449 = vsub.f32 %v163, %v448
    %450 = vmatpush1.msra.mxu0 %v449
    %v451 = vand.u32 %v166, 4294901760
    %v452 = vsub.f32 %v166, %v451
    %453 = vmatprep.subr.mxu0 %v452
    %v454 = vand.u32 %v165, 4294901760
    %v455 = vsub.f32 %v165, %v454
    %456 = vmatpush1.msra.mxu0 %v455
    %v457 = vand.u32 %v168, 4294901760
    %v458 = vsub.f32 %v168, %v457
    %459 = vmatprep.subr.mxu0 %v458
    %v460 = vand.u32 %v167, 4294901760
    %v461 = vsub.f32 %v167, %v460
    %462 = vmatpush1.msra.mxu0 %v461
    %v463 = vand.u32 %v170, 4294901760
    %v464 = vsub.f32 %v170, %v463
    %465 = vmatprep.subr.mxu0 %v464
    %v466 = vand.u32 %v169, 4294901760
    %v467 = vsub.f32 %v169, %v466
    %468 = vmatpush1.msra.mxu0 %v467
    %v469 = vand.u32 %v172, 4294901760
    %v470 = vsub.f32 %v172, %v469
    %471 = vmatprep.subr.mxu0 %v470
    %v472 = vand.u32 %v171, 4294901760
    %v473 = vsub.f32 %v171, %v472
    %474 = vmatpush1.msra.mxu0 %v473
    %v475 = vand.u32 %v174, 4294901760
    %v476 = vsub.f32 %v174, %v475
    %477 = vmatprep.subr.mxu0 %v476
    %v478 = vand.u32 %v173, 4294901760
    %v479 = vsub.f32 %v173, %v478
    %480 = vmatpush1.msra.mxu0 %v479
    %v481 = vand.u32 %v176, 4294901760
    %v482 = vsub.f32 %v176, %v481
    %483 = vmatprep.subr.mxu0 %v482
    %v484 = vand.u32 %v175, 4294901760
    %v485 = vsub.f32 %v175, %v484
    %486 = vmatpush1.msra.mxu0 %v485
    %v487 = vand.u32 %v178, 4294901760
    %v488 = vsub.f32 %v178, %v487
    %489 = vmatprep.subr.mxu0 %v488
    %v490 = vand.u32 %v177, 4294901760
    %v491 = vsub.f32 %v177, %v490
    %492 = vmatpush1.msra.mxu0 %v491
    %493 = vmatprep.subr.mxu0 0.0
    %494 = vmatpush1.msra.mxu0 0.0
    %495 = vmatprep.subr.mxu0 0.0
    %496 = vmatpush1.msra.mxu0 0.0
    %497 = vmatprep.subr.mxu0 0.0
    %498 = vmatpush1.msra.mxu0 0.0
    %499 = vmatprep.subr.mxu0 0.0
    %500 = vmatpush1.msra.mxu0 0.0
    %501 = vmatprep.subr.mxu0 0.0
    %502 = vmatpush1.msra.mxu0 0.0
    %503 = vmatprep.subr.mxu0 0.0
    %504 = vmatpush1.msra.mxu0 0.0
    %505 = vmatprep.subr.mxu0 0.0
    %506 = vmatpush1.msra.mxu0 0.0
    %507 = vmatprep.subr.mxu0 0.0
    %508 = vmatpush1.msra.mxu0 0.0
    %509 = vmatprep.subr.mxu0 0.0
    %510 = vmatpush1.msra.mxu0 0.0
    %511 = vmatprep.subr.mxu0 0.0
    %512 = vmatpush1.msra.mxu0 0.0
    %513 = vmatprep.subr.mxu0 0.0
    %514 = vmatpush1.msra.mxu0 0.0
    %515 = vmatprep.subr.mxu0 0.0
    %516 = vmatpush1.msra.mxu0 0.0
    %517 = vmatprep.subr.mxu0 0.0
    %518 = vmatpush1.msra.mxu0 0.0
    %519 = vmatprep.subr.mxu0 0.0
    %520 = vmatpush1.msra.mxu0 0.0
    %521 = vmatprep.subr.mxu0 0.0
    %522 = vmatpush1.msra.mxu0 0.0
    %523 = vmatprep.subr.mxu0 0.0
    %524 = vmatpush1.msra.mxu0 0.0
    %525 = vmatprep.subr.mxu0 0.0
    %526 = vmatpush1.msra.mxu0 0.0
    %527 = vmatprep.subr.mxu0 0.0
    %528 = vmatpush1.msra.mxu0 0.0
    %529 = vmatprep.subr.mxu0 0.0
    %530 = vmatpush1.msra.mxu0 0.0
    %531 = vmatprep.subr.mxu0 0.0
    %532 = vmatpush1.msra.mxu0 0.0
    %533 = vmatprep.subr.mxu0 0.0
    %534 = vmatpush1.msra.mxu0 0.0
    %535 = vmatprep.subr.mxu0 0.0
    %536 = vmatpush1.msra.mxu0 0.0
    %537 = vmatprep.subr.mxu0 0.0
    %538 = vmatpush1.msra.mxu0 0.0
    %539 = vmatprep.mubr.f32.mxu0 0.0
    %v540 = vand.u32 %v181, 4294901760
    %v541 = vsub.f32 %v181, %v540
    %542 = vmatmul.mubr.f32.gmra.mrb[0].mxu0 %v541
    %v543 = vpop.f32.mrb[0].mxu0
    %v544 = vadd.f32 %v435, %v543
    %v545 = vpop.f32.mrb[0].mxu0
    %v546 = vadd.f32 %v437, %v545
    %547 = vdwg.mxu0
    %v548 = vand.u32 %v162, 4294901760
    %549 = vmatprep.subr.mxu0 %v548
    %v550 = vand.u32 %v161, 4294901760
    %551 = vmatpush1.msra.mxu0 %v550
    %v552 = vand.u32 %v164, 4294901760
    %553 = vmatprep.subr.mxu0 %v552
    %v554 = vand.u32 %v163, 4294901760
    %555 = vmatpush1.msra.mxu0 %v554
    %v556 = vand.u32 %v166, 4294901760
    %557 = vmatprep.subr.mxu0 %v556
    %v558 = vand.u32 %v165, 4294901760
    %559 = vmatpush1.msra.mxu0 %v558
    %v560 = vand.u32 %v168, 4294901760
    %561 = vmatprep.subr.mxu0 %v560
    %v562 = vand.u32 %v167, 4294901760
    %563 = vmatpush1.msra.mxu0 %v562
    %v564 = vand.u32 %v170, 4294901760
    %565 = vmatprep.subr.mxu0 %v564
    %v566 = vand.u32 %v169, 4294901760
    %567 = vmatpush1.msra.mxu0 %v566
    %v568 = vand.u32 %v172, 4294901760
    %569 = vmatprep.subr.mxu0 %v568
    %v570 = vand.u32 %v171, 4294901760
    %571 = vmatpush1.msra.mxu0 %v570
    %v572 = vand.u32 %v174, 4294901760
    %573 = vmatprep.subr.mxu0 %v572
    %v574 = vand.u32 %v173, 4294901760
    %575 = vmatpush1.msra.mxu0 %v574
    %v576 = vand.u32 %v176, 4294901760
    %577 = vmatprep.subr.mxu0 %v576
    %v578 = vand.u32 %v175, 4294901760
    %579 = vmatpush1.msra.mxu0 %v578
    %v580 = vand.u32 %v178, 4294901760
    %581 = vmatprep.subr.mxu0 %v580
    %v582 = vand.u32 %v177, 4294901760
    %583 = vmatpush1.msra.mxu0 %v582
    %584 = vmatprep.subr.mxu0 0.0
    %585 = vmatpush1.msra.mxu0 0.0
    %586 = vmatprep.subr.mxu0 0.0
    %587 = vmatpush1.msra.mxu0 0.0
    %588 = vmatprep.subr.mxu0 0.0
    %589 = vmatpush1.msra.mxu0 0.0
    %590 = vmatprep.subr.mxu0 0.0
    %591 = vmatpush1.msra.mxu0 0.0
    %592 = vmatprep.subr.mxu0 0.0
    %593 = vmatpush1.msra.mxu0 0.0
    %594 = vmatprep.subr.mxu0 0.0
    %595 = vmatpush1.msra.mxu0 0.0
    %596 = vmatprep.subr.mxu0 0.0
    %597 = vmatpush1.msra.mxu0 0.0
    %598 = vmatprep.subr.mxu0 0.0
    %599 = vmatpush1.msra.mxu0 0.0
    %600 = vmatprep.subr.mxu0 0.0
    %601 = vmatpush1.msra.mxu0 0.0
    %602 = vmatprep.subr.mxu0 0.0
    %603 = vmatpush1.msra.mxu0 0.0
    %604 = vmatprep.subr.mxu0 0.0
    %605 = vmatpush1.msra.mxu0 0.0
    %606 = vmatprep.subr.mxu0 0.0
    %607 = vmatpush1.msra.mxu0 0.0
    %608 = vmatprep.subr.mxu0 0.0
    %609 = vmatpush1.msra.mxu0 0.0
    %610 = vmatprep.subr.mxu0 0.0
    %611 = vmatpush1.msra.mxu0 0.0
    %612 = vmatprep.subr.mxu0 0.0
    %613 = vmatpush1.msra.mxu0 0.0
    %614 = vmatprep.subr.mxu0 0.0
    %615 = vmatpush1.msra.mxu0 0.0
    %616 = vmatprep.subr.mxu0 0.0
    %617 = vmatpush1.msra.mxu0 0.0
    %618 = vmatprep.subr.mxu0 0.0
    %619 = vmatpush1.msra.mxu0 0.0
    %620 = vmatprep.subr.mxu0 0.0
    %621 = vmatpush1.msra.mxu0 0.0
    %622 = vmatprep.subr.mxu0 0.0
    %623 = vmatpush1.msra.mxu0 0.0
    %624 = vmatprep.subr.mxu0 0.0
    %625 = vmatpush1.msra.mxu0 0.0
    %626 = vmatprep.subr.mxu0 0.0
    %627 = vmatpush1.msra.mxu0 0.0
    %628 = vmatprep.subr.mxu0 0.0
    %629 = vmatpush1.msra.mxu0 0.0
    %630 = vmatprep.mubr.f32.mxu0 0.0
    %v631 = vand.u32 %v181, 4294901760
    %v632 = vsub.f32 %v181, %v631
    %v633 = vand.u32 %v632, 4294901760
    %634 = vmatmul.mubr.f32.gmra.mrb[0].mxu0 %v633
    %v635 = vpop.f32.mrb[0].mxu0
    %v636 = vadd.f32 %v544, %v635
    %v637 = vpop.f32.mrb[0].mxu0
    %v638 = vadd.f32 %v546, %v637
    %639 = vdwg.mxu0
    %v640 = vand.u32 %v162, 4294901760
    %v641 = vsub.f32 %v162, %v640
    %v642 = vand.u32 %v641, 4294901760
    %643 = vmatprep.subr.mxu0 %v642
    %v644 = vand.u32 %v161, 4294901760
    %v645 = vsub.f32 %v161, %v644
    %v646 = vand.u32 %v645, 4294901760
    %647 = vmatpush1.msra.mxu0 %v646
    %v648 = vand.u32 %v164, 4294901760
    %v649 = vsub.f32 %v164, %v648
    %v650 = vand.u32 %v649, 4294901760
    %651 = vmatprep.subr.mxu0 %v650
    %v652 = vand.u32 %v163, 4294901760
    %v653 = vsub.f32 %v163, %v652
    %v654 = vand.u32 %v653, 4294901760
    %655 = vmatpush1.msra.mxu0 %v654
    %v656 = vand.u32 %v166, 4294901760
    %v657 = vsub.f32 %v166, %v656
    %v658 = vand.u32 %v657, 4294901760
    %659 = vmatprep.subr.mxu0 %v658
    %v660 = vand.u32 %v165, 4294901760
    %v661 = vsub.f32 %v165, %v660
    %v662 = vand.u32 %v661, 4294901760
    %663 = vmatpush1.msra.mxu0 %v662
    %v664 = vand.u32 %v168, 4294901760
    %v665 = vsub.f32 %v168, %v664
    %v666 = vand.u32 %v665, 4294901760
    %667 = vmatprep.subr.mxu0 %v666
    %v668 = vand.u32 %v167, 4294901760
    %v669 = vsub.f32 %v167, %v668
    %v670 = vand.u32 %v669, 4294901760
    %671 = vmatpush1.msra.mxu0 %v670
    %v672 = vand.u32 %v170, 4294901760
    %v673 = vsub.f32 %v170, %v672
    %v674 = vand.u32 %v673, 4294901760
    %675 = vmatprep.subr.mxu0 %v674
    %v676 = vand.u32 %v169, 4294901760
    %v677 = vsub.f32 %v169, %v676
    %v678 = vand.u32 %v677, 4294901760
    %679 = vmatpush1.msra.mxu0 %v678
    %v680 = vand.u32 %v172, 4294901760
    %v681 = vsub.f32 %v172, %v680
    %v682 = vand.u32 %v681, 4294901760
    %683 = vmatprep.subr.mxu0 %v682
    %v684 = vand.u32 %v171, 4294901760
    %v685 = vsub.f32 %v171, %v684
    %v686 = vand.u32 %v685, 4294901760
    %687 = vmatpush1.msra.mxu0 %v686
    %v688 = vand.u32 %v174, 4294901760
    %v689 = vsub.f32 %v174, %v688
    %v690 = vand.u32 %v689, 4294901760
    %691 = vmatprep.subr.mxu0 %v690
    %v692 = vand.u32 %v173, 4294901760
    %v693 = vsub.f32 %v173, %v692
    %v694 = vand.u32 %v693, 4294901760
    %695 = vmatpush1.msra.mxu0 %v694
    %v696 = vand.u32 %v176, 4294901760
    %v697 = vsub.f32 %v176, %v696
    %v698 = vand.u32 %v697, 4294901760
    %699 = vmatprep.subr.mxu0 %v698
    %v700 = vand.u32 %v175, 4294901760
    %v701 = vsub.f32 %v175, %v700
    %v702 = vand.u32 %v701, 4294901760
    %703 = vmatpush1.msra.mxu0 %v702
    %v704 = vand.u32 %v178, 4294901760
    %v705 = vsub.f32 %v178, %v704
    %v706 = vand.u32 %v705, 4294901760
    %707 = vmatprep.subr.mxu0 %v706
    %v708 = vand.u32 %v177, 4294901760
    %v709 = vsub.f32 %v177, %v708
    %v710 = vand.u32 %v709, 4294901760
    %711 = vmatpush1.msra.mxu0 %v710
    %712 = vmatprep.subr.mxu0 0.0
    %713 = vmatpush1.msra.mxu0 0.0
    %714 = vmatprep.subr.mxu0 0.0
    %715 = vmatpush1.msra.mxu0 0.0
    %716 = vmatprep.subr.mxu0 0.0
    %717 = vmatpush1.msra.mxu0 0.0
    %718 = vmatprep.subr.mxu0 0.0
    %719 = vmatpush1.msra.mxu0 0.0
    %720 = vmatprep.subr.mxu0 0.0
    %721 = vmatpush1.msra.mxu0 0.0
    %722 = vmatprep.subr.mxu0 0.0
    %723 = vmatpush1.msra.mxu0 0.0
    %724 = vmatprep.subr.mxu0 0.0
    %725 = vmatpush1.msra.mxu0 0.0
    %726 = vmatprep.subr.mxu0 0.0
    %727 = vmatpush1.msra.mxu0 0.0
    %728 = vmatprep.subr.mxu0 0.0
    %729 = vmatpush1.msra.mxu0 0.0
    %730 = vmatprep.subr.mxu0 0.0
    %731 = vmatpush1.msra.mxu0 0.0
    %732 = vmatprep.subr.mxu0 0.0
    %733 = vmatpush1.msra.mxu0 0.0
    %734 = vmatprep.subr.mxu0 0.0
    %735 = vmatpush1.msra.mxu0 0.0
    %736 = vmatprep.subr.mxu0 0.0
    %737 = vmatpush1.msra.mxu0 0.0
    %738 = vmatprep.subr.mxu0 0.0
    %739 = vmatpush1.msra.mxu0 0.0
    %740 = vmatprep.subr.mxu0 0.0
    %741 = vmatpush1.msra.mxu0 0.0
    %742 = vmatprep.subr.mxu0 0.0
    %743 = vmatpush1.msra.mxu0 0.0
    %744 = vmatprep.subr.mxu0 0.0
    %745 = vmatpush1.msra.mxu0 0.0
    %746 = vmatprep.subr.mxu0 0.0
    %747 = vmatpush1.msra.mxu0 0.0
    %748 = vmatprep.subr.mxu0 0.0
    %749 = vmatpush1.msra.mxu0 0.0
    %750 = vmatprep.subr.mxu0 0.0
    %751 = vmatpush1.msra.mxu0 0.0
    %752 = vmatprep.subr.mxu0 0.0
    %753 = vmatpush1.msra.mxu0 0.0
    %754 = vmatprep.subr.mxu0 0.0
    %755 = vmatpush1.msra.mxu0 0.0
    %756 = vmatprep.subr.mxu0 0.0
    %757 = vmatpush1.msra.mxu0 0.0
    %758 = vmatprep.mubr.f32.mxu0 0.0
    %v759 = vand.u32 %v181, 4294901760
    %760 = vmatmul.mubr.f32.gmra.mrb[0].mxu0 %v759
    %v761 = vpop.f32.mrb[0].mxu0
    %v762 = vadd.f32 %v636, %v761
    %v763 = vpop.f32.mrb[0].mxu0
    %v764 = vadd.f32 %v638, %v763
    %765 = vdwg.mxu0
    %v766 = vand.u32 %v162, 4294901760
    %767 = vmatprep.subr.mxu0 %v766
    %v768 = vand.u32 %v161, 4294901760
    %769 = vmatpush1.msra.mxu0 %v768
    %v770 = vand.u32 %v164, 4294901760
    %771 = vmatprep.subr.mxu0 %v770
    %v772 = vand.u32 %v163, 4294901760
    %773 = vmatpush1.msra.mxu0 %v772
    %v774 = vand.u32 %v166, 4294901760
    %775 = vmatprep.subr.mxu0 %v774
    %v776 = vand.u32 %v165, 4294901760
    %777 = vmatpush1.msra.mxu0 %v776
    %v778 = vand.u32 %v168, 4294901760
    %779 = vmatprep.subr.mxu0 %v778
    %v780 = vand.u32 %v167, 4294901760
    %781 = vmatpush1.msra.mxu0 %v780
    %v782 = vand.u32 %v170, 4294901760
    %783 = vmatprep.subr.mxu0 %v782
    %v784 = vand.u32 %v169, 4294901760
    %785 = vmatpush1.msra.mxu0 %v784
    %v786 = vand.u32 %v172, 4294901760
    %787 = vmatprep.subr.mxu0 %v786
    %v788 = vand.u32 %v171, 4294901760
    %789 = vmatpush1.msra.mxu0 %v788
    %v790 = vand.u32 %v174, 4294901760
    %791 = vmatprep.subr.mxu0 %v790
    %v792 = vand.u32 %v173, 4294901760
    %793 = vmatpush1.msra.mxu0 %v792
    %v794 = vand.u32 %v176, 4294901760
    %795 = vmatprep.subr.mxu0 %v794
    %v796 = vand.u32 %v175, 4294901760
    %797 = vmatpush1.msra.mxu0 %v796
    %v798 = vand.u32 %v178, 4294901760
    %799 = vmatprep.subr.mxu0 %v798
    %v800 = vand.u32 %v177, 4294901760
    %801 = vmatpush1.msra.mxu0 %v800
    %802 = vmatprep.subr.mxu0 0.0
    %803 = vmatpush1.msra.mxu0 0.0
    %804 = vmatprep.subr.mxu0 0.0
    %805 = vmatpush1.msra.mxu0 0.0
    %806 = vmatprep.subr.mxu0 0.0
    %807 = vmatpush1.msra.mxu0 0.0
    %808 = vmatprep.subr.mxu0 0.0
    %809 = vmatpush1.msra.mxu0 0.0
    %810 = vmatprep.subr.mxu0 0.0
    %811 = vmatpush1.msra.mxu0 0.0
    %812 = vmatprep.subr.mxu0 0.0
    %813 = vmatpush1.msra.mxu0 0.0
    %814 = vmatprep.subr.mxu0 0.0
    %815 = vmatpush1.msra.mxu0 0.0
    %816 = vmatprep.subr.mxu0 0.0
    %817 = vmatpush1.msra.mxu0 0.0
    %818 = vmatprep.subr.mxu0 0.0
    %819 = vmatpush1.msra.mxu0 0.0
    %820 = vmatprep.subr.mxu0 0.0
    %821 = vmatpush1.msra.mxu0 0.0
    %822 = vmatprep.subr.mxu0 0.0
    %823 = vmatpush1.msra.mxu0 0.0
    %824 = vmatprep.subr.mxu0 0.0
    %825 = vmatpush1.msra.mxu0 0.0
    %826 = vmatprep.subr.mxu0 0.0
    %827 = vmatpush1.msra.mxu0 0.0
    %828 = vmatprep.subr.mxu0 0.0
    %829 = vmatpush1.msra.mxu0 0.0
    %830 = vmatprep.subr.mxu0 0.0
    %831 = vmatpush1.msra.mxu0 0.0
    %832 = vmatprep.subr.mxu0 0.0
    %833 = vmatpush1.msra.mxu0 0.0
    %834 = vmatprep.subr.mxu0 0.0
    %835 = vmatpush1.msra.mxu0 0.0
    %836 = vmatprep.subr.mxu0 0.0
    %837 = vmatpush1.msra.mxu0 0.0
    %838 = vmatprep.subr.mxu0 0.0
    %839 = vmatpush1.msra.mxu0 0.0
    %840 = vmatprep.subr.mxu0 0.0
    %841 = vmatpush1.msra.mxu0 0.0
    %842 = vmatprep.subr.mxu0 0.0
    %843 = vmatpush1.msra.mxu0 0.0
    %844 = vmatprep.subr.mxu0 0.0
    %845 = vmatpush1.msra.mxu0 0.0
    %846 = vmatprep.subr.mxu0 0.0
    %847 = vmatpush1.msra.mxu0 0.0
    %848 = vmatprep.mubr.f32.mxu0 0.0
    %v849 = vand.u32 %v181, 4294901760
    %850 = vmatmul.mubr.f32.gmra.mrb[0].mxu0 %v849
    %v851 = vpop.f32.mrb[0].mxu0
    %v852 = vadd.f32 %v762, %v851
    %v853 = vpop.f32.mrb[0].mxu0
    %v854 = vadd.f32 %v764, %v853
    %855 = vdwg.mxu0
    %vm856 = vcmask 64512
    %v858 = vsel %vm856, %v59, 0
    %v860 = vand.u32 %v854, 4294901760
    %861 = vmatprep.subr.mxu0 %v860
    %v862 = vand.u32 %v852, 4294901760
    %863 = vmatpush1.msra.mxu0 %v862
    %864 = vmatprep.subr.mxu0 0.0
    %865 = vmatpush1.msra.mxu0 0.0
    %866 = vmatprep.subr.mxu0 0.0
    %867 = vmatpush1.msra.mxu0 0.0
    %868 = vmatprep.subr.mxu0 0.0
    %869 = vmatpush1.msra.mxu0 0.0
    %870 = vmatprep.subr.mxu0 0.0
    %871 = vmatpush1.msra.mxu0 0.0
    %872 = vmatprep.subr.mxu0 0.0
    %873 = vmatpush1.msra.mxu0 0.0
    %874 = vmatprep.subr.mxu0 0.0
    %875 = vmatpush1.msra.mxu0 0.0
    %876 = vmatprep.subr.mxu0 0.0
    %877 = vmatpush1.msra.mxu0 0.0
    %878 = vmatprep.subr.mxu0 0.0
    %879 = vmatpush1.msra.mxu0 0.0
    %880 = vmatprep.subr.mxu0 0.0
    %881 = vmatpush1.msra.mxu0 0.0
    %882 = vmatprep.subr.mxu0 0.0
    %883 = vmatpush1.msra.mxu0 0.0
    %884 = vmatprep.subr.mxu0 0.0
    %885 = vmatpush1.msra.mxu0 0.0
    %886 = vmatprep.subr.mxu0 0.0
    %887 = vmatpush1.msra.mxu0 0.0
    %888 = vmatprep.subr.mxu0 0.0
    %889 = vmatpush1.msra.mxu0 0.0
    %890 = vmatprep.subr.mxu0 0.0
    %891 = vmatpush1.msra.mxu0 0.0
    %892 = vmatprep.subr.mxu0 0.0
    %893 = vmatpush1.msra.mxu0 0.0
    %894 = vmatprep.subr.mxu0 0.0
    %895 = vmatpush1.msra.mxu0 0.0
    %896 = vmatprep.subr.mxu0 0.0
    %897 = vmatpush1.msra.mxu0 0.0
    %898 = vmatprep.subr.mxu0 0.0
    %899 = vmatpush1.msra.mxu0 0.0
    %900 = vmatprep.subr.mxu0 0.0
    %901 = vmatpush1.msra.mxu0 0.0
    %902 = vmatprep.subr.mxu0 0.0
    %903 = vmatpush1.msra.mxu0 0.0
    %904 = vmatprep.subr.mxu0 0.0
    %905 = vmatpush1.msra.mxu0 0.0
    %906 = vmatprep.subr.mxu0 0.0
    %907 = vmatpush1.msra.mxu0 0.0
    %908 = vmatprep.subr.mxu0 0.0
    %909 = vmatpush1.msra.mxu0 0.0
    %910 = vmatprep.subr.mxu0 0.0
    %911 = vmatpush1.msra.mxu0 0.0
    %912 = vmatprep.subr.mxu0 0.0
    %913 = vmatpush1.msra.mxu0 0.0
    %914 = vmatprep.subr.mxu0 0.0
    %915 = vmatpush1.msra.mxu0 0.0
    %916 = vmatprep.subr.mxu0 0.0
    %917 = vmatpush1.msra.mxu0 0.0
    %918 = vmatprep.subr.mxu0 0.0
    %919 = vmatpush1.msra.mxu0 0.0
    %920 = vmatprep.subr.mxu0 0.0
    %921 = vmatpush1.msra.mxu0 0.0
    %922 = vmatprep.subr.mxu0 0.0
    %923 = vmatpush1.msra.mxu0 0.0
    %924 = vmatprep.subr.mxu0 0.0
    %925 = vmatpush1.msra.mxu0 0.0
    %926 = vmatprep.mubr.f32.mxu0 0.0
    %v927 = vand.u32 %v858, 4294901760
    %v928 = vsub.f32 %v858, %v927
    %v929 = vand.u32 %v928, 4294901760
    %v930 = vsub.f32 %v928, %v929
    %v931 = vand.u32 %v930, 4294901760
    %932 = vmatmul.mubr.f32.gmra.mrb[0].mxu0 %v931
    %v933 = vpop.f32.mrb[0].mxu0
    %v934 = vadd.f32 0.0, %v933
    %v935 = vpop.f32.mrb[0].mxu0
    %v936 = vadd.f32 0.0, %v935
    %937 = vdwg.mxu0
    %v938 = vand.u32 %v854, 4294901760
    %v939 = vsub.f32 %v854, %v938
    %v940 = vand.u32 %v939, 4294901760
    %v941 = vsub.f32 %v939, %v940
    %v942 = vand.u32 %v941, 4294901760
    %943 = vmatprep.subr.mxu0 %v942
    %v944 = vand.u32 %v852, 4294901760
    %v945 = vsub.f32 %v852, %v944
    %v946 = vand.u32 %v945, 4294901760
    %v947 = vsub.f32 %v945, %v946
    %v948 = vand.u32 %v947, 4294901760
    %949 = vmatpush1.msra.mxu0 %v948
    %950 = vmatprep.subr.mxu0 0.0
    %951 = vmatpush1.msra.mxu0 0.0
    %952 = vmatprep.subr.mxu0 0.0
    %953 = vmatpush1.msra.mxu0 0.0
    %954 = vmatprep.subr.mxu0 0.0
    %955 = vmatpush1.msra.mxu0 0.0
    %956 = vmatprep.subr.mxu0 0.0
    %957 = vmatpush1.msra.mxu0 0.0
    %958 = vmatprep.subr.mxu0 0.0
    %959 = vmatpush1.msra.mxu0 0.0
    %960 = vmatprep.subr.mxu0 0.0
    %961 = vmatpush1.msra.mxu0 0.0
    %962 = vmatprep.subr.mxu0 0.0
    %963 = vmatpush1.msra.mxu0 0.0
    %964 = vmatprep.subr.mxu0 0.0
    %965 = vmatpush1.msra.mxu0 0.0
    %966 = vmatprep.subr.mxu0 0.0
    %967 = vmatpush1.msra.mxu0 0.0
    %968 = vmatprep.subr.mxu0 0.0
    %969 = vmatpush1.msra.mxu0 0.0
    %970 = vmatprep.subr.mxu0 0.0
    %971 = vmatpush1.msra.mxu0 0.0
    %972 = vmatprep.subr.mxu0 0.0
    %973 = vmatpush1.msra.mxu0 0.0
    %974 = vmatprep.subr.mxu0 0.0
    %975 = vmatpush1.msra.mxu0 0.0
    %976 = vmatprep.subr.mxu0 0.0
    %977 = vmatpush1.msra.mxu0 0.0
    %978 = vmatprep.subr.mxu0 0.0
    %979 = vmatpush1.msra.mxu0 0.0
    %980 = vmatprep.subr.mxu0 0.0
    %981 = vmatpush1.msra.mxu0 0.0
    %982 = vmatprep.subr.mxu0 0.0
    %983 = vmatpush1.msra.mxu0 0.0
    %984 = vmatprep.subr.mxu0 0.0
    %985 = vmatpush1.msra.mxu0 0.0
    %986 = vmatprep.subr.mxu0 0.0
    %987 = vmatpush1.msra.mxu0 0.0
    %988 = vmatprep.subr.mxu0 0.0
    %989 = vmatpush1.msra.mxu0 0.0
    %990 = vmatprep.subr.mxu0 0.0
    %991 = vmatpush1.msra.mxu0 0.0
    %992 = vmatprep.subr.mxu0 0.0
    %993 = vmatpush1.msra.mxu0 0.0
    %994 = vmatprep.subr.mxu0 0.0
    %995 = vmatpush1.msra.mxu0 0.0
    %996 = vmatprep.subr.mxu0 0.0
    %997 = vmatpush1.msra.mxu0 0.0
    %998 = vmatprep.subr.mxu0 0.0
    %999 = vmatpush1.msra.mxu0 0.0
    %1000 = vmatprep.subr.mxu0 0.0
    %1001 = vmatpush1.msra.mxu0 0.0
    %1002 = vmatprep.subr.mxu0 0.0
    %1003 = vmatpush1.msra.mxu0 0.0
    %1004 = vmatprep.subr.mxu0 0.0
    %1005 = vmatpush1.msra.mxu0 0.0
    %1006 = vmatprep.subr.mxu0 0.0
    %1007 = vmatpush1.msra.mxu0 0.0
    %1008 = vmatprep.subr.mxu0 0.0
    %1009 = vmatpush1.msra.mxu0 0.0
    %1010 = vmatprep.subr.mxu0 0.0
    %1011 = vmatpush1.msra.mxu0 0.0
    %1012 = vmatprep.mubr.f32.mxu0 0.0
    %v1013 = vand.u32 %v858, 4294901760
    %1014 = vmatmul.mubr.f32.gmra.mrb[0].mxu0 %v1013
    %v1015 = vpop.f32.mrb[0].mxu0
    %v1016 = vadd.f32 %v934, %v1015
    %v1017 = vpop.f32.mrb[0].mxu0
    %v1018 = vadd.f32 %v936, %v1017
    %1019 = vdwg.mxu0
    %v1020 = vand.u32 %v854, 4294901760
    %v1021 = vsub.f32 %v854, %v1020
    %1022 = vmatprep.subr.mxu0 %v1021
    %v1023 = vand.u32 %v852, 4294901760
    %v1024 = vsub.f32 %v852, %v1023
    %1025 = vmatpush1.msra.mxu0 %v1024
    %1026 = vmatprep.subr.mxu0 0.0
    %1027 = vmatpush1.msra.mxu0 0.0
    %1028 = vmatprep.subr.mxu0 0.0
    %1029 = vmatpush1.msra.mxu0 0.0
    %1030 = vmatprep.subr.mxu0 0.0
    %1031 = vmatpush1.msra.mxu0 0.0
    %1032 = vmatprep.subr.mxu0 0.0
    %1033 = vmatpush1.msra.mxu0 0.0
    %1034 = vmatprep.subr.mxu0 0.0
    %1035 = vmatpush1.msra.mxu0 0.0
    %1036 = vmatprep.subr.mxu0 0.0
    %1037 = vmatpush1.msra.mxu0 0.0
    %1038 = vmatprep.subr.mxu0 0.0
    %1039 = vmatpush1.msra.mxu0 0.0
    %1040 = vmatprep.subr.mxu0 0.0
    %1041 = vmatpush1.msra.mxu0 0.0
    %1042 = vmatprep.subr.mxu0 0.0
    %1043 = vmatpush1.msra.mxu0 0.0
    %1044 = vmatprep.subr.mxu0 0.0
    %1045 = vmatpush1.msra.mxu0 0.0
    %1046 = vmatprep.subr.mxu0 0.0
    %1047 = vmatpush1.msra.mxu0 0.0
    %1048 = vmatprep.subr.mxu0 0.0
    %1049 = vmatpush1.msra.mxu0 0.0
    %1050 = vmatprep.subr.mxu0 0.0
    %1051 = vmatpush1.msra.mxu0 0.0
    %1052 = vmatprep.subr.mxu0 0.0
    %1053 = vmatpush1.msra.mxu0 0.0
    %1054 = vmatprep.subr.mxu0 0.0
    %1055 = vmatpush1.msra.mxu0 0.0
    %1056 = vmatprep.subr.mxu0 0.0
    %1057 = vmatpush1.msra.mxu0 0.0
    %1058 = vmatprep.subr.mxu0 0.0
    %1059 = vmatpush1.msra.mxu0 0.0
    %1060 = vmatprep.subr.mxu0 0.0
    %1061 = vmatpush1.msra.mxu0 0.0
    %1062 = vmatprep.subr.mxu0 0.0
    %1063 = vmatpush1.msra.mxu0 0.0
    %1064 = vmatprep.subr.mxu0 0.0
    %1065 = vmatpush1.msra.mxu0 0.0
    %1066 = vmatprep.subr.mxu0 0.0
    %1067 = vmatpush1.msra.mxu0 0.0
    %1068 = vmatprep.subr.mxu0 0.0
    %1069 = vmatpush1.msra.mxu0 0.0
    %1070 = vmatprep.subr.mxu0 0.0
    %1071 = vmatpush1.msra.mxu0 0.0
    %1072 = vmatprep.subr.mxu0 0.0
    %1073 = vmatpush1.msra.mxu0 0.0
    %1074 = vmatprep.subr.mxu0 0.0
    %1075 = vmatpush1.msra.mxu0 0.0
    %1076 = vmatprep.subr.mxu0 0.0
    %1077 = vmatpush1.msra.mxu0 0.0
    %1078 = vmatprep.subr.mxu0 0.0
    %1079 = vmatpush1.msra.mxu0 0.0
    %1080 = vmatprep.subr.mxu0 0.0
    %1081 = vmatpush1.msra.mxu0 0.0
    %1082 = vmatprep.subr.mxu0 0.0
    %1083 = vmatpush1.msra.mxu0 0.0
    %1084 = vmatprep.subr.mxu0 0.0
    %1085 = vmatpush1.msra.mxu0 0.0
    %1086 = vmatprep.subr.mxu0 0.0
    %1087 = vmatpush1.msra.mxu0 0.0
    %1088 = vmatprep.mubr.f32.mxu0 0.0
    %v1089 = vand.u32 %v858, 4294901760
    %v1090 = vsub.f32 %v858, %v1089
    %1091 = vmatmul.mubr.f32.gmra.mrb[0].mxu0 %v1090
    %v1092 = vpop.f32.mrb[0].mxu0
    %v1093 = vadd.f32 %v1016, %v1092
    %v1094 = vpop.f32.mrb[0].mxu0
    %v1095 = vadd.f32 %v1018, %v1094
    %1096 = vdwg.mxu0
    %v1097 = vand.u32 %v854, 4294901760
    %1098 = vmatprep.subr.mxu0 %v1097
    %v1099 = vand.u32 %v852, 4294901760
    %1100 = vmatpush1.msra.mxu0 %v1099
    %1101 = vmatprep.subr.mxu0 0.0
    %1102 = vmatpush1.msra.mxu0 0.0
    %1103 = vmatprep.subr.mxu0 0.0
    %1104 = vmatpush1.msra.mxu0 0.0
    %1105 = vmatprep.subr.mxu0 0.0
    %1106 = vmatpush1.msra.mxu0 0.0
    %1107 = vmatprep.subr.mxu0 0.0
    %1108 = vmatpush1.msra.mxu0 0.0
    %1109 = vmatprep.subr.mxu0 0.0
    %1110 = vmatpush1.msra.mxu0 0.0
    %1111 = vmatprep.subr.mxu0 0.0
    %1112 = vmatpush1.msra.mxu0 0.0
    %1113 = vmatprep.subr.mxu0 0.0
    %1114 = vmatpush1.msra.mxu0 0.0
    %1115 = vmatprep.subr.mxu0 0.0
    %1116 = vmatpush1.msra.mxu0 0.0
    %1117 = vmatprep.subr.mxu0 0.0
    %1118 = vmatpush1.msra.mxu0 0.0
    %1119 = vmatprep.subr.mxu0 0.0
    %1120 = vmatpush1.msra.mxu0 0.0
    %1121 = vmatprep.subr.mxu0 0.0
    %1122 = vmatpush1.msra.mxu0 0.0
    %1123 = vmatprep.subr.mxu0 0.0
    %1124 = vmatpush1.msra.mxu0 0.0
    %1125 = vmatprep.subr.mxu0 0.0
    %1126 = vmatpush1.msra.mxu0 0.0
    %1127 = vmatprep.subr.mxu0 0.0
    %1128 = vmatpush1.msra.mxu0 0.0
    %1129 = vmatprep.subr.mxu0 0.0
    %1130 = vmatpush1.msra.mxu0 0.0
    %1131 = vmatprep.subr.mxu0 0.0
    %1132 = vmatpush1.msra.mxu0 0.0
    %1133 = vmatprep.subr.mxu0 0.0
    %1134 = vmatpush1.msra.mxu0 0.0
    %1135 = vmatprep.subr.mxu0 0.0
    %1136 = vmatpush1.msra.mxu0 0.0
    %1137 = vmatprep.subr.mxu0 0.0
    %1138 = vmatpush1.msra.mxu0 0.0
    %1139 = vmatprep.subr.mxu0 0.0
    %1140 = vmatpush1.msra.mxu0 0.0
    %1141 = vmatprep.subr.mxu0 0.0
    %1142 = vmatpush1.msra.mxu0 0.0
    %1143 = vmatprep.subr.mxu0 0.0
    %1144 = vmatpush1.msra.mxu0 0.0
    %1145 = vmatprep.subr.mxu0 0.0
    %1146 = vmatpush1.msra.mxu0 0.0
    %1147 = vmatprep.subr.mxu0 0.0
    %1148 = vmatpush1.msra.mxu0 0.0
    %1149 = vmatprep.subr.mxu0 0.0
    %1150 = vmatpush1.msra.mxu0 0.0
    %1151 = vmatprep.subr.mxu0 0.0
    %1152 = vmatpush1.msra.mxu0 0.0
    %1153 = vmatprep.subr.mxu0 0.0
    %1154 = vmatpush1.msra.mxu0 0.0
    %1155 = vmatprep.subr.mxu0 0.0
    %1156 = vmatpush1.msra.mxu0 0.0
    %1157 = vmatprep.subr.mxu0 0.0
    %1158 = vmatpush1.msra.mxu0 0.0
    %1159 = vmatprep.subr.mxu0 0.0
    %1160 = vmatpush1.msra.mxu0 0.0
    %1161 = vmatprep.subr.mxu0 0.0
    %1162 = vmatpush1.msra.mxu0 0.0
    %1163 = vmatprep.mubr.f32.mxu0 0.0
    %v1164 = vand.u32 %v858, 4294901760
    %v1165 = vsub.f32 %v858, %v1164
    %v1166 = vand.u32 %v1165, 4294901760
    %1167 = vmatmul.mubr.f32.gmra.mrb[0].mxu0 %v1166
    %v1168 = vpop.f32.mrb[0].mxu0
    %v1169 = vadd.f32 %v1093, %v1168
    %v1170 = vpop.f32.mrb[0].mxu0
    %v1171 = vadd.f32 %v1095, %v1170
    %1172 = vdwg.mxu0
    %v1173 = vand.u32 %v854, 4294901760
    %v1174 = vsub.f32 %v854, %v1173
    %v1175 = vand.u32 %v1174, 4294901760
    %1176 = vmatprep.subr.mxu0 %v1175
    %v1177 = vand.u32 %v852, 4294901760
    %v1178 = vsub.f32 %v852, %v1177
    %v1179 = vand.u32 %v1178, 4294901760
    %1180 = vmatpush1.msra.mxu0 %v1179
    %1181 = vmatprep.subr.mxu0 0.0
    %1182 = vmatpush1.msra.mxu0 0.0
    %1183 = vmatprep.subr.mxu0 0.0
    %1184 = vmatpush1.msra.mxu0 0.0
    %1185 = vmatprep.subr.mxu0 0.0
    %1186 = vmatpush1.msra.mxu0 0.0
    %1187 = vmatprep.subr.mxu0 0.0
    %1188 = vmatpush1.msra.mxu0 0.0
    %1189 = vmatprep.subr.mxu0 0.0
    %1190 = vmatpush1.msra.mxu0 0.0
    %1191 = vmatprep.subr.mxu0 0.0
    %1192 = vmatpush1.msra.mxu0 0.0
    %1193 = vmatprep.subr.mxu0 0.0
    %1194 = vmatpush1.msra.mxu0 0.0
    %1195 = vmatprep.subr.mxu0 0.0
    %1196 = vmatpush1.msra.mxu0 0.0
    %1197 = vmatprep.subr.mxu0 0.0
    %1198 = vmatpush1.msra.mxu0 0.0
    %1199 = vmatprep.subr.mxu0 0.0
    %1200 = vmatpush1.msra.mxu0 0.0
    %1201 = vmatprep.subr.mxu0 0.0
    %1202 = vmatpush1.msra.mxu0 0.0
    %1203 = vmatprep.subr.mxu0 0.0
    %1204 = vmatpush1.msra.mxu0 0.0
    %1205 = vmatprep.subr.mxu0 0.0
    %1206 = vmatpush1.msra.mxu0 0.0
    %1207 = vmatprep.subr.mxu0 0.0
    %1208 = vmatpush1.msra.mxu0 0.0
    %1209 = vmatprep.subr.mxu0 0.0
    %1210 = vmatpush1.msra.mxu0 0.0
    %1211 = vmatprep.subr.mxu0 0.0
    %1212 = vmatpush1.msra.mxu0 0.0
    %1213 = vmatprep.subr.mxu0 0.0
    %1214 = vmatpush1.msra.mxu0 0.0
    %1215 = vmatprep.subr.mxu0 0.0
    %1216 = vmatpush1.msra.mxu0 0.0
    %1217 = vmatprep.subr.mxu0 0.0
    %1218 = vmatpush1.msra.mxu0 0.0
    %1219 = vmatprep.subr.mxu0 0.0
    %1220 = vmatpush1.msra.mxu0 0.0
    %1221 = vmatprep.subr.mxu0 0.0
    %1222 = vmatpush1.msra.mxu0 0.0
    %1223 = vmatprep.subr.mxu0 0.0
    %1224 = vmatpush1.msra.mxu0 0.0
    %1225 = vmatprep.subr.mxu0 0.0
    %1226 = vmatpush1.msra.mxu0 0.0
    %1227 = vmatprep.subr.mxu0 0.0
    %1228 = vmatpush1.msra.mxu0 0.0
    %1229 = vmatprep.subr.mxu0 0.0
    %1230 = vmatpush1.msra.mxu0 0.0
    %1231 = vmatprep.subr.mxu0 0.0
    %1232 = vmatpush1.msra.mxu0 0.0
    %1233 = vmatprep.subr.mxu0 0.0
    %1234 = vmatpush1.msra.mxu0 0.0
    %1235 = vmatprep.subr.mxu0 0.0
    %1236 = vmatpush1.msra.mxu0 0.0
    %1237 = vmatprep.subr.mxu0 0.0
    %1238 = vmatpush1.msra.mxu0 0.0
    %1239 = vmatprep.subr.mxu0 0.0
    %1240 = vmatpush1.msra.mxu0 0.0
    %1241 = vmatprep.subr.mxu0 0.0
    %1242 = vmatpush1.msra.mxu0 0.0
    %1243 = vmatprep.mubr.f32.mxu0 0.0
    %v1244 = vand.u32 %v858, 4294901760
    %1245 = vmatmul.mubr.f32.gmra.mrb[0].mxu0 %v1244
    %v1246 = vpop.f32.mrb[0].mxu0
    %v1247 = vadd.f32 %v1169, %v1246
    %v1248 = vpop.f32.mrb[0].mxu0
    %v1249 = vadd.f32 %v1171, %v1248
    %1250 = vdwg.mxu0
    %v1251 = vand.u32 %v854, 4294901760
    %1252 = vmatprep.subr.mxu0 %v1251
    %v1253 = vand.u32 %v852, 4294901760
    %1254 = vmatpush1.msra.mxu0 %v1253
    %1255 = vmatprep.subr.mxu0 0.0
    %1256 = vmatpush1.msra.mxu0 0.0
    %1257 = vmatprep.subr.mxu0 0.0
    %1258 = vmatpush1.msra.mxu0 0.0
    %1259 = vmatprep.subr.mxu0 0.0
    %1260 = vmatpush1.msra.mxu0 0.0
    %1261 = vmatprep.subr.mxu0 0.0
    %1262 = vmatpush1.msra.mxu0 0.0
    %1263 = vmatprep.subr.mxu0 0.0
    %1264 = vmatpush1.msra.mxu0 0.0
    %1265 = vmatprep.subr.mxu0 0.0
    %1266 = vmatpush1.msra.mxu0 0.0
    %1267 = vmatprep.subr.mxu0 0.0
    %1268 = vmatpush1.msra.mxu0 0.0
    %1269 = vmatprep.subr.mxu0 0.0
    %1270 = vmatpush1.msra.mxu0 0.0
    %1271 = vmatprep.subr.mxu0 0.0
    %1272 = vmatpush1.msra.mxu0 0.0
    %1273 = vmatprep.subr.mxu0 0.0
    %1274 = vmatpush1.msra.mxu0 0.0
    %1275 = vmatprep.subr.mxu0 0.0
    %1276 = vmatpush1.msra.mxu0 0.0
    %1277 = vmatprep.subr.mxu0 0.0
    %1278 = vmatpush1.msra.mxu0 0.0
    %1279 = vmatprep.subr.mxu0 0.0
    %1280 = vmatpush1.msra.mxu0 0.0
    %1281 = vmatprep.subr.mxu0 0.0
    %1282 = vmatpush1.msra.mxu0 0.0
    %1283 = vmatprep.subr.mxu0 0.0
    %1284 = vmatpush1.msra.mxu0 0.0
    %1285 = vmatprep.subr.mxu0 0.0
    %1286 = vmatpush1.msra.mxu0 0.0
    %1287 = vmatprep.subr.mxu0 0.0
    %1288 = vmatpush1.msra.mxu0 0.0
    %1289 = vmatprep.subr.mxu0 0.0
    %1290 = vmatpush1.msra.mxu0 0.0
    %1291 = vmatprep.subr.mxu0 0.0
    %1292 = vmatpush1.msra.mxu0 0.0
    %1293 = vmatprep.subr.mxu0 0.0
    %1294 = vmatpush1.msra.mxu0 0.0
    %1295 = vmatprep.subr.mxu0 0.0
    %1296 = vmatpush1.msra.mxu0 0.0
    %1297 = vmatprep.subr.mxu0 0.0
    %1298 = vmatpush1.msra.mxu0 0.0
    %1299 = vmatprep.subr.mxu0 0.0
    %1300 = vmatpush1.msra.mxu0 0.0
    %1301 = vmatprep.subr.mxu0 0.0
    %1302 = vmatpush1.msra.mxu0 0.0
    %1303 = vmatprep.subr.mxu0 0.0
    %1304 = vmatpush1.msra.mxu0 0.0
    %1305 = vmatprep.subr.mxu0 0.0
    %1306 = vmatpush1.msra.mxu0 0.0
    %1307 = vmatprep.subr.mxu0 0.0
    %1308 = vmatpush1.msra.mxu0 0.0
    %1309 = vmatprep.subr.mxu0 0.0
    %1310 = vmatpush1.msra.mxu0 0.0
    %1311 = vmatprep.subr.mxu0 0.0
    %1312 = vmatpush1.msra.mxu0 0.0
    %1313 = vmatprep.subr.mxu0 0.0
    %1314 = vmatpush1.msra.mxu0 0.0
    %1315 = vmatprep.subr.mxu0 0.0
    %1316 = vmatpush1.msra.mxu0 0.0
    %1317 = vmatprep.mubr.f32.mxu0 0.0
    %v1318 = vand.u32 %v858, 4294901760
    %1319 = vmatmul.mubr.f32.gmra.mrb[0].mxu0 %v1318
    %v1320 = vpop.f32.mrb[0].mxu0
    %v1321 = vadd.f32 %v1247, %v1320
    %v1322 = vpop.f32.mrb[0].mxu0
    %v1323 = vadd.f32 %v1249, %v1322
    %1324 = vdwg.mxu0
    %v1325 = vadd.f32 %v1321, %v1323
    %1326 = vadd.xlane.f32.xlu0 %v1325
    %v1327 = vpop.xlane.xlu0 %1326
    %v1328 = vmul.f32 %v852, %v852
    %v1329 = vmul.f32 %v854, %v854
    %v1330 = vand.u32 %v1329, 4294901760
    %1331 = vmatprep.subr.mxu0 %v1330
    %v1332 = vand.u32 %v1328, 4294901760
    %1333 = vmatpush1.msra.mxu0 %v1332
    %1334 = vmatprep.subr.mxu0 0.0
    %1335 = vmatpush1.msra.mxu0 0.0
    %1336 = vmatprep.subr.mxu0 0.0
    %1337 = vmatpush1.msra.mxu0 0.0
    %1338 = vmatprep.subr.mxu0 0.0
    %1339 = vmatpush1.msra.mxu0 0.0
    %1340 = vmatprep.subr.mxu0 0.0
    %1341 = vmatpush1.msra.mxu0 0.0
    %1342 = vmatprep.subr.mxu0 0.0
    %1343 = vmatpush1.msra.mxu0 0.0
    %1344 = vmatprep.subr.mxu0 0.0
    %1345 = vmatpush1.msra.mxu0 0.0
    %1346 = vmatprep.subr.mxu0 0.0
    %1347 = vmatpush1.msra.mxu0 0.0
    %1348 = vmatprep.subr.mxu0 0.0
    %1349 = vmatpush1.msra.mxu0 0.0
    %1350 = vmatprep.subr.mxu0 0.0
    %1351 = vmatpush1.msra.mxu0 0.0
    %1352 = vmatprep.subr.mxu0 0.0
    %1353 = vmatpush1.msra.mxu0 0.0
    %1354 = vmatprep.subr.mxu0 0.0
    %1355 = vmatpush1.msra.mxu0 0.0
    %1356 = vmatprep.subr.mxu0 0.0
    %1357 = vmatpush1.msra.mxu0 0.0
    %1358 = vmatprep.subr.mxu0 0.0
    %1359 = vmatpush1.msra.mxu0 0.0
    %1360 = vmatprep.subr.mxu0 0.0
    %1361 = vmatpush1.msra.mxu0 0.0
    %1362 = vmatprep.subr.mxu0 0.0
    %1363 = vmatpush1.msra.mxu0 0.0
    %1364 = vmatprep.subr.mxu0 0.0
    %1365 = vmatpush1.msra.mxu0 0.0
    %1366 = vmatprep.subr.mxu0 0.0
    %1367 = vmatpush1.msra.mxu0 0.0
    %1368 = vmatprep.subr.mxu0 0.0
    %1369 = vmatpush1.msra.mxu0 0.0
    %1370 = vmatprep.subr.mxu0 0.0
    %1371 = vmatpush1.msra.mxu0 0.0
    %1372 = vmatprep.subr.mxu0 0.0
    %1373 = vmatpush1.msra.mxu0 0.0
    %1374 = vmatprep.subr.mxu0 0.0
    %1375 = vmatpush1.msra.mxu0 0.0
    %1376 = vmatprep.subr.mxu0 0.0
    %1377 = vmatpush1.msra.mxu0 0.0
    %1378 = vmatprep.subr.mxu0 0.0
    %1379 = vmatpush1.msra.mxu0 0.0
    %1380 = vmatprep.subr.mxu0 0.0
    %1381 = vmatpush1.msra.mxu0 0.0
    %1382 = vmatprep.subr.mxu0 0.0
    %1383 = vmatpush1.msra.mxu0 0.0
    %1384 = vmatprep.subr.mxu0 0.0
    %1385 = vmatpush1.msra.mxu0 0.0
    %1386 = vmatprep.subr.mxu0 0.0
    %1387 = vmatpush1.msra.mxu0 0.0
    %1388 = vmatprep.subr.mxu0 0.0
    %1389 = vmatpush1.msra.mxu0 0.0
    %1390 = vmatprep.subr.mxu0 0.0
    %1391 = vmatpush1.msra.mxu0 0.0
    %1392 = vmatprep.subr.mxu0 0.0
    %1393 = vmatpush1.msra.mxu0 0.0
    %1394 = vmatprep.subr.mxu0 0.0
    %1395 = vmatpush1.msra.mxu0 0.0
    %1396 = vmatprep.mubr.f32.mxu0 0.0
    %v1397 = vand.u32 %v858, 4294901760
    %v1398 = vsub.f32 %v858, %v1397
    %v1399 = vand.u32 %v1398, 4294901760
    %v1400 = vsub.f32 %v1398, %v1399
    %v1401 = vand.u32 %v1400, 4294901760
    %1402 = vmatmul.mubr.f32.gmra.mrb[0].mxu0 %v1401
    %v1403 = vpop.f32.mrb[0].mxu0
    %v1404 = vadd.f32 0.0, %v1403
    %v1405 = vpop.f32.mrb[0].mxu0
    %v1406 = vadd.f32 0.0, %v1405
    %1407 = vdwg.mxu0
    %v1408 = vand.u32 %v1329, 4294901760
    %v1409 = vsub.f32 %v1329, %v1408
    %v1410 = vand.u32 %v1409, 4294901760
    %v1411 = vsub.f32 %v1409, %v1410
    %v1412 = vand.u32 %v1411, 4294901760
    %1413 = vmatprep.subr.mxu0 %v1412
    %v1414 = vand.u32 %v1328, 4294901760
    %v1415 = vsub.f32 %v1328, %v1414
    %v1416 = vand.u32 %v1415, 4294901760
    %v1417 = vsub.f32 %v1415, %v1416
    %v1418 = vand.u32 %v1417, 4294901760
    %1419 = vmatpush1.msra.mxu0 %v1418
    %1420 = vmatprep.subr.mxu0 0.0
    %1421 = vmatpush1.msra.mxu0 0.0
    %1422 = vmatprep.subr.mxu0 0.0
    %1423 = vmatpush1.msra.mxu0 0.0
    %1424 = vmatprep.subr.mxu0 0.0
    %1425 = vmatpush1.msra.mxu0 0.0
    %1426 = vmatprep.subr.mxu0 0.0
    %1427 = vmatpush1.msra.mxu0 0.0
    %1428 = vmatprep.subr.mxu0 0.0
    %1429 = vmatpush1.msra.mxu0 0.0
    %1430 = vmatprep.subr.mxu0 0.0
    %1431 = vmatpush1.msra.mxu0 0.0
    %1432 = vmatprep.subr.mxu0 0.0
    %1433 = vmatpush1.msra.mxu0 0.0
    %1434 = vmatprep.subr.mxu0 0.0
    %1435 = vmatpush1.msra.mxu0 0.0
    %1436 = vmatprep.subr.mxu0 0.0
    %1437 = vmatpush1.msra.mxu0 0.0
    %1438 = vmatprep.subr.mxu0 0.0
    %1439 = vmatpush1.msra.mxu0 0.0
    %1440 = vmatprep.subr.mxu0 0.0
    %1441 = vmatpush1.msra.mxu0 0.0
    %1442 = vmatprep.subr.mxu0 0.0
    %1443 = vmatpush1.msra.mxu0 0.0
    %1444 = vmatprep.subr.mxu0 0.0
    %1445 = vmatpush1.msra.mxu0 0.0
    %1446 = vmatprep.subr.mxu0 0.0
    %1447 = vmatpush1.msra.mxu0 0.0
    %1448 = vmatprep.subr.mxu0 0.0
    %1449 = vmatpush1.msra.mxu0 0.0
    %1450 = vmatprep.subr.mxu0 0.0
    %1451 = vmatpush1.msra.mxu0 0.0
    %1452 = vmatprep.subr.mxu0 0.0
    %1453 = vmatpush1.msra.mxu0 0.0
    %1454 = vmatprep.subr.mxu0 0.0
    %1455 = vmatpush1.msra.mxu0 0.0
    %1456 = vmatprep.subr.mxu0 0.0
    %1457 = vmatpush1.msra.mxu0 0.0
    %1458 = vmatprep.subr.mxu0 0.0
    %1459 = vmatpush1.msra.mxu0 0.0
    %1460 = vmatprep.subr.mxu0 0.0
    %1461 = vmatpush1.msra.mxu0 0.0
    %1462 = vmatprep.subr.mxu0 0.0
    %1463 = vmatpush1.msra.mxu0 0.0
    %1464 = vmatprep.subr.mxu0 0.0
    %1465 = vmatpush1.msra.mxu0 0.0
    %1466 = vmatprep.subr.mxu0 0.0
    %1467 = vmatpush1.msra.mxu0 0.0
    %1468 = vmatprep.subr.mxu0 0.0
    %1469 = vmatpush1.msra.mxu0 0.0
    %1470 = vmatprep.subr.mxu0 0.0
    %1471 = vmatpush1.msra.mxu0 0.0
    %1472 = vmatprep.subr.mxu0 0.0
    %1473 = vmatpush1.msra.mxu0 0.0
    %1474 = vmatprep.subr.mxu0 0.0
    %1475 = vmatpush1.msra.mxu0 0.0
    %1476 = vmatprep.subr.mxu0 0.0
    %1477 = vmatpush1.msra.mxu0 0.0
    %1478 = vmatprep.subr.mxu0 0.0
    %1479 = vmatpush1.msra.mxu0 0.0
    %1480 = vmatprep.subr.mxu0 0.0
    %1481 = vmatpush1.msra.mxu0 0.0
    %1482 = vmatprep.mubr.f32.mxu0 0.0
    %v1483 = vand.u32 %v858, 4294901760
    %1484 = vmatmul.mubr.f32.gmra.mrb[0].mxu0 %v1483
    %v1485 = vpop.f32.mrb[0].mxu0
    %v1486 = vadd.f32 %v1404, %v1485
    %v1487 = vpop.f32.mrb[0].mxu0
    %v1488 = vadd.f32 %v1406, %v1487
    %1489 = vdwg.mxu0
    %v1490 = vand.u32 %v1329, 4294901760
    %v1491 = vsub.f32 %v1329, %v1490
    %1492 = vmatprep.subr.mxu0 %v1491
    %v1493 = vand.u32 %v1328, 4294901760
    %v1494 = vsub.f32 %v1328, %v1493
    %1495 = vmatpush1.msra.mxu0 %v1494
    %1496 = vmatprep.subr.mxu0 0.0
    %1497 = vmatpush1.msra.mxu0 0.0
    %1498 = vmatprep.subr.mxu0 0.0
    %1499 = vmatpush1.msra.mxu0 0.0
    %1500 = vmatprep.subr.mxu0 0.0
    %1501 = vmatpush1.msra.mxu0 0.0
    %1502 = vmatprep.subr.mxu0 0.0
    %1503 = vmatpush1.msra.mxu0 0.0
    %1504 = vmatprep.subr.mxu0 0.0
    %1505 = vmatpush1.msra.mxu0 0.0
    %1506 = vmatprep.subr.mxu0 0.0
    %1507 = vmatpush1.msra.mxu0 0.0
    %1508 = vmatprep.subr.mxu0 0.0
    %1509 = vmatpush1.msra.mxu0 0.0
    %1510 = vmatprep.subr.mxu0 0.0
    %1511 = vmatpush1.msra.mxu0 0.0
    %1512 = vmatprep.subr.mxu0 0.0
    %1513 = vmatpush1.msra.mxu0 0.0
    %1514 = vmatprep.subr.mxu0 0.0
    %1515 = vmatpush1.msra.mxu0 0.0
    %1516 = vmatprep.subr.mxu0 0.0
    %1517 = vmatpush1.msra.mxu0 0.0
    %1518 = vmatprep.subr.mxu0 0.0
    %1519 = vmatpush1.msra.mxu0 0.0
    %1520 = vmatprep.subr.mxu0 0.0
    %1521 = vmatpush1.msra.mxu0 0.0
    %1522 = vmatprep.subr.mxu0 0.0
    %1523 = vmatpush1.msra.mxu0 0.0
    %1524 = vmatprep.subr.mxu0 0.0
    %1525 = vmatpush1.msra.mxu0 0.0
    %1526 = vmatprep.subr.mxu0 0.0
    %1527 = vmatpush1.msra.mxu0 0.0
    %1528 = vmatprep.subr.mxu0 0.0
    %1529 = vmatpush1.msra.mxu0 0.0
    %1530 = vmatprep.subr.mxu0 0.0
    %1531 = vmatpush1.msra.mxu0 0.0
    %1532 = vmatprep.subr.mxu0 0.0
    %1533 = vmatpush1.msra.mxu0 0.0
    %1534 = vmatprep.subr.mxu0 0.0
    %1535 = vmatpush1.msra.mxu0 0.0
    %1536 = vmatprep.subr.mxu0 0.0
    %1537 = vmatpush1.msra.mxu0 0.0
    %1538 = vmatprep.subr.mxu0 0.0
    %1539 = vmatpush1.msra.mxu0 0.0
    %1540 = vmatprep.subr.mxu0 0.0
    %1541 = vmatpush1.msra.mxu0 0.0
    %1542 = vmatprep.subr.mxu0 0.0
    %1543 = vmatpush1.msra.mxu0 0.0
    %1544 = vmatprep.subr.mxu0 0.0
    %1545 = vmatpush1.msra.mxu0 0.0
    %1546 = vmatprep.subr.mxu0 0.0
    %1547 = vmatpush1.msra.mxu0 0.0
    %1548 = vmatprep.subr.mxu0 0.0
    %1549 = vmatpush1.msra.mxu0 0.0
    %1550 = vmatprep.subr.mxu0 0.0
    %1551 = vmatpush1.msra.mxu0 0.0
    %1552 = vmatprep.subr.mxu0 0.0
    %1553 = vmatpush1.msra.mxu0 0.0
    %1554 = vmatprep.subr.mxu0 0.0
    %1555 = vmatpush1.msra.mxu0 0.0
    %1556 = vmatprep.subr.mxu0 0.0
    %1557 = vmatpush1.msra.mxu0 0.0
    %1558 = vmatprep.mubr.f32.mxu0 0.0
    %v1559 = vand.u32 %v858, 4294901760
    %v1560 = vsub.f32 %v858, %v1559
    %1561 = vmatmul.mubr.f32.gmra.mrb[0].mxu0 %v1560
    %v1562 = vpop.f32.mrb[0].mxu0
    %v1563 = vadd.f32 %v1486, %v1562
    %v1564 = vpop.f32.mrb[0].mxu0
    %v1565 = vadd.f32 %v1488, %v1564
    %1566 = vdwg.mxu0
    %v1567 = vand.u32 %v1329, 4294901760
    %1568 = vmatprep.subr.mxu0 %v1567
    %v1569 = vand.u32 %v1328, 4294901760
    %1570 = vmatpush1.msra.mxu0 %v1569
    %1571 = vmatprep.subr.mxu0 0.0
    %1572 = vmatpush1.msra.mxu0 0.0
    %1573 = vmatprep.subr.mxu0 0.0
    %1574 = vmatpush1.msra.mxu0 0.0
    %1575 = vmatprep.subr.mxu0 0.0
    %1576 = vmatpush1.msra.mxu0 0.0
    %1577 = vmatprep.subr.mxu0 0.0
    %1578 = vmatpush1.msra.mxu0 0.0
    %1579 = vmatprep.subr.mxu0 0.0
    %1580 = vmatpush1.msra.mxu0 0.0
    %1581 = vmatprep.subr.mxu0 0.0
    %1582 = vmatpush1.msra.mxu0 0.0
    %1583 = vmatprep.subr.mxu0 0.0
    %1584 = vmatpush1.msra.mxu0 0.0
    %1585 = vmatprep.subr.mxu0 0.0
    %1586 = vmatpush1.msra.mxu0 0.0
    %1587 = vmatprep.subr.mxu0 0.0
    %1588 = vmatpush1.msra.mxu0 0.0
    %1589 = vmatprep.subr.mxu0 0.0
    %1590 = vmatpush1.msra.mxu0 0.0
    %1591 = vmatprep.subr.mxu0 0.0
    %1592 = vmatpush1.msra.mxu0 0.0
    %1593 = vmatprep.subr.mxu0 0.0
    %1594 = vmatpush1.msra.mxu0 0.0
    %1595 = vmatprep.subr.mxu0 0.0
    %1596 = vmatpush1.msra.mxu0 0.0
    %1597 = vmatprep.subr.mxu0 0.0
    %1598 = vmatpush1.msra.mxu0 0.0
    %1599 = vmatprep.subr.mxu0 0.0
    %1600 = vmatpush1.msra.mxu0 0.0
    %1601 = vmatprep.subr.mxu0 0.0
    %1602 = vmatpush1.msra.mxu0 0.0
    %1603 = vmatprep.subr.mxu0 0.0
    %1604 = vmatpush1.msra.mxu0 0.0
    %1605 = vmatprep.subr.mxu0 0.0
    %1606 = vmatpush1.msra.mxu0 0.0
    %1607 = vmatprep.subr.mxu0 0.0
    %1608 = vmatpush1.msra.mxu0 0.0
    %1609 = vmatprep.subr.mxu0 0.0
    %1610 = vmatpush1.msra.mxu0 0.0
    %1611 = vmatprep.subr.mxu0 0.0
    %1612 = vmatpush1.msra.mxu0 0.0
    %1613 = vmatprep.subr.mxu0 0.0
    %1614 = vmatpush1.msra.mxu0 0.0
    %1615 = vmatprep.subr.mxu0 0.0
    %1616 = vmatpush1.msra.mxu0 0.0
    %1617 = vmatprep.subr.mxu0 0.0
    %1618 = vmatpush1.msra.mxu0 0.0
    %1619 = vmatprep.subr.mxu0 0.0
    %1620 = vmatpush1.msra.mxu0 0.0
    %1621 = vmatprep.subr.mxu0 0.0
    %1622 = vmatpush1.msra.mxu0 0.0
    %1623 = vmatprep.subr.mxu0 0.0
    %1624 = vmatpush1.msra.mxu0 0.0
    %1625 = vmatprep.subr.mxu0 0.0
    %1626 = vmatpush1.msra.mxu0 0.0
    %1627 = vmatprep.subr.mxu0 0.0
    %1628 = vmatpush1.msra.mxu0 0.0
    %1629 = vmatprep.subr.mxu0 0.0
    %1630 = vmatpush1.msra.mxu0 0.0
    %1631 = vmatprep.subr.mxu0 0.0
    %1632 = vmatpush1.msra.mxu0 0.0
    %1633 = vmatprep.mubr.f32.mxu0 0.0
    %v1634 = vand.u32 %v858, 4294901760
    %v1635 = vsub.f32 %v858, %v1634
    %v1636 = vand.u32 %v1635, 4294901760
    %1637 = vmatmul.mubr.f32.gmra.mrb[0].mxu0 %v1636
    %v1638 = vpop.f32.mrb[0].mxu0
    %v1639 = vadd.f32 %v1563, %v1638
    %v1640 = vpop.f32.mrb[0].mxu0
    %v1641 = vadd.f32 %v1565, %v1640
    %1642 = vdwg.mxu0
    %v1643 = vand.u32 %v1329, 4294901760
    %v1644 = vsub.f32 %v1329, %v1643
    %v1645 = vand.u32 %v1644, 4294901760
    %1646 = vmatprep.subr.mxu0 %v1645
    %v1647 = vand.u32 %v1328, 4294901760
    %v1648 = vsub.f32 %v1328, %v1647
    %v1649 = vand.u32 %v1648, 4294901760
    %1650 = vmatpush1.msra.mxu0 %v1649
    %1651 = vmatprep.subr.mxu0 0.0
    %1652 = vmatpush1.msra.mxu0 0.0
    %1653 = vmatprep.subr.mxu0 0.0
    %1654 = vmatpush1.msra.mxu0 0.0
    %1655 = vmatprep.subr.mxu0 0.0
    %1656 = vmatpush1.msra.mxu0 0.0
    %1657 = vmatprep.subr.mxu0 0.0
    %1658 = vmatpush1.msra.mxu0 0.0
    %1659 = vmatprep.subr.mxu0 0.0
    %1660 = vmatpush1.msra.mxu0 0.0
    %1661 = vmatprep.subr.mxu0 0.0
    %1662 = vmatpush1.msra.mxu0 0.0
    %1663 = vmatprep.subr.mxu0 0.0
    %1664 = vmatpush1.msra.mxu0 0.0
    %1665 = vmatprep.subr.mxu0 0.0
    %1666 = vmatpush1.msra.mxu0 0.0
    %1667 = vmatprep.subr.mxu0 0.0
    %1668 = vmatpush1.msra.mxu0 0.0
    %1669 = vmatprep.subr.mxu0 0.0
    %1670 = vmatpush1.msra.mxu0 0.0
    %1671 = vmatprep.subr.mxu0 0.0
    %1672 = vmatpush1.msra.mxu0 0.0
    %1673 = vmatprep.subr.mxu0 0.0
    %1674 = vmatpush1.msra.mxu0 0.0
    %1675 = vmatprep.subr.mxu0 0.0
    %1676 = vmatpush1.msra.mxu0 0.0
    %1677 = vmatprep.subr.mxu0 0.0
    %1678 = vmatpush1.msra.mxu0 0.0
    %1679 = vmatprep.subr.mxu0 0.0
    %1680 = vmatpush1.msra.mxu0 0.0
    %1681 = vmatprep.subr.mxu0 0.0
    %1682 = vmatpush1.msra.mxu0 0.0
    %1683 = vmatprep.subr.mxu0 0.0
    %1684 = vmatpush1.msra.mxu0 0.0
    %1685 = vmatprep.subr.mxu0 0.0
    %1686 = vmatpush1.msra.mxu0 0.0
    %1687 = vmatprep.subr.mxu0 0.0
    %1688 = vmatpush1.msra.mxu0 0.0
    %1689 = vmatprep.subr.mxu0 0.0
    %1690 = vmatpush1.msra.mxu0 0.0
    %1691 = vmatprep.subr.mxu0 0.0
    %1692 = vmatpush1.msra.mxu0 0.0
    %1693 = vmatprep.subr.mxu0 0.0
    %1694 = vmatpush1.msra.mxu0 0.0
    %1695 = vmatprep.subr.mxu0 0.0
    %1696 = vmatpush1.msra.mxu0 0.0
    %1697 = vmatprep.subr.mxu0 0.0
    %1698 = vmatpush1.msra.mxu0 0.0
    %1699 = vmatprep.subr.mxu0 0.0
    %1700 = vmatpush1.msra.mxu0 0.0
    %1701 = vmatprep.subr.mxu0 0.0
    %1702 = vmatpush1.msra.mxu0 0.0
    %1703 = vmatprep.subr.mxu0 0.0
    %1704 = vmatpush1.msra.mxu0 0.0
    %1705 = vmatprep.subr.mxu0 0.0
    %1706 = vmatpush1.msra.mxu0 0.0
    %1707 = vmatprep.subr.mxu0 0.0
    %1708 = vmatpush1.msra.mxu0 0.0
    %1709 = vmatprep.subr.mxu0 0.0
    %1710 = vmatpush1.msra.mxu0 0.0
    %1711 = vmatprep.subr.mxu0 0.0
    %1712 = vmatpush1.msra.mxu0 0.0
    %1713 = vmatprep.mubr.f32.mxu0 0.0
    %v1714 = vand.u32 %v858, 4294901760
    %1715 = vmatmul.mubr.f32.gmra.mrb[0].mxu0 %v1714
    %v1716 = vpop.f32.mrb[0].mxu0
    %v1717 = vadd.f32 %v1639, %v1716
    %v1718 = vpop.f32.mrb[0].mxu0
    %v1719 = vadd.f32 %v1641, %v1718
    %1720 = vdwg.mxu0
    %v1721 = vand.u32 %v1329, 4294901760
    %1722 = vmatprep.subr.mxu0 %v1721
    %v1723 = vand.u32 %v1328, 4294901760
    %1724 = vmatpush1.msra.mxu0 %v1723
    %1725 = vmatprep.subr.mxu0 0.0
    %1726 = vmatpush1.msra.mxu0 0.0
    %1727 = vmatprep.subr.mxu0 0.0
    %1728 = vmatpush1.msra.mxu0 0.0
    %1729 = vmatprep.subr.mxu0 0.0
    %1730 = vmatpush1.msra.mxu0 0.0
    %1731 = vmatprep.subr.mxu0 0.0
    %1732 = vmatpush1.msra.mxu0 0.0
    %1733 = vmatprep.subr.mxu0 0.0
    %1734 = vmatpush1.msra.mxu0 0.0
    %1735 = vmatprep.subr.mxu0 0.0
    %1736 = vmatpush1.msra.mxu0 0.0
    %1737 = vmatprep.subr.mxu0 0.0
    %1738 = vmatpush1.msra.mxu0 0.0
    %1739 = vmatprep.subr.mxu0 0.0
    %1740 = vmatpush1.msra.mxu0 0.0
    %1741 = vmatprep.subr.mxu0 0.0
    %1742 = vmatpush1.msra.mxu0 0.0
    %1743 = vmatprep.subr.mxu0 0.0
    %1744 = vmatpush1.msra.mxu0 0.0
    %1745 = vmatprep.subr.mxu0 0.0
    %1746 = vmatpush1.msra.mxu0 0.0
    %1747 = vmatprep.subr.mxu0 0.0
    %1748 = vmatpush1.msra.mxu0 0.0
    %1749 = vmatprep.subr.mxu0 0.0
    %1750 = vmatpush1.msra.mxu0 0.0
    %1751 = vmatprep.subr.mxu0 0.0
    %1752 = vmatpush1.msra.mxu0 0.0
    %1753 = vmatprep.subr.mxu0 0.0
    %1754 = vmatpush1.msra.mxu0 0.0
    %1755 = vmatprep.subr.mxu0 0.0
    %1756 = vmatpush1.msra.mxu0 0.0
    %1757 = vmatprep.subr.mxu0 0.0
    %1758 = vmatpush1.msra.mxu0 0.0
    %1759 = vmatprep.subr.mxu0 0.0
    %1760 = vmatpush1.msra.mxu0 0.0
    %1761 = vmatprep.subr.mxu0 0.0
    %1762 = vmatpush1.msra.mxu0 0.0
    %1763 = vmatprep.subr.mxu0 0.0
    %1764 = vmatpush1.msra.mxu0 0.0
    %1765 = vmatprep.subr.mxu0 0.0
    %1766 = vmatpush1.msra.mxu0 0.0
    %1767 = vmatprep.subr.mxu0 0.0
    %1768 = vmatpush1.msra.mxu0 0.0
    %1769 = vmatprep.subr.mxu0 0.0
    %1770 = vmatpush1.msra.mxu0 0.0
    %1771 = vmatprep.subr.mxu0 0.0
    %1772 = vmatpush1.msra.mxu0 0.0
    %1773 = vmatprep.subr.mxu0 0.0
    %1774 = vmatpush1.msra.mxu0 0.0
    %1775 = vmatprep.subr.mxu0 0.0
    %1776 = vmatpush1.msra.mxu0 0.0
    %1777 = vmatprep.subr.mxu0 0.0
    %1778 = vmatpush1.msra.mxu0 0.0
    %1779 = vmatprep.subr.mxu0 0.0
    %1780 = vmatpush1.msra.mxu0 0.0
    %1781 = vmatprep.subr.mxu0 0.0
    %1782 = vmatpush1.msra.mxu0 0.0
    %1783 = vmatprep.subr.mxu0 0.0
    %1784 = vmatpush1.msra.mxu0 0.0
    %1785 = vmatprep.subr.mxu0 0.0
    %1786 = vmatpush1.msra.mxu0 0.0
    %1787 = vmatprep.mubr.f32.mxu0 0.0
    %v1788 = vand.u32 %v858, 4294901760
    %1789 = vmatmul.mubr.f32.gmra.mrb[0].mxu0 %v1788
    %v1790 = vpop.f32.mrb[0].mxu0
    %v1791 = vadd.f32 %v1717, %v1790
    %v1792 = vpop.f32.mrb[0].mxu0
    %v1793 = vadd.f32 %v1719, %v1792
    %1794 = vdwg.mxu0
    %v1795 = vadd.f32 %v1791, %v1793
    %1796 = vadd.xlane.f32.xlu0 %v1795
    %v1797 = vpop.xlane.xlu0 %1796
    %v1798 = vmul.f32 %v1327, %v1327
    %v1799 = vsub.f32 %v1797, %v1798
    %v1800 = vld [vmem:[%s8] sm:$0xff]
    %v1801 = vadd.f32 %v1799, 1e-05
    %v1802 = vrsqrt.pop %v1801
    %v1803 = vmul.f32 %v1800, %v1802
    %v1804 = vld [vmem:[%s4] sm:$0xff]
    %v1805 = vsub.f32 %v852, %v1327
    %v1806 = vsub.f32 %v854, %v1327
    %1808 = vset.pattern.permute.xlu0 0
    %1809 = vperm.xlu0 %1808, %v1803
    %v1810 = vpop.permute.xlu0 %1809
    %v1812 = vmul.f32 %v1805, %v1810
    %v1813 = vmul.f32 %v1806, %v1810
    %v1814 = vld [vmem:[%s7] sm:$0xff]
    %1816 = vset.pattern.permute.xlu0 0
    %1817 = vperm.xlu0 %1816, %v1814
    %v1818 = vpop.permute.xlu0 %1817
    %v1821 = vsel %vm856, %v1804, 0
    %v1823 = vand.u32 %v1813, 4294901760
    %1824 = vmatprep.subr.mxu0 %v1823
    %v1825 = vand.u32 %v1812, 4294901760
    %1826 = vmatpush1.msra.mxu0 %v1825
    %1827 = vmatprep.subr.mxu0 0.0
    %1828 = vmatpush1.msra.mxu0 0.0
    %1829 = vmatprep.subr.mxu0 0.0
    %1830 = vmatpush1.msra.mxu0 0.0
    %1831 = vmatprep.subr.mxu0 0.0
    %1832 = vmatpush1.msra.mxu0 0.0
    %1833 = vmatprep.subr.mxu0 0.0
    %1834 = vmatpush1.msra.mxu0 0.0
    %1835 = vmatprep.subr.mxu0 0.0
    %1836 = vmatpush1.msra.mxu0 0.0
    %1837 = vmatprep.subr.mxu0 0.0
    %1838 = vmatpush1.msra.mxu0 0.0
    %1839 = vmatprep.subr.mxu0 0.0
    %1840 = vmatpush1.msra.mxu0 0.0
    %1841 = vmatprep.subr.mxu0 0.0
    %1842 = vmatpush1.msra.mxu0 0.0
    %1843 = vmatprep.subr.mxu0 0.0
    %1844 = vmatpush1.msra.mxu0 0.0
    %1845 = vmatprep.subr.mxu0 0.0
    %1846 = vmatpush1.msra.mxu0 0.0
    %1847 = vmatprep.subr.mxu0 0.0
    %1848 = vmatpush1.msra.mxu0 0.0
    %1849 = vmatprep.subr.mxu0 0.0
    %1850 = vmatpush1.msra.mxu0 0.0
    %1851 = vmatprep.subr.mxu0 0.0
    %1852 = vmatpush1.msra.mxu0 0.0
    %1853 = vmatprep.subr.mxu0 0.0
    %1854 = vmatpush1.msra.mxu0 0.0
    %1855 = vmatprep.subr.mxu0 0.0
    %1856 = vmatpush1.msra.mxu0 0.0
    %1857 = vmatprep.subr.mxu0 0.0
    %1858 = vmatpush1.msra.mxu0 0.0
    %1859 = vmatprep.subr.mxu0 0.0
    %1860 = vmatpush1.msra.mxu0 0.0
    %1861 = vmatprep.subr.mxu0 0.0
    %1862 = vmatpush1.msra.mxu0 0.0
    %1863 = vmatprep.subr.mxu0 0.0
    %1864 = vmatpush1.msra.mxu0 0.0
    %1865 = vmatprep.subr.mxu0 0.0
    %1866 = vmatpush1.msra.mxu0 0.0
    %1867 = vmatprep.subr.mxu0 0.0
    %1868 = vmatpush1.msra.mxu0 0.0
    %1869 = vmatprep.subr.mxu0 0.0
    %1870 = vmatpush1.msra.mxu0 0.0
    %1871 = vmatprep.subr.mxu0 0.0
    %1872 = vmatpush1.msra.mxu0 0.0
    %1873 = vmatprep.subr.mxu0 0.0
    %1874 = vmatpush1.msra.mxu0 0.0
    %1875 = vmatprep.subr.mxu0 0.0
    %1876 = vmatpush1.msra.mxu0 0.0
    %1877 = vmatprep.subr.mxu0 0.0
    %1878 = vmatpush1.msra.mxu0 0.0
    %1879 = vmatprep.subr.mxu0 0.0
    %1880 = vmatpush1.msra.mxu0 0.0
    %1881 = vmatprep.subr.mxu0 0.0
    %1882 = vmatpush1.msra.mxu0 0.0
    %1883 = vmatprep.subr.mxu0 0.0
    %1884 = vmatpush1.msra.mxu0 0.0
    %1885 = vmatprep.subr.mxu0 0.0
    %1886 = vmatpush1.msra.mxu0 0.0
    %1887 = vmatprep.subr.mxu0 0.0
    %1888 = vmatpush1.msra.mxu0 0.0
    %1889 = vmatprep.mubr.f32.mxu0 0.0
    %v1890 = vand.u32 %v1821, 4294901760
    %v1891 = vsub.f32 %v1821, %v1890
    %v1892 = vand.u32 %v1891, 4294901760
    %v1893 = vsub.f32 %v1891, %v1892
    %v1894 = vand.u32 %v1893, 4294901760
    %1895 = vmatmul.mubr.f32.gmra.mrb[0].mxu0 %v1894
    %v1896 = vpop.f32.mrb[0].mxu0
    %v1897 = vadd.f32 %v1818, %v1896
    %v1898 = vpop.f32.mrb[0].mxu0
    %v1899 = vadd.f32 %v1818, %v1898
    %1900 = vdwg.mxu0
    %v1901 = vand.u32 %v1813, 4294901760
    %v1902 = vsub.f32 %v1813, %v1901
    %v1903 = vand.u32 %v1902, 4294901760
    %v1904 = vsub.f32 %v1902, %v1903
    %v1905 = vand.u32 %v1904, 4294901760
    %1906 = vmatprep.subr.mxu0 %v1905
    %v1907 = vand.u32 %v1812, 4294901760
    %v1908 = vsub.f32 %v1812, %v1907
    %v1909 = vand.u32 %v1908, 4294901760
    %v1910 = vsub.f32 %v1908, %v1909
    %v1911 = vand.u32 %v1910, 4294901760
    %1912 = vmatpush1.msra.mxu0 %v1911
    %1913 = vmatprep.subr.mxu0 0.0
    %1914 = vmatpush1.msra.mxu0 0.0
    %1915 = vmatprep.subr.mxu0 0.0
    %1916 = vmatpush1.msra.mxu0 0.0
    %1917 = vmatprep.subr.mxu0 0.0
    %1918 = vmatpush1.msra.mxu0 0.0
    %1919 = vmatprep.subr.mxu0 0.0
    %1920 = vmatpush1.msra.mxu0 0.0
    %1921 = vmatprep.subr.mxu0 0.0
    %1922 = vmatpush1.msra.mxu0 0.0
    %1923 = vmatprep.subr.mxu0 0.0
    %1924 = vmatpush1.msra.mxu0 0.0
    %1925 = vmatprep.subr.mxu0 0.0
    %1926 = vmatpush1.msra.mxu0 0.0
    %1927 = vmatprep.subr.mxu0 0.0
    %1928 = vmatpush1.msra.mxu0 0.0
    %1929 = vmatprep.subr.mxu0 0.0
    %1930 = vmatpush1.msra.mxu0 0.0
    %1931 = vmatprep.subr.mxu0 0.0
    %1932 = vmatpush1.msra.mxu0 0.0
    %1933 = vmatprep.subr.mxu0 0.0
    %1934 = vmatpush1.msra.mxu0 0.0
    %1935 = vmatprep.subr.mxu0 0.0
    %1936 = vmatpush1.msra.mxu0 0.0
    %1937 = vmatprep.subr.mxu0 0.0
    %1938 = vmatpush1.msra.mxu0 0.0
    %1939 = vmatprep.subr.mxu0 0.0
    %1940 = vmatpush1.msra.mxu0 0.0
    %1941 = vmatprep.subr.mxu0 0.0
    %1942 = vmatpush1.msra.mxu0 0.0
    %1943 = vmatprep.subr.mxu0 0.0
    %1944 = vmatpush1.msra.mxu0 0.0
    %1945 = vmatprep.subr.mxu0 0.0
    %1946 = vmatpush1.msra.mxu0 0.0
    %1947 = vmatprep.subr.mxu0 0.0
    %1948 = vmatpush1.msra.mxu0 0.0
    %1949 = vmatprep.subr.mxu0 0.0
    %1950 = vmatpush1.msra.mxu0 0.0
    %1951 = vmatprep.subr.mxu0 0.0
    %1952 = vmatpush1.msra.mxu0 0.0
    %1953 = vmatprep.subr.mxu0 0.0
    %1954 = vmatpush1.msra.mxu0 0.0
    %1955 = vmatprep.subr.mxu0 0.0
    %1956 = vmatpush1.msra.mxu0 0.0
    %1957 = vmatprep.subr.mxu0 0.0
    %1958 = vmatpush1.msra.mxu0 0.0
    %1959 = vmatprep.subr.mxu0 0.0
    %1960 = vmatpush1.msra.mxu0 0.0
    %1961 = vmatprep.subr.mxu0 0.0
    %1962 = vmatpush1.msra.mxu0 0.0
    %1963 = vmatprep.subr.mxu0 0.0
    %1964 = vmatpush1.msra.mxu0 0.0
    %1965 = vmatprep.subr.mxu0 0.0
    %1966 = vmatpush1.msra.mxu0 0.0
    %1967 = vmatprep.subr.mxu0 0.0
    %1968 = vmatpush1.msra.mxu0 0.0
    %1969 = vmatprep.subr.mxu0 0.0
    %1970 = vmatpush1.msra.mxu0 0.0
    %1971 = vmatprep.subr.mxu0 0.0
    %1972 = vmatpush1.msra.mxu0 0.0
    %1973 = vmatprep.subr.mxu0 0.0
    %1974 = vmatpush1.msra.mxu0 0.0
    %1975 = vmatprep.mubr.f32.mxu0 0.0
    %v1976 = vand.u32 %v1821, 4294901760
    %1977 = vmatmul.mubr.f32.gmra.mrb[0].mxu0 %v1976
    %v1978 = vpop.f32.mrb[0].mxu0
    %v1979 = vadd.f32 %v1897, %v1978
    %v1980 = vpop.f32.mrb[0].mxu0
    %v1981 = vadd.f32 %v1899, %v1980
    %1982 = vdwg.mxu0
    %v1983 = vand.u32 %v1813, 4294901760
    %v1984 = vsub.f32 %v1813, %v1983
    %1985 = vmatprep.subr.mxu0 %v1984
    %v1986 = vand.u32 %v1812, 4294901760
    %v1987 = vsub.f32 %v1812, %v1986
    %1988 = vmatpush1.msra.mxu0 %v1987
    %1989 = vmatprep.subr.mxu0 0.0
    %1990 = vmatpush1.msra.mxu0 0.0
    %1991 = vmatprep.subr.mxu0 0.0
    %1992 = vmatpush1.msra.mxu0 0.0
    %1993 = vmatprep.subr.mxu0 0.0
    %1994 = vmatpush1.msra.mxu0 0.0
    %1995 = vmatprep.subr.mxu0 0.0
    %1996 = vmatpush1.msra.mxu0 0.0
    %1997 = vmatprep.subr.mxu0 0.0
    %1998 = vmatpush1.msra.mxu0 0.0
    %1999 = vmatprep.subr.mxu0 0.0
    %2000 = vmatpush1.msra.mxu0 0.0
    %2001 = vmatprep.subr.mxu0 0.0
    %2002 = vmatpush1.msra.mxu0 0.0
    %2003 = vmatprep.subr.mxu0 0.0
    %2004 = vmatpush1.msra.mxu0 0.0
    %2005 = vmatprep.subr.mxu0 0.0
    %2006 = vmatpush1.msra.mxu0 0.0
    %2007 = vmatprep.subr.mxu0 0.0
    %2008 = vmatpush1.msra.mxu0 0.0
    %2009 = vmatprep.subr.mxu0 0.0
    %2010 = vmatpush1.msra.mxu0 0.0
    %2011 = vmatprep.subr.mxu0 0.0
    %2012 = vmatpush1.msra.mxu0 0.0
    %2013 = vmatprep.subr.mxu0 0.0
    %2014 = vmatpush1.msra.mxu0 0.0
    %2015 = vmatprep.subr.mxu0 0.0
    %2016 = vmatpush1.msra.mxu0 0.0
    %2017 = vmatprep.subr.mxu0 0.0
    %2018 = vmatpush1.msra.mxu0 0.0
    %2019 = vmatprep.subr.mxu0 0.0
    %2020 = vmatpush1.msra.mxu0 0.0
    %2021 = vmatprep.subr.mxu0 0.0
    %2022 = vmatpush1.msra.mxu0 0.0
    %2023 = vmatprep.subr.mxu0 0.0
    %2024 = vmatpush1.msra.mxu0 0.0
    %2025 = vmatprep.subr.mxu0 0.0
    %2026 = vmatpush1.msra.mxu0 0.0
    %2027 = vmatprep.subr.mxu0 0.0
    %2028 = vmatpush1.msra.mxu0 0.0
    %2029 = vmatprep.subr.mxu0 0.0
    %2030 = vmatpush1.msra.mxu0 0.0
    %2031 = vmatprep.subr.mxu0 0.0
    %2032 = vmatpush1.msra.mxu0 0.0
    %2033 = vmatprep.subr.mxu0 0.0
    %2034 = vmatpush1.msra.mxu0 0.0
    %2035 = vmatprep.subr.mxu0 0.0
    %2036 = vmatpush1.msra.mxu0 0.0
    %2037 = vmatprep.subr.mxu0 0.0
    %2038 = vmatpush1.msra.mxu0 0.0
    %2039 = vmatprep.subr.mxu0 0.0
    %2040 = vmatpush1.msra.mxu0 0.0
    %2041 = vmatprep.subr.mxu0 0.0
    %2042 = vmatpush1.msra.mxu0 0.0
    %2043 = vmatprep.subr.mxu0 0.0
    %2044 = vmatpush1.msra.mxu0 0.0
    %2045 = vmatprep.subr.mxu0 0.0
    %2046 = vmatpush1.msra.mxu0 0.0
    %2047 = vmatprep.subr.mxu0 0.0
    %2048 = vmatpush1.msra.mxu0 0.0
    %2049 = vmatprep.subr.mxu0 0.0
    %2050 = vmatpush1.msra.mxu0 0.0
    %2051 = vmatprep.mubr.f32.mxu0 0.0
    %v2052 = vand.u32 %v1821, 4294901760
    %v2053 = vsub.f32 %v1821, %v2052
    %2054 = vmatmul.mubr.f32.gmra.mrb[0].mxu0 %v2053
    %v2055 = vpop.f32.mrb[0].mxu0
    %v2056 = vadd.f32 %v1979, %v2055
    %v2057 = vpop.f32.mrb[0].mxu0
    %v2058 = vadd.f32 %v1981, %v2057
    %2059 = vdwg.mxu0
    %v2060 = vand.u32 %v1813, 4294901760
    %2061 = vmatprep.subr.mxu0 %v2060
    %v2062 = vand.u32 %v1812, 4294901760
    %2063 = vmatpush1.msra.mxu0 %v2062
    %2064 = vmatprep.subr.mxu0 0.0
    %2065 = vmatpush1.msra.mxu0 0.0
    %2066 = vmatprep.subr.mxu0 0.0
    %2067 = vmatpush1.msra.mxu0 0.0
    %2068 = vmatprep.subr.mxu0 0.0
    %2069 = vmatpush1.msra.mxu0 0.0
    %2070 = vmatprep.subr.mxu0 0.0
    %2071 = vmatpush1.msra.mxu0 0.0
    %2072 = vmatprep.subr.mxu0 0.0
    %2073 = vmatpush1.msra.mxu0 0.0
    %2074 = vmatprep.subr.mxu0 0.0
    %2075 = vmatpush1.msra.mxu0 0.0
    %2076 = vmatprep.subr.mxu0 0.0
    %2077 = vmatpush1.msra.mxu0 0.0
    %2078 = vmatprep.subr.mxu0 0.0
    %2079 = vmatpush1.msra.mxu0 0.0
    %2080 = vmatprep.subr.mxu0 0.0
    %2081 = vmatpush1.msra.mxu0 0.0
    %2082 = vmatprep.subr.mxu0 0.0
    %2083 = vmatpush1.msra.mxu0 0.0
    %2084 = vmatprep.subr.mxu0 0.0
    %2085 = vmatpush1.msra.mxu0 0.0
    %2086 = vmatprep.subr.mxu0 0.0
    %2087 = vmatpush1.msra.mxu0 0.0
    %2088 = vmatprep.subr.mxu0 0.0
    %2089 = vmatpush1.msra.mxu0 0.0
    %2090 = vmatprep.subr.mxu0 0.0
    %2091 = vmatpush1.msra.mxu0 0.0
    %2092 = vmatprep.subr.mxu0 0.0
    %2093 = vmatpush1.msra.mxu0 0.0
    %2094 = vmatprep.subr.mxu0 0.0
    %2095 = vmatpush1.msra.mxu0 0.0
    %2096 = vmatprep.subr.mxu0 0.0
    %2097 = vmatpush1.msra.mxu0 0.0
    %2098 = vmatprep.subr.mxu0 0.0
    %2099 = vmatpush1.msra.mxu0 0.0
    %2100 = vmatprep.subr.mxu0 0.0
    %2101 = vmatpush1.msra.mxu0 0.0
    %2102 = vmatprep.subr.mxu0 0.0
    %2103 = vmatpush1.msra.mxu0 0.0
    %2104 = vmatprep.subr.mxu0 0.0
    %2105 = vmatpush1.msra.mxu0 0.0
    %2106 = vmatprep.subr.mxu0 0.0
    %2107 = vmatpush1.msra.mxu0 0.0
    %2108 = vmatprep.subr.mxu0 0.0
    %2109 = vmatpush1.msra.mxu0 0.0
    %2110 = vmatprep.subr.mxu0 0.0
    %2111 = vmatpush1.msra.mxu0 0.0
    %2112 = vmatprep.subr.mxu0 0.0
    %2113 = vmatpush1.msra.mxu0 0.0
    %2114 = vmatprep.subr.mxu0 0.0
    %2115 = vmatpush1.msra.mxu0 0.0
    %2116 = vmatprep.subr.mxu0 0.0
    %2117 = vmatpush1.msra.mxu0 0.0
    %2118 = vmatprep.subr.mxu0 0.0
    %2119 = vmatpush1.msra.mxu0 0.0
    %2120 = vmatprep.subr.mxu0 0.0
    %2121 = vmatpush1.msra.mxu0 0.0
    %2122 = vmatprep.subr.mxu0 0.0
    %2123 = vmatpush1.msra.mxu0 0.0
    %2124 = vmatprep.subr.mxu0 0.0
    %2125 = vmatpush1.msra.mxu0 0.0
    %2126 = vmatprep.mubr.f32.mxu0 0.0
    %v2127 = vand.u32 %v1821, 4294901760
    %v2128 = vsub.f32 %v1821, %v2127
    %v2129 = vand.u32 %v2128, 4294901760
    %2130 = vmatmul.mubr.f32.gmra.mrb[0].mxu0 %v2129
    %v2131 = vpop.f32.mrb[0].mxu0
    %v2132 = vadd.f32 %v2056, %v2131
    %v2133 = vpop.f32.mrb[0].mxu0
    %v2134 = vadd.f32 %v2058, %v2133
    %2135 = vdwg.mxu0
    %v2136 = vand.u32 %v1813, 4294901760
    %v2137 = vsub.f32 %v1813, %v2136
    %v2138 = vand.u32 %v2137, 4294901760
    %2139 = vmatprep.subr.mxu0 %v2138
    %v2140 = vand.u32 %v1812, 4294901760
    %v2141 = vsub.f32 %v1812, %v2140
    %v2142 = vand.u32 %v2141, 4294901760
    %2143 = vmatpush1.msra.mxu0 %v2142
    %2144 = vmatprep.subr.mxu0 0.0
    %2145 = vmatpush1.msra.mxu0 0.0
    %2146 = vmatprep.subr.mxu0 0.0
    %2147 = vmatpush1.msra.mxu0 0.0
    %2148 = vmatprep.subr.mxu0 0.0
    %2149 = vmatpush1.msra.mxu0 0.0
    %2150 = vmatprep.subr.mxu0 0.0
    %2151 = vmatpush1.msra.mxu0 0.0
    %2152 = vmatprep.subr.mxu0 0.0
    %2153 = vmatpush1.msra.mxu0 0.0
    %2154 = vmatprep.subr.mxu0 0.0
    %2155 = vmatpush1.msra.mxu0 0.0
    %2156 = vmatprep.subr.mxu0 0.0
    %2157 = vmatpush1.msra.mxu0 0.0
    %2158 = vmatprep.subr.mxu0 0.0
    %2159 = vmatpush1.msra.mxu0 0.0
    %2160 = vmatprep.subr.mxu0 0.0
    %2161 = vmatpush1.msra.mxu0 0.0
    %2162 = vmatprep.subr.mxu0 0.0
    %2163 = vmatpush1.msra.mxu0 0.0
    %2164 = vmatprep.subr.mxu0 0.0
    %2165 = vmatpush1.msra.mxu0 0.0
    %2166 = vmatprep.subr.mxu0 0.0
    %2167 = vmatpush1.msra.mxu0 0.0
    %2168 = vmatprep.subr.mxu0 0.0
    %2169 = vmatpush1.msra.mxu0 0.0
    %2170 = vmatprep.subr.mxu0 0.0
    %2171 = vmatpush1.msra.mxu0 0.0
    %2172 = vmatprep.subr.mxu0 0.0
    %2173 = vmatpush1.msra.mxu0 0.0
    %2174 = vmatprep.subr.mxu0 0.0
    %2175 = vmatpush1.msra.mxu0 0.0
    %2176 = vmatprep.subr.mxu0 0.0
    %2177 = vmatpush1.msra.mxu0 0.0
    %2178 = vmatprep.subr.mxu0 0.0
    %2179 = vmatpush1.msra.mxu0 0.0
    %2180 = vmatprep.subr.mxu0 0.0
    %2181 = vmatpush1.msra.mxu0 0.0
    %2182 = vmatprep.subr.mxu0 0.0
    %2183 = vmatpush1.msra.mxu0 0.0
    %2184 = vmatprep.subr.mxu0 0.0
    %2185 = vmatpush1.msra.mxu0 0.0
    %2186 = vmatprep.subr.mxu0 0.0
    %2187 = vmatpush1.msra.mxu0 0.0
    %2188 = vmatprep.subr.mxu0 0.0
    %2189 = vmatpush1.msra.mxu0 0.0
    %2190 = vmatprep.subr.mxu0 0.0
    %2191 = vmatpush1.msra.mxu0 0.0
    %2192 = vmatprep.subr.mxu0 0.0
    %2193 = vmatpush1.msra.mxu0 0.0
    %2194 = vmatprep.subr.mxu0 0.0
    %2195 = vmatpush1.msra.mxu0 0.0
    %2196 = vmatprep.subr.mxu0 0.0
    %2197 = vmatpush1.msra.mxu0 0.0
    %2198 = vmatprep.subr.mxu0 0.0
    %2199 = vmatpush1.msra.mxu0 0.0
    %2200 = vmatprep.subr.mxu0 0.0
    %2201 = vmatpush1.msra.mxu0 0.0
    %2202 = vmatprep.subr.mxu0 0.0
    %2203 = vmatpush1.msra.mxu0 0.0
    %2204 = vmatprep.subr.mxu0 0.0
    %2205 = vmatpush1.msra.mxu0 0.0
    %2206 = vmatprep.mubr.f32.mxu0 0.0
    %v2207 = vand.u32 %v1821, 4294901760
    %2208 = vmatmul.mubr.f32.gmra.mrb[0].mxu0 %v2207
    %v2209 = vpop.f32.mrb[0].mxu0
    %v2210 = vadd.f32 %v2132, %v2209
    %v2211 = vpop.f32.mrb[0].mxu0
    %v2212 = vadd.f32 %v2134, %v2211
    %2213 = vdwg.mxu0
    %v2214 = vand.u32 %v1813, 4294901760
    %2215 = vmatprep.subr.mxu0 %v2214
    %v2216 = vand.u32 %v1812, 4294901760
    %2217 = vmatpush1.msra.mxu0 %v2216
    %2218 = vmatprep.subr.mxu0 0.0
    %2219 = vmatpush1.msra.mxu0 0.0
    %2220 = vmatprep.subr.mxu0 0.0
    %2221 = vmatpush1.msra.mxu0 0.0
    %2222 = vmatprep.subr.mxu0 0.0
    %2223 = vmatpush1.msra.mxu0 0.0
    %2224 = vmatprep.subr.mxu0 0.0
    %2225 = vmatpush1.msra.mxu0 0.0
    %2226 = vmatprep.subr.mxu0 0.0
    %2227 = vmatpush1.msra.mxu0 0.0
    %2228 = vmatprep.subr.mxu0 0.0
    %2229 = vmatpush1.msra.mxu0 0.0
    %2230 = vmatprep.subr.mxu0 0.0
    %2231 = vmatpush1.msra.mxu0 0.0
    %2232 = vmatprep.subr.mxu0 0.0
    %2233 = vmatpush1.msra.mxu0 0.0
    %2234 = vmatprep.subr.mxu0 0.0
    %2235 = vmatpush1.msra.mxu0 0.0
    %2236 = vmatprep.subr.mxu0 0.0
    %2237 = vmatpush1.msra.mxu0 0.0
    %2238 = vmatprep.subr.mxu0 0.0
    %2239 = vmatpush1.msra.mxu0 0.0
    %2240 = vmatprep.subr.mxu0 0.0
    %2241 = vmatpush1.msra.mxu0 0.0
    %2242 = vmatprep.subr.mxu0 0.0
    %2243 = vmatpush1.msra.mxu0 0.0
    %2244 = vmatprep.subr.mxu0 0.0
    %2245 = vmatpush1.msra.mxu0 0.0
    %2246 = vmatprep.subr.mxu0 0.0
    %2247 = vmatpush1.msra.mxu0 0.0
    %2248 = vmatprep.subr.mxu0 0.0
    %2249 = vmatpush1.msra.mxu0 0.0
    %2250 = vmatprep.subr.mxu0 0.0
    %2251 = vmatpush1.msra.mxu0 0.0
    %2252 = vmatprep.subr.mxu0 0.0
    %2253 = vmatpush1.msra.mxu0 0.0
    %2254 = vmatprep.subr.mxu0 0.0
    %2255 = vmatpush1.msra.mxu0 0.0
    %2256 = vmatprep.subr.mxu0 0.0
    %2257 = vmatpush1.msra.mxu0 0.0
    %2258 = vmatprep.subr.mxu0 0.0
    %2259 = vmatpush1.msra.mxu0 0.0
    %2260 = vmatprep.subr.mxu0 0.0
    %2261 = vmatpush1.msra.mxu0 0.0
    %2262 = vmatprep.subr.mxu0 0.0
    %2263 = vmatpush1.msra.mxu0 0.0
    %2264 = vmatprep.subr.mxu0 0.0
    %2265 = vmatpush1.msra.mxu0 0.0
    %2266 = vmatprep.subr.mxu0 0.0
    %2267 = vmatpush1.msra.mxu0 0.0
    %2268 = vmatprep.subr.mxu0 0.0
    %2269 = vmatpush1.msra.mxu0 0.0
    %2270 = vmatprep.subr.mxu0 0.0
    %2271 = vmatpush1.msra.mxu0 0.0
    %2272 = vmatprep.subr.mxu0 0.0
    %2273 = vmatpush1.msra.mxu0 0.0
    %2274 = vmatprep.subr.mxu0 0.0
    %2275 = vmatpush1.msra.mxu0 0.0
    %2276 = vmatprep.subr.mxu0 0.0
    %2277 = vmatpush1.msra.mxu0 0.0
    %2278 = vmatprep.subr.mxu0 0.0
    %2279 = vmatpush1.msra.mxu0 0.0
    %2280 = vmatprep.mubr.f32.mxu0 0.0
    %v2281 = vand.u32 %v1821, 4294901760
    %2282 = vmatmul.mubr.f32.gmra.mrb[0].mxu0 %v2281
    %v2283 = vpop.f32.mrb[0].mxu0
    %v2284 = vadd.f32 %v2210, %v2283
    %v2285 = vpop.f32.mrb[0].mxu0
    %v2286 = vadd.f32 %v2212, %v2285
    %2287 = vdwg.mxu0
    %v2288 = vsub.f32 0.0, %v2284
    %v2289 = vsub.f32 0.0, %v2286
    %v2290 = vmul.f32 %v2288, 1.442695
    %v2291 = vpow.pop %v2290
    %v2292 = vmul.f32 %v2289, 1.442695
    %v2293 = vpow.pop %v2292
    %v2294 = vadd.f32 %v2291, 1.0
    %v2295 = vadd.f32 %v2293, 1.0
    %v2296 = vrcp.pop %v2294
    %v2297 = vrcp.pop %v2295
    %v2298 = vld [vmem:[%s1] sm:$0xff]
    %v2299 = vld [vmem:[#allocation3] sm:$0xff]
    %v2300 = vld [vmem:[#allocation3 + $0x8] sm:$0xff]
    %v2301 = vld [vmem:[#allocation3 + $0x10] sm:$0xff]
    %v2302 = vld [vmem:[#allocation3 + $0x18] sm:$0xff]
    %v2303 = vld [vmem:[#allocation3 + $0x20] sm:$0xff]
    %v2304 = vld [vmem:[#allocation3 + $0x28] sm:$0xff]
    %v2305 = vld [vmem:[#allocation3 + $0x30] sm:$0xff]
    %v2306 = vld [vmem:[#allocation3 + $0x38] sm:$0xff]
    %v2307 = vld [vmem:[#allocation3 + $0x40] sm:$0xff]
    %v2308 = vld [vmem:[#allocation3 + $0x48] sm:$0xff]
    %v2309 = vld [vmem:[#allocation3 + $0x50] sm:$0xff]
    %v2310 = vld [vmem:[#allocation3 + $0x58] sm:$0xff]
    %v2311 = vld [vmem:[#allocation3 + $0x60] sm:$0xff]
    %v2312 = vld [vmem:[#allocation3 + $0x68] sm:$0xff]
    %v2313 = vld [vmem:[#allocation3 + $0x70] sm:$0xff]
    %v2314 = vld [vmem:[#allocation3 + $0x78] sm:$0xff]
    %vm2315 = vcmask 523264
    %v2317 = vsel %vm2315, %v2298, 0
    %v2319 = vand.u32 %v2300, 4294901760
    %2320 = vmatprep.subr.mxu0 %v2319
    %v2321 = vand.u32 %v2299, 4294901760
    %2322 = vmatpush1.msra.mxu0 %v2321
    %v2323 = vand.u32 %v2302, 4294901760
    %2324 = vmatprep.subr.mxu0 %v2323
    %v2325 = vand.u32 %v2301, 4294901760
    %2326 = vmatpush1.msra.mxu0 %v2325
    %v2327 = vand.u32 %v2304, 4294901760
    %2328 = vmatprep.subr.mxu0 %v2327
    %v2329 = vand.u32 %v2303, 4294901760
    %2330 = vmatpush1.msra.mxu0 %v2329
    %v2331 = vand.u32 %v2306, 4294901760
    %2332 = vmatprep.subr.mxu0 %v2331
    %v2333 = vand.u32 %v2305, 4294901760
    %2334 = vmatpush1.msra.mxu0 %v2333
    %v2335 = vand.u32 %v2308, 4294901760
    %2336 = vmatprep.subr.mxu0 %v2335
    %v2337 = vand.u32 %v2307, 4294901760
    %2338 = vmatpush1.msra.mxu0 %v2337
    %v2339 = vand.u32 %v2310, 4294901760
    %2340 = vmatprep.subr.mxu0 %v2339
    %v2341 = vand.u32 %v2309, 4294901760
    %2342 = vmatpush1.msra.mxu0 %v2341
    %v2343 = vand.u32 %v2312, 4294901760
    %2344 = vmatprep.subr.mxu0 %v2343
    %v2345 = vand.u32 %v2311, 4294901760
    %2346 = vmatpush1.msra.mxu0 %v2345
    %v2347 = vand.u32 %v2314, 4294901760
    %2348 = vmatprep.subr.mxu0 %v2347
    %v2349 = vand.u32 %v2313, 4294901760
    %2350 = vmatpush1.msra.mxu0 %v2349
    %2351 = vmatprep.subr.mxu0 0.0
    %2352 = vmatpush1.msra.mxu0 0.0
    %2353 = vmatprep.subr.mxu0 0.0
    %2354 = vmatpush1.msra.mxu0 0.0
    %2355 = vmatprep.subr.mxu0 0.0
    %2356 = vmatpush1.msra.mxu0 0.0
    %2357 = vmatprep.subr.mxu0 0.0
    %2358 = vmatpush1.msra.mxu0 0.0
    %2359 = vmatprep.subr.mxu0 0.0
    %2360 = vmatpush1.msra.mxu0 0.0
    %2361 = vmatprep.subr.mxu0 0.0
    %2362 = vmatpush1.msra.mxu0 0.0
    %2363 = vmatprep.subr.mxu0 0.0
    %2364 = vmatpush1.msra.mxu0 0.0
    %2365 = vmatprep.subr.mxu0 0.0
    %2366 = vmatpush1.msra.mxu0 0.0
    %2367 = vmatprep.subr.mxu0 0.0
    %2368 = vmatpush1.msra.mxu0 0.0
    %2369 = vmatprep.subr.mxu0 0.0
    %2370 = vmatpush1.msra.mxu0 0.0
    %2371 = vmatprep.subr.mxu0 0.0
    %2372 = vmatpush1.msra.mxu0 0.0
    %2373 = vmatprep.subr.mxu0 0.0
    %2374 = vmatpush1.msra.mxu0 0.0
    %2375 = vmatprep.subr.mxu0 0.0
    %2376 = vmatpush1.msra.mxu0 0.0
    %2377 = vmatprep.subr.mxu0 0.0
    %2378 = vmatpush1.msra.mxu0 0.0
    %2379 = vmatprep.subr.mxu0 0.0
    %2380 = vmatpush1.msra.mxu0 0.0
    %2381 = vmatprep.subr.mxu0 0.0
    %2382 = vmatpush1.msra.mxu0 0.0
    %2383 = vmatprep.subr.mxu0 0.0
    %2384 = vmatpush1.msra.mxu0 0.0
    %2385 = vmatprep.subr.mxu0 0.0
    %2386 = vmatpush1.msra.mxu0 0.0
    %2387 = vmatprep.subr.mxu0 0.0
    %2388 = vmatpush1.msra.mxu0 0.0
    %2389 = vmatprep.subr.mxu0 0.0
    %2390 = vmatpush1.msra.mxu0 0.0
    %2391 = vmatprep.subr.mxu0 0.0
    %2392 = vmatpush1.msra.mxu0 0.0
    %2393 = vmatprep.subr.mxu0 0.0
    %2394 = vmatpush1.msra.mxu0 0.0
    %2395 = vmatprep.subr.mxu0 0.0
    %2396 = vmatpush1.msra.mxu0 0.0
    %2397 = vmatprep.subr.mxu0 0.0
    %2398 = vmatpush1.msra.mxu0 0.0
    %2399 = vmatprep.mubr.f32.mxu0 0.0
    %v2400 = vand.u32 %v2317, 4294901760
    %v2401 = vsub.f32 %v2317, %v2400
    %v2402 = vand.u32 %v2401, 4294901760
    %v2403 = vsub.f32 %v2401, %v2402
    %v2404 = vand.u32 %v2403, 4294901760
    %2405 = vmatmul.mubr.f32.gmra.mrb[0].mxu0 %v2404
    %v2406 = vpop.f32.mrb[0].mxu0
    %v2407 = vadd.f32 0.0, %v2406
    %v2408 = vpop.f32.mrb[0].mxu0
    %v2409 = vadd.f32 0.0, %v2408
    %2410 = vdwg.mxu0
    %v2411 = vand.u32 %v2300, 4294901760
    %v2412 = vsub.f32 %v2300, %v2411
    %v2413 = vand.u32 %v2412, 4294901760
    %v2414 = vsub.f32 %v2412, %v2413
    %v2415 = vand.u32 %v2414, 4294901760
    %2416 = vmatprep.subr.mxu0 %v2415
    %v2417 = vand.u32 %v2299, 4294901760
    %v2418 = vsub.f32 %v2299, %v2417
    %v2419 = vand.u32 %v2418, 4294901760
    %v2420 = vsub.f32 %v2418, %v2419
    %v2421 = vand.u32 %v2420, 4294901760
    %2422 = vmatpush1.msra.mxu0 %v2421
    %v2423 = vand.u32 %v2302, 4294901760
    %v2424 = vsub.f32 %v2302, %v2423
    %v2425 = vand.u32 %v2424, 4294901760
    %v2426 = vsub.f32 %v2424, %v2425
    %v2427 = vand.u32 %v2426, 4294901760
    %2428 = vmatprep.subr.mxu0 %v2427
    %v2429 = vand.u32 %v2301, 4294901760
    %v2430 = vsub.f32 %v2301, %v2429
    %v2431 = vand.u32 %v2430, 4294901760
    %v2432 = vsub.f32 %v2430, %v2431
    %v2433 = vand.u32 %v2432, 4294901760
    %2434 = vmatpush1.msra.mxu0 %v2433
    %v2435 = vand.u32 %v2304, 4294901760
    %v2436 = vsub.f32 %v2304, %v2435
    %v2437 = vand.u32 %v2436, 4294901760
    %v2438 = vsub.f32 %v2436, %v2437
    %v2439 = vand.u32 %v2438, 4294901760
    %2440 = vmatprep.subr.mxu0 %v2439
    %v2441 = vand.u32 %v2303, 4294901760
    %v2442 = vsub.f32 %v2303, %v2441
    %v2443 = vand.u32 %v2442, 4294901760
    %v2444 = vsub.f32 %v2442, %v2443
    %v2445 = vand.u32 %v2444, 4294901760
    %2446 = vmatpush1.msra.mxu0 %v2445
    %v2447 = vand.u32 %v2306, 4294901760
    %v2448 = vsub.f32 %v2306, %v2447
    %v2449 = vand.u32 %v2448, 4294901760
    %v2450 = vsub.f32 %v2448, %v2449
    %v2451 = vand.u32 %v2450, 4294901760
    %2452 = vmatprep.subr.mxu0 %v2451
    %v2453 = vand.u32 %v2305, 4294901760
    %v2454 = vsub.f32 %v2305, %v2453
    %v2455 = vand.u32 %v2454, 4294901760
    %v2456 = vsub.f32 %v2454, %v2455
    %v2457 = vand.u32 %v2456, 4294901760
    %2458 = vmatpush1.msra.mxu0 %v2457
    %v2459 = vand.u32 %v2308, 4294901760
    %v2460 = vsub.f32 %v2308, %v2459
    %v2461 = vand.u32 %v2460, 4294901760
    %v2462 = vsub.f32 %v2460, %v2461
    %v2463 = vand.u32 %v2462, 4294901760
    %2464 = vmatprep.subr.mxu0 %v2463
    %v2465 = vand.u32 %v2307, 4294901760
    %v2466 = vsub.f32 %v2307, %v2465
    %v2467 = vand.u32 %v2466, 4294901760
    %v2468 = vsub.f32 %v2466, %v2467
    %v2469 = vand.u32 %v2468, 4294901760
    %2470 = vmatpush1.msra.mxu0 %v2469
    %v2471 = vand.u32 %v2310, 4294901760
    %v2472 = vsub.f32 %v2310, %v2471
    %v2473 = vand.u32 %v2472, 4294901760
    %v2474 = vsub.f32 %v2472, %v2473
    %v2475 = vand.u32 %v2474, 4294901760
    %2476 = vmatprep.subr.mxu0 %v2475
    %v2477 = vand.u32 %v2309, 4294901760
    %v2478 = vsub.f32 %v2309, %v2477
    %v2479 = vand.u32 %v2478, 4294901760
    %v2480 = vsub.f32 %v2478, %v2479
    %v2481 = vand.u32 %v2480, 4294901760
    %2482 = vmatpush1.msra.mxu0 %v2481
    %v2483 = vand.u32 %v2312, 4294901760
    %v2484 = vsub.f32 %v2312, %v2483
    %v2485 = vand.u32 %v2484, 4294901760
    %v2486 = vsub.f32 %v2484, %v2485
    %v2487 = vand.u32 %v2486, 4294901760
    %2488 = vmatprep.subr.mxu0 %v2487
    %v2489 = vand.u32 %v2311, 4294901760
    %v2490 = vsub.f32 %v2311, %v2489
    %v2491 = vand.u32 %v2490, 4294901760
    %v2492 = vsub.f32 %v2490, %v2491
    %v2493 = vand.u32 %v2492, 4294901760
    %2494 = vmatpush1.msra.mxu0 %v2493
    %v2495 = vand.u32 %v2314, 4294901760
    %v2496 = vsub.f32 %v2314, %v2495
    %v2497 = vand.u32 %v2496, 4294901760
    %v2498 = vsub.f32 %v2496, %v2497
    %v2499 = vand.u32 %v2498, 4294901760
    %2500 = vmatprep.subr.mxu0 %v2499
    %v2501 = vand.u32 %v2313, 4294901760
    %v2502 = vsub.f32 %v2313, %v2501
    %v2503 = vand.u32 %v2502, 4294901760
    %v2504 = vsub.f32 %v2502, %v2503
    %v2505 = vand.u32 %v2504, 4294901760
    %2506 = vmatpush1.msra.mxu0 %v2505
    %2507 = vmatprep.subr.mxu0 0.0
    %2508 = vmatpush1.msra.mxu0 0.0
    %2509 = vmatprep.subr.mxu0 0.0
    %2510 = vmatpush1.msra.mxu0 0.0
    %2511 = vmatprep.subr.mxu0 0.0
    %2512 = vmatpush1.msra.mxu0 0.0
    %2513 = vmatprep.subr.mxu0 0.0
    %2514 = vmatpush1.msra.mxu0 0.0
    %2515 = vmatprep.subr.mxu0 0.0
    %2516 = vmatpush1.msra.mxu0 0.0
    %2517 = vmatprep.subr.mxu0 0.0
    %2518 = vmatpush1.msra.mxu0 0.0
    %2519 = vmatprep.subr.mxu0 0.0
    %2520 = vmatpush1.msra.mxu0 0.0
    %2521 = vmatprep.subr.mxu0 0.0
    %2522 = vmatpush1.msra.mxu0 0.0
    %2523 = vmatprep.subr.mxu0 0.0
    %2524 = vmatpush1.msra.mxu0 0.0
    %2525 = vmatprep.subr.mxu0 0.0
    %2526 = vmatpush1.msra.mxu0 0.0
    %2527 = vmatprep.subr.mxu0 0.0
    %2528 = vmatpush1.msra.mxu0 0.0
    %2529 = vmatprep.subr.mxu0 0.0
    %2530 = vmatpush1.msra.mxu0 0.0
    %2531 = vmatprep.subr.mxu0 0.0
    %2532 = vmatpush1.msra.mxu0 0.0
    %2533 = vmatprep.subr.mxu0 0.0
    %2534 = vmatpush1.msra.mxu0 0.0
    %2535 = vmatprep.subr.mxu0 0.0
    %2536 = vmatpush1.msra.mxu0 0.0
    %2537 = vmatprep.subr.mxu0 0.0
    %2538 = vmatpush1.msra.mxu0 0.0
    %2539 = vmatprep.subr.mxu0 0.0
    %2540 = vmatpush1.msra.mxu0 0.0
    %2541 = vmatprep.subr.mxu0 0.0
    %2542 = vmatpush1.msra.mxu0 0.0
    %2543 = vmatprep.subr.mxu0 0.0
    %2544 = vmatpush1.msra.mxu0 0.0
    %2545 = vmatprep.subr.mxu0 0.0
    %2546 = vmatpush1.msra.mxu0 0.0
    %2547 = vmatprep.subr.mxu0 0.0
    %2548 = vmatpush1.msra.mxu0 0.0
    %2549 = vmatprep.subr.mxu0 0.0
    %2550 = vmatpush1.msra.mxu0 0.0
    %2551 = vmatprep.subr.mxu0 0.0
    %2552 = vmatpush1.msra.mxu0 0.0
    %2553 = vmatprep.subr.mxu0 0.0
    %2554 = vmatpush1.msra.mxu0 0.0
    %2555 = vmatprep.mubr.f32.mxu0 0.0
    %v2556 = vand.u32 %v2317, 4294901760
    %2557 = vmatmul.mubr.f32.gmra.mrb[0].mxu0 %v2556
    %v2558 = vpop.f32.mrb[0].mxu0
    %v2559 = vadd.f32 %v2407, %v2558
    %v2560 = vpop.f32.mrb[0].mxu0
    %v2561 = vadd.f32 %v2409, %v2560
    %2562 = vdwg.mxu0
    %v2563 = vand.u32 %v2300, 4294901760
    %v2564 = vsub.f32 %v2300, %v2563
    %2565 = vmatprep.subr.mxu0 %v2564
    %v2566 = vand.u32 %v2299, 4294901760
    %v2567 = vsub.f32 %v2299, %v2566
    %2568 = vmatpush1.msra.mxu0 %v2567
    %v2569 = vand.u32 %v2302, 4294901760
    %v2570 = vsub.f32 %v2302, %v2569
    %2571 = vmatprep.subr.mxu0 %v2570
    %v2572 = vand.u32 %v2301, 4294901760
    %v2573 = vsub.f32 %v2301, %v2572
    %2574 = vmatpush1.msra.mxu0 %v2573
    %v2575 = vand.u32 %v2304, 4294901760
    %v2576 = vsub.f32 %v2304, %v2575
    %2577 = vmatprep.subr.mxu0 %v2576
    %v2578 = vand.u32 %v2303, 4294901760
    %v2579 = vsub.f32 %v2303, %v2578
    %2580 = vmatpush1.msra.mxu0 %v2579
    %v2581 = vand.u32 %v2306, 4294901760
    %v2582 = vsub.f32 %v2306, %v2581
    %2583 = vmatprep.subr.mxu0 %v2582
    %v2584 = vand.u32 %v2305, 4294901760
    %v2585 = vsub.f32 %v2305, %v2584
    %2586 = vmatpush1.msra.mxu0 %v2585
    %v2587 = vand.u32 %v2308, 4294901760
    %v2588 = vsub.f32 %v2308, %v2587
    %2589 = vmatprep.subr.mxu0 %v2588
    %v2590 = vand.u32 %v2307, 4294901760
    %v2591 = vsub.f32 %v2307, %v2590
    %2592 = vmatpush1.msra.mxu0 %v2591
    %v2593 = vand.u32 %v2310, 4294901760
    %v2594 = vsub.f32 %v2310, %v2593
    %2595 = vmatprep.subr.mxu0 %v2594
    %v2596 = vand.u32 %v2309, 4294901760
    %v2597 = vsub.f32 %v2309, %v2596
    %2598 = vmatpush1.msra.mxu0 %v2597
    %v2599 = vand.u32 %v2312, 4294901760
    %v2600 = vsub.f32 %v2312, %v2599
    %2601 = vmatprep.subr.mxu0 %v2600
    %v2602 = vand.u32 %v2311, 4294901760
    %v2603 = vsub.f32 %v2311, %v2602
    %2604 = vmatpush1.msra.mxu0 %v2603
    %v2605 = vand.u32 %v2314, 4294901760
    %v2606 = vsub.f32 %v2314, %v2605
    %2607 = vmatprep.subr.mxu0 %v2606
    %v2608 = vand.u32 %v2313, 4294901760
    %v2609 = vsub.f32 %v2313, %v2608
    %2610 = vmatpush1.msra.mxu0 %v2609
    %2611 = vmatprep.subr.mxu0 0.0
    %2612 = vmatpush1.msra.mxu0 0.0
    %2613 = vmatprep.subr.mxu0 0.0
    %2614 = vmatpush1.msra.mxu0 0.0
    %2615 = vmatprep.subr.mxu0 0.0
    %2616 = vmatpush1.msra.mxu0 0.0
    %2617 = vmatprep.subr.mxu0 0.0
    %2618 = vmatpush1.msra.mxu0 0.0
    %2619 = vmatprep.subr.mxu0 0.0
    %2620 = vmatpush1.msra.mxu0 0.0
    %2621 = vmatprep.subr.mxu0 0.0
    %2622 = vmatpush1.msra.mxu0 0.0
    %2623 = vmatprep.subr.mxu0 0.0
    %2624 = vmatpush1.msra.mxu0 0.0
    %2625 = vmatprep.subr.mxu0 0.0
    %2626 = vmatpush1.msra.mxu0 0.0
    %2627 = vmatprep.subr.mxu0 0.0
    %2628 = vmatpush1.msra.mxu0 0.0
    %2629 = vmatprep.subr.mxu0 0.0
    %2630 = vmatpush1.msra.mxu0 0.0
    %2631 = vmatprep.subr.mxu0 0.0
    %2632 = vmatpush1.msra.mxu0 0.0
    %2633 = vmatprep.subr.mxu0 0.0
    %2634 = vmatpush1.msra.mxu0 0.0
    %2635 = vmatprep.subr.mxu0 0.0
    %2636 = vmatpush1.msra.mxu0 0.0
    %2637 = vmatprep.subr.mxu0 0.0
    %2638 = vmatpush1.msra.mxu0 0.0
    %2639 = vmatprep.subr.mxu0 0.0
    %2640 = vmatpush1.msra.mxu0 0.0
    %2641 = vmatprep.subr.mxu0 0.0
    %2642 = vmatpush1.msra.mxu0 0.0
    %2643 = vmatprep.subr.mxu0 0.0
    %2644 = vmatpush1.msra.mxu0 0.0
    %2645 = vmatprep.subr.mxu0 0.0
    %2646 = vmatpush1.msra.mxu0 0.0
    %2647 = vmatprep.subr.mxu0 0.0
    %2648 = vmatpush1.msra.mxu0 0.0
    %2649 = vmatprep.subr.mxu0 0.0
    %2650 = vmatpush1.msra.mxu0 0.0
    %2651 = vmatprep.subr.mxu0 0.0
    %2652 = vmatpush1.msra.mxu0 0.0
    %2653 = vmatprep.subr.mxu0 0.0
    %2654 = vmatpush1.msra.mxu0 0.0
    %2655 = vmatprep.subr.mxu0 0.0
    %2656 = vmatpush1.msra.mxu0 0.0
    %2657 = vmatprep.subr.mxu0 0.0
    %2658 = vmatpush1.msra.mxu0 0.0
    %2659 = vmatprep.mubr.f32.mxu0 0.0
    %v2660 = vand.u32 %v2317, 4294901760
    %v2661 = vsub.f32 %v2317, %v2660
    %2662 = vmatmul.mubr.f32.gmra.mrb[0].mxu0 %v2661
    %v2663 = vpop.f32.mrb[0].mxu0
    %v2664 = vadd.f32 %v2559, %v2663
    %v2665 = vpop.f32.mrb[0].mxu0
    %v2666 = vadd.f32 %v2561, %v2665
    %2667 = vdwg.mxu0
    %v2668 = vand.u32 %v2300, 4294901760
    %2669 = vmatprep.subr.mxu0 %v2668
    %v2670 = vand.u32 %v2299, 4294901760
    %2671 = vmatpush1.msra.mxu0 %v2670
    %v2672 = vand.u32 %v2302, 4294901760
    %2673 = vmatprep.subr.mxu0 %v2672
    %v2674 = vand.u32 %v2301, 4294901760
    %2675 = vmatpush1.msra.mxu0 %v2674
    %v2676 = vand.u32 %v2304, 4294901760
    %2677 = vmatprep.subr.mxu0 %v2676
    %v2678 = vand.u32 %v2303, 4294901760
    %2679 = vmatpush1.msra.mxu0 %v2678
    %v2680 = vand.u32 %v2306, 4294901760
    %2681 = vmatprep.subr.mxu0 %v2680
    %v2682 = vand.u32 %v2305, 4294901760
    %2683 = vmatpush1.msra.mxu0 %v2682
    %v2684 = vand.u32 %v2308, 4294901760
    %2685 = vmatprep.subr.mxu0 %v2684
    %v2686 = vand.u32 %v2307, 4294901760
    %2687 = vmatpush1.msra.mxu0 %v2686
    %v2688 = vand.u32 %v2310, 4294901760
    %2689 = vmatprep.subr.mxu0 %v2688
    %v2690 = vand.u32 %v2309, 4294901760
    %2691 = vmatpush1.msra.mxu0 %v2690
    %v2692 = vand.u32 %v2312, 4294901760
    %2693 = vmatprep.subr.mxu0 %v2692
    %v2694 = vand.u32 %v2311, 4294901760
    %2695 = vmatpush1.msra.mxu0 %v2694
    %v2696 = vand.u32 %v2314, 4294901760
    %2697 = vmatprep.subr.mxu0 %v2696
    %v2698 = vand.u32 %v2313, 4294901760
    %2699 = vmatpush1.msra.mxu0 %v2698
    %2700 = vmatprep.subr.mxu0 0.0
    %2701 = vmatpush1.msra.mxu0 0.0
    %2702 = vmatprep.subr.mxu0 0.0
    %2703 = vmatpush1.msra.mxu0 0.0
    %2704 = vmatprep.subr.mxu0 0.0
    %2705 = vmatpush1.msra.mxu0 0.0
    %2706 = vmatprep.subr.mxu0 0.0
    %2707 = vmatpush1.msra.mxu0 0.0
    %2708 = vmatprep.subr.mxu0 0.0
    %2709 = vmatpush1.msra.mxu0 0.0
    %2710 = vmatprep.subr.mxu0 0.0
    %2711 = vmatpush1.msra.mxu0 0.0
    %2712 = vmatprep.subr.mxu0 0.0
    %2713 = vmatpush1.msra.mxu0 0.0
    %2714 = vmatprep.subr.mxu0 0.0
    %2715 = vmatpush1.msra.mxu0 0.0
    %2716 = vmatprep.subr.mxu0 0.0
    %2717 = vmatpush1.msra.mxu0 0.0
    %2718 = vmatprep.subr.mxu0 0.0
    %2719 = vmatpush1.msra.mxu0 0.0
    %2720 = vmatprep.subr.mxu0 0.0
    %2721 = vmatpush1.msra.mxu0 0.0
    %2722 = vmatprep.subr.mxu0 0.0
    %2723 = vmatpush1.msra.mxu0 0.0
    %2724 = vmatprep.subr.mxu0 0.0
    %2725 = vmatpush1.msra.mxu0 0.0
    %2726 = vmatprep.subr.mxu0 0.0
    %2727 = vmatpush1.msra.mxu0 0.0
    %2728 = vmatprep.subr.mxu0 0.0
    %2729 = vmatpush1.msra.mxu0 0.0
    %2730 = vmatprep.subr.mxu0 0.0
    %2731 = vmatpush1.msra.mxu0 0.0
    %2732 = vmatprep.subr.mxu0 0.0
    %2733 = vmatpush1.msra.mxu0 0.0
    %2734 = vmatprep.subr.mxu0 0.0
    %2735 = vmatpush1.msra.mxu0 0.0
    %2736 = vmatprep.subr.mxu0 0.0
    %2737 = vmatpush1.msra.mxu0 0.0
    %2738 = vmatprep.subr.mxu0 0.0
    %2739 = vmatpush1.msra.mxu0 0.0
    %2740 = vmatprep.subr.mxu0 0.0
    %2741 = vmatpush1.msra.mxu0 0.0
    %2742 = vmatprep.subr.mxu0 0.0
    %2743 = vmatpush1.msra.mxu0 0.0
    %2744 = vmatprep.subr.mxu0 0.0
    %2745 = vmatpush1.msra.mxu0 0.0
    %2746 = vmatprep.subr.mxu0 0.0
    %2747 = vmatpush1.msra.mxu0 0.0
    %2748 = vmatprep.mubr.f32.mxu0 0.0
    %v2749 = vand.u32 %v2317, 4294901760
    %v2750 = vsub.f32 %v2317, %v2749
    %v2751 = vand.u32 %v2750, 4294901760
    %2752 = vmatmul.mubr.f32.gmra.mrb[0].mxu0 %v2751
    %v2753 = vpop.f32.mrb[0].mxu0
    %v2754 = vadd.f32 %v2664, %v2753
    %v2755 = vpop.f32.mrb[0].mxu0
    %v2756 = vadd.f32 %v2666, %v2755
    %2757 = vdwg.mxu0
    %v2758 = vand.u32 %v2300, 4294901760
    %v2759 = vsub.f32 %v2300, %v2758
    %v2760 = vand.u32 %v2759, 4294901760
    %2761 = vmatprep.subr.mxu0 %v2760
    %v2762 = vand.u32 %v2299, 4294901760
    %v2763 = vsub.f32 %v2299, %v2762
    %v2764 = vand.u32 %v2763, 4294901760
    %2765 = vmatpush1.msra.mxu0 %v2764
    %v2766 = vand.u32 %v2302, 4294901760
    %v2767 = vsub.f32 %v2302, %v2766
    %v2768 = vand.u32 %v2767, 4294901760
    %2769 = vmatprep.subr.mxu0 %v2768
    %v2770 = vand.u32 %v2301, 4294901760
    %v2771 = vsub.f32 %v2301, %v2770
    %v2772 = vand.u32 %v2771, 4294901760
    %2773 = vmatpush1.msra.mxu0 %v2772
    %v2774 = vand.u32 %v2304, 4294901760
    %v2775 = vsub.f32 %v2304, %v2774
    %v2776 = vand.u32 %v2775, 4294901760
    %2777 = vmatprep.subr.mxu0 %v2776
    %v2778 = vand.u32 %v2303, 4294901760
    %v2779 = vsub.f32 %v2303, %v2778
    %v2780 = vand.u32 %v2779, 4294901760
    %2781 = vmatpush1.msra.mxu0 %v2780
    %v2782 = vand.u32 %v2306, 4294901760
    %v2783 = vsub.f32 %v2306, %v2782
    %v2784 = vand.u32 %v2783, 4294901760
    %2785 = vmatprep.subr.mxu0 %v2784
    %v2786 = vand.u32 %v2305, 4294901760
    %v2787 = vsub.f32 %v2305, %v2786
    %v2788 = vand.u32 %v2787, 4294901760
    %2789 = vmatpush1.msra.mxu0 %v2788
    %v2790 = vand.u32 %v2308, 4294901760
    %v2791 = vsub.f32 %v2308, %v2790
    %v2792 = vand.u32 %v2791, 4294901760
    %2793 = vmatprep.subr.mxu0 %v2792
    %v2794 = vand.u32 %v2307, 4294901760
    %v2795 = vsub.f32 %v2307, %v2794
    %v2796 = vand.u32 %v2795, 4294901760
    %2797 = vmatpush1.msra.mxu0 %v2796
    %v2798 = vand.u32 %v2310, 4294901760
    %v2799 = vsub.f32 %v2310, %v2798
    %v2800 = vand.u32 %v2799, 4294901760
    %2801 = vmatprep.subr.mxu0 %v2800
    %v2802 = vand.u32 %v2309, 4294901760
    %v2803 = vsub.f32 %v2309, %v2802
    %v2804 = vand.u32 %v2803, 4294901760
    %2805 = vmatpush1.msra.mxu0 %v2804
    %v2806 = vand.u32 %v2312, 4294901760
    %v2807 = vsub.f32 %v2312, %v2806
    %v2808 = vand.u32 %v2807, 4294901760
    %2809 = vmatprep.subr.mxu0 %v2808
    %v2810 = vand.u32 %v2311, 4294901760
    %v2811 = vsub.f32 %v2311, %v2810
    %v2812 = vand.u32 %v2811, 4294901760
    %2813 = vmatpush1.msra.mxu0 %v2812
    %v2814 = vand.u32 %v2314, 4294901760
    %v2815 = vsub.f32 %v2314, %v2814
    %v2816 = vand.u32 %v2815, 4294901760
    %2817 = vmatprep.subr.mxu0 %v2816
    %v2818 = vand.u32 %v2313, 4294901760
    %v2819 = vsub.f32 %v2313, %v2818
    %v2820 = vand.u32 %v2819, 4294901760
    %2821 = vmatpush1.msra.mxu0 %v2820
    %2822 = vmatprep.subr.mxu0 0.0
    %2823 = vmatpush1.msra.mxu0 0.0
    %2824 = vmatprep.subr.mxu0 0.0
    %2825 = vmatpush1.msra.mxu0 0.0
    %2826 = vmatprep.subr.mxu0 0.0
    %2827 = vmatpush1.msra.mxu0 0.0
    %2828 = vmatprep.subr.mxu0 0.0
    %2829 = vmatpush1.msra.mxu0 0.0
    %2830 = vmatprep.subr.mxu0 0.0
    %2831 = vmatpush1.msra.mxu0 0.0
    %2832 = vmatprep.subr.mxu0 0.0
    %2833 = vmatpush1.msra.mxu0 0.0
    %2834 = vmatprep.subr.mxu0 0.0
    %2835 = vmatpush1.msra.mxu0 0.0
    %2836 = vmatprep.subr.mxu0 0.0
    %2837 = vmatpush1.msra.mxu0 0.0
    %2838 = vmatprep.subr.mxu0 0.0
    %2839 = vmatpush1.msra.mxu0 0.0
    %2840 = vmatprep.subr.mxu0 0.0
    %2841 = vmatpush1.msra.mxu0 0.0
    %2842 = vmatprep.subr.mxu0 0.0
    %2843 = vmatpush1.msra.mxu0 0.0
    %2844 = vmatprep.subr.mxu0 0.0
    %2845 = vmatpush1.msra.mxu0 0.0
    %2846 = vmatprep.subr.mxu0 0.0
    %2847 = vmatpush1.msra.mxu0 0.0
    %2848 = vmatprep.subr.mxu0 0.0
    %2849 = vmatpush1.msra.mxu0 0.0
    %2850 = vmatprep.subr.mxu0 0.0
    %2851 = vmatpush1.msra.mxu0 0.0
    %2852 = vmatprep.subr.mxu0 0.0
    %2853 = vmatpush1.msra.mxu0 0.0
    %2854 = vmatprep.subr.mxu0 0.0
    %2855 = vmatpush1.msra.mxu0 0.0
    %2856 = vmatprep.subr.mxu0 0.0
    %2857 = vmatpush1.msra.mxu0 0.0
    %2858 = vmatprep.subr.mxu0 0.0
    %2859 = vmatpush1.msra.mxu0 0.0
    %2860 = vmatprep.subr.mxu0 0.0
    %2861 = vmatpush1.msra.mxu0 0.0
    %2862 = vmatprep.subr.mxu0 0.0
    %2863 = vmatpush1.msra.mxu0 0.0
    %2864 = vmatprep.subr.mxu0 0.0
    %2865 = vmatpush1.msra.mxu0 0.0
    %2866 = vmatprep.subr.mxu0 0.0
    %2867 = vmatpush1.msra.mxu0 0.0
    %2868 = vmatprep.subr.mxu0 0.0
    %2869 = vmatpush1.msra.mxu0 0.0
    %2870 = vmatprep.mubr.f32.mxu0 0.0
    %v2871 = vand.u32 %v2317, 4294901760
    %2872 = vmatmul.mubr.f32.gmra.mrb[0].mxu0 %v2871
    %v2873 = vpop.f32.mrb[0].mxu0
    %v2874 = vadd.f32 %v2754, %v2873
    %v2875 = vpop.f32.mrb[0].mxu0
    %v2876 = vadd.f32 %v2756, %v2875
    %2877 = vdwg.mxu0
    %v2878 = vand.u32 %v2300, 4294901760
    %2879 = vmatprep.subr.mxu0 %v2878
    %v2880 = vand.u32 %v2299, 4294901760
    %2881 = vmatpush1.msra.mxu0 %v2880
    %v2882 = vand.u32 %v2302, 4294901760
    %2883 = vmatprep.subr.mxu0 %v2882
    %v2884 = vand.u32 %v2301, 4294901760
    %2885 = vmatpush1.msra.mxu0 %v2884
    %v2886 = vand.u32 %v2304, 4294901760
    %2887 = vmatprep.subr.mxu0 %v2886
    %v2888 = vand.u32 %v2303, 4294901760
    %2889 = vmatpush1.msra.mxu0 %v2888
    %v2890 = vand.u32 %v2306, 4294901760
    %2891 = vmatprep.subr.mxu0 %v2890
    %v2892 = vand.u32 %v2305, 4294901760
    %2893 = vmatpush1.msra.mxu0 %v2892
    %v2894 = vand.u32 %v2308, 4294901760
    %2895 = vmatprep.subr.mxu0 %v2894
    %v2896 = vand.u32 %v2307, 4294901760
    %2897 = vmatpush1.msra.mxu0 %v2896
    %v2898 = vand.u32 %v2310, 4294901760
    %2899 = vmatprep.subr.mxu0 %v2898
    %v2900 = vand.u32 %v2309, 4294901760
    %2901 = vmatpush1.msra.mxu0 %v2900
    %v2902 = vand.u32 %v2312, 4294901760
    %2903 = vmatprep.subr.mxu0 %v2902
    %v2904 = vand.u32 %v2311, 4294901760
    %2905 = vmatpush1.msra.mxu0 %v2904
    %v2906 = vand.u32 %v2314, 4294901760
    %2907 = vmatprep.subr.mxu0 %v2906
    %v2908 = vand.u32 %v2313, 4294901760
    %2909 = vmatpush1.msra.mxu0 %v2908
    %2910 = vmatprep.subr.mxu0 0.0
    %2911 = vmatpush1.msra.mxu0 0.0
    %2912 = vmatprep.subr.mxu0 0.0
    %2913 = vmatpush1.msra.mxu0 0.0
    %2914 = vmatprep.subr.mxu0 0.0
    %2915 = vmatpush1.msra.mxu0 0.0
    %2916 = vmatprep.subr.mxu0 0.0
    %2917 = vmatpush1.msra.mxu0 0.0
    %2918 = vmatprep.subr.mxu0 0.0
    %2919 = vmatpush1.msra.mxu0 0.0
    %2920 = vmatprep.subr.mxu0 0.0
    %2921 = vmatpush1.msra.mxu0 0.0
    %2922 = vmatprep.subr.mxu0 0.0
    %2923 = vmatpush1.msra.mxu0 0.0
    %2924 = vmatprep.subr.mxu0 0.0
    %2925 = vmatpush1.msra.mxu0 0.0
    %2926 = vmatprep.subr.mxu0 0.0
    %2927 = vmatpush1.msra.mxu0 0.0
    %2928 = vmatprep.subr.mxu0 0.0
    %2929 = vmatpush1.msra.mxu0 0.0
    %2930 = vmatprep.subr.mxu0 0.0
    %2931 = vmatpush1.msra.mxu0 0.0
    %2932 = vmatprep.subr.mxu0 0.0
    %2933 = vmatpush1.msra.mxu0 0.0
    %2934 = vmatprep.subr.mxu0 0.0
    %2935 = vmatpush1.msra.mxu0 0.0
    %2936 = vmatprep.subr.mxu0 0.0
    %2937 = vmatpush1.msra.mxu0 0.0
    %2938 = vmatprep.subr.mxu0 0.0
    %2939 = vmatpush1.msra.mxu0 0.0
    %2940 = vmatprep.subr.mxu0 0.0
    %2941 = vmatpush1.msra.mxu0 0.0
    %2942 = vmatprep.subr.mxu0 0.0
    %2943 = vmatpush1.msra.mxu0 0.0
    %2944 = vmatprep.subr.mxu0 0.0
    %2945 = vmatpush1.msra.mxu0 0.0
    %2946 = vmatprep.subr.mxu0 0.0
    %2947 = vmatpush1.msra.mxu0 0.0
    %2948 = vmatprep.subr.mxu0 0.0
    %2949 = vmatpush1.msra.mxu0 0.0
    %2950 = vmatprep.subr.mxu0 0.0
    %2951 = vmatpush1.msra.mxu0 0.0
    %2952 = vmatprep.subr.mxu0 0.0
    %2953 = vmatpush1.msra.mxu0 0.0
    %2954 = vmatprep.subr.mxu0 0.0
    %2955 = vmatpush1.msra.mxu0 0.0
    %2956 = vmatprep.subr.mxu0 0.0
    %2957 = vmatpush1.msra.mxu0 0.0
    %2958 = vmatprep.mubr.f32.mxu0 0.0
    %v2959 = vand.u32 %v2317, 4294901760
    %2960 = vmatmul.mubr.f32.gmra.mrb[0].mxu0 %v2959
    %v2961 = vpop.f32.mrb[0].mxu0
    %v2962 = vadd.f32 %v2874, %v2961
    %v2963 = vpop.f32.mrb[0].mxu0
    %v2964 = vadd.f32 %v2876, %v2963
    %2965 = vdwg.mxu0
    %v2966 = vld [vmem:[%s5] sm:$0xff]
    %v2968 = vsel %vm856, %v2966, 0
    %v2970 = vand.u32 %v2964, 4294901760
    %2971 = vmatprep.subr.mxu0 %v2970
    %v2972 = vand.u32 %v2962, 4294901760
    %2973 = vmatpush1.msra.mxu0 %v2972
    %2974 = vmatprep.subr.mxu0 0.0
    %2975 = vmatpush1.msra.mxu0 0.0
    %2976 = vmatprep.subr.mxu0 0.0
    %2977 = vmatpush1.msra.mxu0 0.0
    %2978 = vmatprep.subr.mxu0 0.0
    %2979 = vmatpush1.msra.mxu0 0.0
    %2980 = vmatprep.subr.mxu0 0.0
    %2981 = vmatpush1.msra.mxu0 0.0
    %2982 = vmatprep.subr.mxu0 0.0
    %2983 = vmatpush1.msra.mxu0 0.0
    %2984 = vmatprep.subr.mxu0 0.0
    %2985 = vmatpush1.msra.mxu0 0.0
    %2986 = vmatprep.subr.mxu0 0.0
    %2987 = vmatpush1.msra.mxu0 0.0
    %2988 = vmatprep.subr.mxu0 0.0
    %2989 = vmatpush1.msra.mxu0 0.0
    %2990 = vmatprep.subr.mxu0 0.0
    %2991 = vmatpush1.msra.mxu0 0.0
    %2992 = vmatprep.subr.mxu0 0.0
    %2993 = vmatpush1.msra.mxu0 0.0
    %2994 = vmatprep.subr.mxu0 0.0
    %2995 = vmatpush1.msra.mxu0 0.0
    %2996 = vmatprep.subr.mxu0 0.0
    %2997 = vmatpush1.msra.mxu0 0.0
    %2998 = vmatprep.subr.mxu0 0.0
    %2999 = vmatpush1.msra.mxu0 0.0
    %3000 = vmatprep.subr.mxu0 0.0
    %3001 = vmatpush1.msra.mxu0 0.0
    %3002 = vmatprep.subr.mxu0 0.0
    %3003 = vmatpush1.msra.mxu0 0.0
    %3004 = vmatprep.subr.mxu0 0.0
    %3005 = vmatpush1.msra.mxu0 0.0
    %3006 = vmatprep.subr.mxu0 0.0
    %3007 = vmatpush1.msra.mxu0 0.0
    %3008 = vmatprep.subr.mxu0 0.0
    %3009 = vmatpush1.msra.mxu0 0.0
    %3010 = vmatprep.subr.mxu0 0.0
    %3011 = vmatpush1.msra.mxu0 0.0
    %3012 = vmatprep.subr.mxu0 0.0
    %3013 = vmatpush1.msra.mxu0 0.0
    %3014 = vmatprep.subr.mxu0 0.0
    %3015 = vmatpush1.msra.mxu0 0.0
    %3016 = vmatprep.subr.mxu0 0.0
    %3017 = vmatpush1.msra.mxu0 0.0
    %3018 = vmatprep.subr.mxu0 0.0
    %3019 = vmatpush1.msra.mxu0 0.0
    %3020 = vmatprep.subr.mxu0 0.0
    %3021 = vmatpush1.msra.mxu0 0.0
    %3022 = vmatprep.subr.mxu0 0.0
    %3023 = vmatpush1.msra.mxu0 0.0
    %3024 = vmatprep.subr.mxu0 0.0
    %3025 = vmatpush1.msra.mxu0 0.0
    %3026 = vmatprep.subr.mxu0 0.0
    %3027 = vmatpush1.msra.mxu0 0.0
    %3028 = vmatprep.subr.mxu0 0.0
    %3029 = vmatpush1.msra.mxu0 0.0
    %3030 = vmatprep.subr.mxu0 0.0
    %3031 = vmatpush1.msra.mxu0 0.0
    %3032 = vmatprep.subr.mxu0 0.0
    %3033 = vmatpush1.msra.mxu0 0.0
    %3034 = vmatprep.subr.mxu0 0.0
    %3035 = vmatpush1.msra.mxu0 0.0
    %3036 = vmatprep.mubr.f32.mxu0 0.0
    %v3037 = vand.u32 %v2968, 4294901760
    %v3038 = vsub.f32 %v2968, %v3037
    %v3039 = vand.u32 %v3038, 4294901760
    %v3040 = vsub.f32 %v3038, %v3039
    %v3041 = vand.u32 %v3040, 4294901760
    %3042 = vmatmul.mubr.f32.gmra.mrb[0].mxu0 %v3041
    %v3043 = vpop.f32.mrb[0].mxu0
    %v3044 = vadd.f32 0.0, %v3043
    %v3045 = vpop.f32.mrb[0].mxu0
    %v3046 = vadd.f32 0.0, %v3045
    %3047 = vdwg.mxu0
    %v3048 = vand.u32 %v2964, 4294901760
    %v3049 = vsub.f32 %v2964, %v3048
    %v3050 = vand.u32 %v3049, 4294901760
    %v3051 = vsub.f32 %v3049, %v3050
    %v3052 = vand.u32 %v3051, 4294901760
    %3053 = vmatprep.subr.mxu0 %v3052
    %v3054 = vand.u32 %v2962, 4294901760
    %v3055 = vsub.f32 %v2962, %v3054
    %v3056 = vand.u32 %v3055, 4294901760
    %v3057 = vsub.f32 %v3055, %v3056
    %v3058 = vand.u32 %v3057, 4294901760
    %3059 = vmatpush1.msra.mxu0 %v3058
    %3060 = vmatprep.subr.mxu0 0.0
    %3061 = vmatpush1.msra.mxu0 0.0
    %3062 = vmatprep.subr.mxu0 0.0
    %3063 = vmatpush1.msra.mxu0 0.0
    %3064 = vmatprep.subr.mxu0 0.0
    %3065 = vmatpush1.msra.mxu0 0.0
    %3066 = vmatprep.subr.mxu0 0.0
    %3067 = vmatpush1.msra.mxu0 0.0
    %3068 = vmatprep.subr.mxu0 0.0
    %3069 = vmatpush1.msra.mxu0 0.0
    %3070 = vmatprep.subr.mxu0 0.0
    %3071 = vmatpush1.msra.mxu0 0.0
    %3072 = vmatprep.subr.mxu0 0.0
    %3073 = vmatpush1.msra.mxu0 0.0
    %3074 = vmatprep.subr.mxu0 0.0
    %3075 = vmatpush1.msra.mxu0 0.0
    %3076 = vmatprep.subr.mxu0 0.0
    %3077 = vmatpush1.msra.mxu0 0.0
    %3078 = vmatprep.subr.mxu0 0.0
    %3079 = vmatpush1.msra.mxu0 0.0
    %3080 = vmatprep.subr.mxu0 0.0
    %3081 = vmatpush1.msra.mxu0 0.0
    %3082 = vmatprep.subr.mxu0 0.0
    %3083 = vmatpush1.msra.mxu0 0.0
    %3084 = vmatprep.subr.mxu0 0.0
    %3085 = vmatpush1.msra.mxu0 0.0
    %3086 = vmatprep.subr.mxu0 0.0
    %3087 = vmatpush1.msra.mxu0 0.0
    %3088 = vmatprep.subr.mxu0 0.0
    %3089 = vmatpush1.msra.mxu0 0.0
    %3090 = vmatprep.subr.mxu0 0.0
    %3091 = vmatpush1.msra.mxu0 0.0
    %3092 = vmatprep.subr.mxu0 0.0
    %3093 = vmatpush1.msra.mxu0 0.0
    %3094 = vmatprep.subr.mxu0 0.0
    %3095 = vmatpush1.msra.mxu0 0.0
    %3096 = vmatprep.subr.mxu0 0.0
    %3097 = vmatpush1.msra.mxu0 0.0
    %3098 = vmatprep.subr.mxu0 0.0
    %3099 = vmatpush1.msra.mxu0 0.0
    %3100 = vmatprep.subr.mxu0 0.0
    %3101 = vmatpush1.msra.mxu0 0.0
    %3102 = vmatprep.subr.mxu0 0.0
    %3103 = vmatpush1.msra.mxu0 0.0
    %3104 = vmatprep.subr.mxu0 0.0
    %3105 = vmatpush1.msra.mxu0 0.0
    %3106 = vmatprep.subr.mxu0 0.0
    %3107 = vmatpush1.msra.mxu0 0.0
    %3108 = vmatprep.subr.mxu0 0.0
    %3109 = vmatpush1.msra.mxu0 0.0
    %3110 = vmatprep.subr.mxu0 0.0
    %3111 = vmatpush1.msra.mxu0 0.0
    %3112 = vmatprep.subr.mxu0 0.0
    %3113 = vmatpush1.msra.mxu0 0.0
    %3114 = vmatprep.subr.mxu0 0.0
    %3115 = vmatpush1.msra.mxu0 0.0
    %3116 = vmatprep.subr.mxu0 0.0
    %3117 = vmatpush1.msra.mxu0 0.0
    %3118 = vmatprep.subr.mxu0 0.0
    %3119 = vmatpush1.msra.mxu0 0.0
    %3120 = vmatprep.subr.mxu0 0.0
    %3121 = vmatpush1.msra.mxu0 0.0
    %3122 = vmatprep.mubr.f32.mxu0 0.0
    %v3123 = vand.u32 %v2968, 4294901760
    %3124 = vmatmul.mubr.f32.gmra.mrb[0].mxu0 %v3123
    %v3125 = vpop.f32.mrb[0].mxu0
    %v3126 = vadd.f32 %v3044, %v3125
    %v3127 = vpop.f32.mrb[0].mxu0
    %v3128 = vadd.f32 %v3046, %v3127
    %3129 = vdwg.mxu0
    %v3130 = vand.u32 %v2964, 4294901760
    %v3131 = vsub.f32 %v2964, %v3130
    %3132 = vmatprep.subr.mxu0 %v3131
    %v3133 = vand.u32 %v2962, 4294901760
    %v3134 = vsub.f32 %v2962, %v3133
    %3135 = vmatpush1.msra.mxu0 %v3134
    %3136 = vmatprep.subr.mxu0 0.0
    %3137 = vmatpush1.msra.mxu0 0.0
    %3138 = vmatprep.subr.mxu0 0.0
    %3139 = vmatpush1.msra.mxu0 0.0
    %3140 = vmatprep.subr.mxu0 0.0
    %3141 = vmatpush1.msra.mxu0 0.0
    %3142 = vmatprep.subr.mxu0 0.0
    %3143 = vmatpush1.msra.mxu0 0.0
    %3144 = vmatprep.subr.mxu0 0.0
    %3145 = vmatpush1.msra.mxu0 0.0
    %3146 = vmatprep.subr.mxu0 0.0
    %3147 = vmatpush1.msra.mxu0 0.0
    %3148 = vmatprep.subr.mxu0 0.0
    %3149 = vmatpush1.msra.mxu0 0.0
    %3150 = vmatprep.subr.mxu0 0.0
    %3151 = vmatpush1.msra.mxu0 0.0
    %3152 = vmatprep.subr.mxu0 0.0
    %3153 = vmatpush1.msra.mxu0 0.0
    %3154 = vmatprep.subr.mxu0 0.0
    %3155 = vmatpush1.msra.mxu0 0.0
    %3156 = vmatprep.subr.mxu0 0.0
    %3157 = vmatpush1.msra.mxu0 0.0
    %3158 = vmatprep.subr.mxu0 0.0
    %3159 = vmatpush1.msra.mxu0 0.0
    %3160 = vmatprep.subr.mxu0 0.0
    %3161 = vmatpush1.msra.mxu0 0.0
    %3162 = vmatprep.subr.mxu0 0.0
    %3163 = vmatpush1.msra.mxu0 0.0
    %3164 = vmatprep.subr.mxu0 0.0
    %3165 = vmatpush1.msra.mxu0 0.0
    %3166 = vmatprep.subr.mxu0 0.0
    %3167 = vmatpush1.msra.mxu0 0.0
    %3168 = vmatprep.subr.mxu0 0.0
    %3169 = vmatpush1.msra.mxu0 0.0
    %3170 = vmatprep.subr.mxu0 0.0
    %3171 = vmatpush1.msra.mxu0 0.0
    %3172 = vmatprep.subr.mxu0 0.0
    %3173 = vmatpush1.msra.mxu0 0.0
    %3174 = vmatprep.subr.mxu0 0.0
    %3175 = vmatpush1.msra.mxu0 0.0
    %3176 = vmatprep.subr.mxu0 0.0
    %3177 = vmatpush1.msra.mxu0 0.0
    %3178 = vmatprep.subr.mxu0 0.0
    %3179 = vmatpush1.msra.mxu0 0.0
    %3180 = vmatprep.subr.mxu0 0.0
    %3181 = vmatpush1.msra.mxu0 0.0
    %3182 = vmatprep.subr.mxu0 0.0
    %3183 = vmatpush1.msra.mxu0 0.0
    %3184 = vmatprep.subr.mxu0 0.0
    %3185 = vmatpush1.msra.mxu0 0.0
    %3186 = vmatprep.subr.mxu0 0.0
    %3187 = vmatpush1.msra.mxu0 0.0
    %3188 = vmatprep.subr.mxu0 0.0
    %3189 = vmatpush1.msra.mxu0 0.0
    %3190 = vmatprep.subr.mxu0 0.0
    %3191 = vmatpush1.msra.mxu0 0.0
    %3192 = vmatprep.subr.mxu0 0.0
    %3193 = vmatpush1.msra.mxu0 0.0
    %3194 = vmatprep.subr.mxu0 0.0
    %3195 = vmatpush1.msra.mxu0 0.0
    %3196 = vmatprep.subr.mxu0 0.0
    %3197 = vmatpush1.msra.mxu0 0.0
    %3198 = vmatprep.mubr.f32.mxu0 0.0
    %v3199 = vand.u32 %v2968, 4294901760
    %v3200 = vsub.f32 %v2968, %v3199
    %3201 = vmatmul.mubr.f32.gmra.mrb[0].mxu0 %v3200
    %v3202 = vpop.f32.mrb[0].mxu0
    %v3203 = vadd.f32 %v3126, %v3202
    %v3204 = vpop.f32.mrb[0].mxu0
    %v3205 = vadd.f32 %v3128, %v3204
    %3206 = vdwg.mxu0
    %v3207 = vand.u32 %v2964, 4294901760
    %3208 = vmatprep.subr.mxu0 %v3207
    %v3209 = vand.u32 %v2962, 4294901760
    %3210 = vmatpush1.msra.mxu0 %v3209
    %3211 = vmatprep.subr.mxu0 0.0
    %3212 = vmatpush1.msra.mxu0 0.0
    %3213 = vmatprep.subr.mxu0 0.0
    %3214 = vmatpush1.msra.mxu0 0.0
    %3215 = vmatprep.subr.mxu0 0.0
    %3216 = vmatpush1.msra.mxu0 0.0
    %3217 = vmatprep.subr.mxu0 0.0
    %3218 = vmatpush1.msra.mxu0 0.0
    %3219 = vmatprep.subr.mxu0 0.0
    %3220 = vmatpush1.msra.mxu0 0.0
    %3221 = vmatprep.subr.mxu0 0.0
    %3222 = vmatpush1.msra.mxu0 0.0
    %3223 = vmatprep.subr.mxu0 0.0
    %3224 = vmatpush1.msra.mxu0 0.0
    %3225 = vmatprep.subr.mxu0 0.0
    %3226 = vmatpush1.msra.mxu0 0.0
    %3227 = vmatprep.subr.mxu0 0.0
    %3228 = vmatpush1.msra.mxu0 0.0
    %3229 = vmatprep.subr.mxu0 0.0
    %3230 = vmatpush1.msra.mxu0 0.0
    %3231 = vmatprep.subr.mxu0 0.0
    %3232 = vmatpush1.msra.mxu0 0.0
    %3233 = vmatprep.subr.mxu0 0.0
    %3234 = vmatpush1.msra.mxu0 0.0
    %3235 = vmatprep.subr.mxu0 0.0
    %3236 = vmatpush1.msra.mxu0 0.0
    %3237 = vmatprep.subr.mxu0 0.0
    %3238 = vmatpush1.msra.mxu0 0.0
    %3239 = vmatprep.subr.mxu0 0.0
    %3240 = vmatpush1.msra.mxu0 0.0
    %3241 = vmatprep.subr.mxu0 0.0
    %3242 = vmatpush1.msra.mxu0 0.0
    %3243 = vmatprep.subr.mxu0 0.0
    %3244 = vmatpush1.msra.mxu0 0.0
    %3245 = vmatprep.subr.mxu0 0.0
    %3246 = vmatpush1.msra.mxu0 0.0
    %3247 = vmatprep.subr.mxu0 0.0
    %3248 = vmatpush1.msra.mxu0 0.0
    %3249 = vmatprep.subr.mxu0 0.0
    %3250 = vmatpush1.msra.mxu0 0.0
    %3251 = vmatprep.subr.mxu0 0.0
    %3252 = vmatpush1.msra.mxu0 0.0
    %3253 = vmatprep.subr.mxu0 0.0
    %3254 = vmatpush1.msra.mxu0 0.0
    %3255 = vmatprep.subr.mxu0 0.0
    %3256 = vmatpush1.msra.mxu0 0.0
    %3257 = vmatprep.subr.mxu0 0.0
    %3258 = vmatpush1.msra.mxu0 0.0
    %3259 = vmatprep.subr.mxu0 0.0
    %3260 = vmatpush1.msra.mxu0 0.0
    %3261 = vmatprep.subr.mxu0 0.0
    %3262 = vmatpush1.msra.mxu0 0.0
    %3263 = vmatprep.subr.mxu0 0.0
    %3264 = vmatpush1.msra.mxu0 0.0
    %3265 = vmatprep.subr.mxu0 0.0
    %3266 = vmatpush1.msra.mxu0 0.0
    %3267 = vmatprep.subr.mxu0 0.0
    %3268 = vmatpush1.msra.mxu0 0.0
    %3269 = vmatprep.subr.mxu0 0.0
    %3270 = vmatpush1.msra.mxu0 0.0
    %3271 = vmatprep.subr.mxu0 0.0
    %3272 = vmatpush1.msra.mxu0 0.0
    %3273 = vmatprep.mubr.f32.mxu0 0.0
    %v3274 = vand.u32 %v2968, 4294901760
    %v3275 = vsub.f32 %v2968, %v3274
    %v3276 = vand.u32 %v3275, 4294901760
    %3277 = vmatmul.mubr.f32.gmra.mrb[0].mxu0 %v3276
    %v3278 = vpop.f32.mrb[0].mxu0
    %v3279 = vadd.f32 %v3203, %v3278
    %v3280 = vpop.f32.mrb[0].mxu0
    %v3281 = vadd.f32 %v3205, %v3280
    %3282 = vdwg.mxu0
    %v3283 = vand.u32 %v2964, 4294901760
    %v3284 = vsub.f32 %v2964, %v3283
    %v3285 = vand.u32 %v3284, 4294901760
    %3286 = vmatprep.subr.mxu0 %v3285
    %v3287 = vand.u32 %v2962, 4294901760
    %v3288 = vsub.f32 %v2962, %v3287
    %v3289 = vand.u32 %v3288, 4294901760
    %3290 = vmatpush1.msra.mxu0 %v3289
    %3291 = vmatprep.subr.mxu0 0.0
    %3292 = vmatpush1.msra.mxu0 0.0
    %3293 = vmatprep.subr.mxu0 0.0
    %3294 = vmatpush1.msra.mxu0 0.0
    %3295 = vmatprep.subr.mxu0 0.0
    %3296 = vmatpush1.msra.mxu0 0.0
    %3297 = vmatprep.subr.mxu0 0.0
    %3298 = vmatpush1.msra.mxu0 0.0
    %3299 = vmatprep.subr.mxu0 0.0
    %3300 = vmatpush1.msra.mxu0 0.0
    %3301 = vmatprep.subr.mxu0 0.0
    %3302 = vmatpush1.msra.mxu0 0.0
    %3303 = vmatprep.subr.mxu0 0.0
    %3304 = vmatpush1.msra.mxu0 0.0
    %3305 = vmatprep.subr.mxu0 0.0
    %3306 = vmatpush1.msra.mxu0 0.0
    %3307 = vmatprep.subr.mxu0 0.0
    %3308 = vmatpush1.msra.mxu0 0.0
    %3309 = vmatprep.subr.mxu0 0.0
    %3310 = vmatpush1.msra.mxu0 0.0
    %3311 = vmatprep.subr.mxu0 0.0
    %3312 = vmatpush1.msra.mxu0 0.0
    %3313 = vmatprep.subr.mxu0 0.0
    %3314 = vmatpush1.msra.mxu0 0.0
    %3315 = vmatprep.subr.mxu0 0.0
    %3316 = vmatpush1.msra.mxu0 0.0
    %3317 = vmatprep.subr.mxu0 0.0
    %3318 = vmatpush1.msra.mxu0 0.0
    %3319 = vmatprep.subr.mxu0 0.0
    %3320 = vmatpush1.msra.mxu0 0.0
    %3321 = vmatprep.subr.mxu0 0.0
    %3322 = vmatpush1.msra.mxu0 0.0
    %3323 = vmatprep.subr.mxu0 0.0
    %3324 = vmatpush1.msra.mxu0 0.0
    %3325 = vmatprep.subr.mxu0 0.0
    %3326 = vmatpush1.msra.mxu0 0.0
    %3327 = vmatprep.subr.mxu0 0.0
    %3328 = vmatpush1.msra.mxu0 0.0
    %3329 = vmatprep.subr.mxu0 0.0
    %3330 = vmatpush1.msra.mxu0 0.0
    %3331 = vmatprep.subr.mxu0 0.0
    %3332 = vmatpush1.msra.mxu0 0.0
    %3333 = vmatprep.subr.mxu0 0.0
    %3334 = vmatpush1.msra.mxu0 0.0
    %3335 = vmatprep.subr.mxu0 0.0
    %3336 = vmatpush1.msra.mxu0 0.0
    %3337 = vmatprep.subr.mxu0 0.0
    %3338 = vmatpush1.msra.mxu0 0.0
    %3339 = vmatprep.subr.mxu0 0.0
    %3340 = vmatpush1.msra.mxu0 0.0
    %3341 = vmatprep.subr.mxu0 0.0
    %3342 = vmatpush1.msra.mxu0 0.0
    %3343 = vmatprep.subr.mxu0 0.0
    %3344 = vmatpush1.msra.mxu0 0.0
    %3345 = vmatprep.subr.mxu0 0.0
    %3346 = vmatpush1.msra.mxu0 0.0
    %3347 = vmatprep.subr.mxu0 0.0
    %3348 = vmatpush1.msra.mxu0 0.0
    %3349 = vmatprep.subr.mxu0 0.0
    %3350 = vmatpush1.msra.mxu0 0.0
    %3351 = vmatprep.subr.mxu0 0.0
    %3352 = vmatpush1.msra.mxu0 0.0
    %3353 = vmatprep.mubr.f32.mxu0 0.0
    %v3354 = vand.u32 %v2968, 4294901760
    %3355 = vmatmul.mubr.f32.gmra.mrb[0].mxu0 %v3354
    %v3356 = vpop.f32.mrb[0].mxu0
    %v3357 = vadd.f32 %v3279, %v3356
    %v3358 = vpop.f32.mrb[0].mxu0
    %v3359 = vadd.f32 %v3281, %v3358
    %3360 = vdwg.mxu0
    %v3361 = vand.u32 %v2964, 4294901760
    %3362 = vmatprep.subr.mxu0 %v3361
    %v3363 = vand.u32 %v2962, 4294901760
    %3364 = vmatpush1.msra.mxu0 %v3363
    %3365 = vmatprep.subr.mxu0 0.0
    %3366 = vmatpush1.msra.mxu0 0.0
    %3367 = vmatprep.subr.mxu0 0.0
    %3368 = vmatpush1.msra.mxu0 0.0
    %3369 = vmatprep.subr.mxu0 0.0
    %3370 = vmatpush1.msra.mxu0 0.0
    %3371 = vmatprep.subr.mxu0 0.0
    %3372 = vmatpush1.msra.mxu0 0.0
    %3373 = vmatprep.subr.mxu0 0.0
    %3374 = vmatpush1.msra.mxu0 0.0
    %3375 = vmatprep.subr.mxu0 0.0
    %3376 = vmatpush1.msra.mxu0 0.0
    %3377 = vmatprep.subr.mxu0 0.0
    %3378 = vmatpush1.msra.mxu0 0.0
    %3379 = vmatprep.subr.mxu0 0.0
    %3380 = vmatpush1.msra.mxu0 0.0
    %3381 = vmatprep.subr.mxu0 0.0
    %3382 = vmatpush1.msra.mxu0 0.0
    %3383 = vmatprep.subr.mxu0 0.0
    %3384 = vmatpush1.msra.mxu0 0.0
    %3385 = vmatprep.subr.mxu0 0.0
    %3386 = vmatpush1.msra.mxu0 0.0
    %3387 = vmatprep.subr.mxu0 0.0
    %3388 = vmatpush1.msra.mxu0 0.0
    %3389 = vmatprep.subr.mxu0 0.0
    %3390 = vmatpush1.msra.mxu0 0.0
    %3391 = vmatprep.subr.mxu0 0.0
    %3392 = vmatpush1.msra.mxu0 0.0
    %3393 = vmatprep.subr.mxu0 0.0
    %3394 = vmatpush1.msra.mxu0 0.0
    %3395 = vmatprep.subr.mxu0 0.0
    %3396 = vmatpush1.msra.mxu0 0.0
    %3397 = vmatprep.subr.mxu0 0.0
    %3398 = vmatpush1.msra.mxu0 0.0
    %3399 = vmatprep.subr.mxu0 0.0
    %3400 = vmatpush1.msra.mxu0 0.0
    %3401 = vmatprep.subr.mxu0 0.0
    %3402 = vmatpush1.msra.mxu0 0.0
    %3403 = vmatprep.subr.mxu0 0.0
    %3404 = vmatpush1.msra.mxu0 0.0
    %3405 = vmatprep.subr.mxu0 0.0
    %3406 = vmatpush1.msra.mxu0 0.0
    %3407 = vmatprep.subr.mxu0 0.0
    %3408 = vmatpush1.msra.mxu0 0.0
    %3409 = vmatprep.subr.mxu0 0.0
    %3410 = vmatpush1.msra.mxu0 0.0
    %3411 = vmatprep.subr.mxu0 0.0
    %3412 = vmatpush1.msra.mxu0 0.0
    %3413 = vmatprep.subr.mxu0 0.0
    %3414 = vmatpush1.msra.mxu0 0.0
    %3415 = vmatprep.subr.mxu0 0.0
    %3416 = vmatpush1.msra.mxu0 0.0
    %3417 = vmatprep.subr.mxu0 0.0
    %3418 = vmatpush1.msra.mxu0 0.0
    %3419 = vmatprep.subr.mxu0 0.0
    %3420 = vmatpush1.msra.mxu0 0.0
    %3421 = vmatprep.subr.mxu0 0.0
    %3422 = vmatpush1.msra.mxu0 0.0
    %3423 = vmatprep.subr.mxu0 0.0
    %3424 = vmatpush1.msra.mxu0 0.0
    %3425 = vmatprep.subr.mxu0 0.0
    %3426 = vmatpush1.msra.mxu0 0.0
    %3427 = vmatprep.mubr.f32.mxu0 0.0
    %v3428 = vand.u32 %v2968, 4294901760
    %3429 = vmatmul.mubr.f32.gmra.mrb[0].mxu0 %v3428
    %v3430 = vpop.f32.mrb[0].mxu0
    %v3431 = vadd.f32 %v3357, %v3430
    %v3432 = vpop.f32.mrb[0].mxu0
    %v3433 = vadd.f32 %v3359, %v3432
    %3434 = vdwg.mxu0
    %v3435 = vand.u32 %v3433, 4294901760
    %3436 = vmatprep.subr.mxu0 %v3435
    %v3437 = vand.u32 %v3431, 4294901760
    %3438 = vmatpush1.msra.mxu0 %v3437
    %3439 = vmatprep.subr.mxu0 0.0
    %3440 = vmatpush1.msra.mxu0 0.0
    %3441 = vmatprep.subr.mxu0 0.0
    %3442 = vmatpush1.msra.mxu0 0.0
    %3443 = vmatprep.subr.mxu0 0.0
    %3444 = vmatpush1.msra.mxu0 0.0
    %3445 = vmatprep.subr.mxu0 0.0
    %3446 = vmatpush1.msra.mxu0 0.0
    %3447 = vmatprep.subr.mxu0 0.0
    %3448 = vmatpush1.msra.mxu0 0.0
    %3449 = vmatprep.subr.mxu0 0.0
    %3450 = vmatpush1.msra.mxu0 0.0
    %3451 = vmatprep.subr.mxu0 0.0
    %3452 = vmatpush1.msra.mxu0 0.0
    %3453 = vmatprep.subr.mxu0 0.0
    %3454 = vmatpush1.msra.mxu0 0.0
    %3455 = vmatprep.subr.mxu0 0.0
    %3456 = vmatpush1.msra.mxu0 0.0
    %3457 = vmatprep.subr.mxu0 0.0
    %3458 = vmatpush1.msra.mxu0 0.0
    %3459 = vmatprep.subr.mxu0 0.0
    %3460 = vmatpush1.msra.mxu0 0.0
    %3461 = vmatprep.subr.mxu0 0.0
    %3462 = vmatpush1.msra.mxu0 0.0
    %3463 = vmatprep.subr.mxu0 0.0
    %3464 = vmatpush1.msra.mxu0 0.0
    %3465 = vmatprep.subr.mxu0 0.0
    %3466 = vmatpush1.msra.mxu0 0.0
    %3467 = vmatprep.subr.mxu0 0.0
    %3468 = vmatpush1.msra.mxu0 0.0
    %3469 = vmatprep.subr.mxu0 0.0
    %3470 = vmatpush1.msra.mxu0 0.0
    %3471 = vmatprep.subr.mxu0 0.0
    %3472 = vmatpush1.msra.mxu0 0.0
    %3473 = vmatprep.subr.mxu0 0.0
    %3474 = vmatpush1.msra.mxu0 0.0
    %3475 = vmatprep.subr.mxu0 0.0
    %3476 = vmatpush1.msra.mxu0 0.0
    %3477 = vmatprep.subr.mxu0 0.0
    %3478 = vmatpush1.msra.mxu0 0.0
    %3479 = vmatprep.subr.mxu0 0.0
    %3480 = vmatpush1.msra.mxu0 0.0
    %3481 = vmatprep.subr.mxu0 0.0
    %3482 = vmatpush1.msra.mxu0 0.0
    %3483 = vmatprep.subr.mxu0 0.0
    %3484 = vmatpush1.msra.mxu0 0.0
    %3485 = vmatprep.subr.mxu0 0.0
    %3486 = vmatpush1.msra.mxu0 0.0
    %3487 = vmatprep.subr.mxu0 0.0
    %3488 = vmatpush1.msra.mxu0 0.0
    %3489 = vmatprep.subr.mxu0 0.0
    %3490 = vmatpush1.msra.mxu0 0.0
    %3491 = vmatprep.subr.mxu0 0.0
    %3492 = vmatpush1.msra.mxu0 0.0
    %3493 = vmatprep.subr.mxu0 0.0
    %3494 = vmatpush1.msra.mxu0 0.0
    %3495 = vmatprep.subr.mxu0 0.0
    %3496 = vmatpush1.msra.mxu0 0.0
    %3497 = vmatprep.subr.mxu0 0.0
    %3498 = vmatpush1.msra.mxu0 0.0
    %3499 = vmatprep.subr.mxu0 0.0
    %3500 = vmatpush1.msra.mxu0 0.0
    %3501 = vmatprep.mubr.f32.mxu0 0.0
    %v3502 = vand.u32 %v858, 4294901760
    %v3503 = vsub.f32 %v858, %v3502
    %v3504 = vand.u32 %v3503, 4294901760
    %v3505 = vsub.f32 %v3503, %v3504
    %v3506 = vand.u32 %v3505, 4294901760
    %3507 = vmatmul.mubr.f32.gmra.mrb[0].mxu0 %v3506
    %v3508 = vpop.f32.mrb[0].mxu0
    %v3509 = vadd.f32 0.0, %v3508
    %v3510 = vpop.f32.mrb[0].mxu0
    %v3511 = vadd.f32 0.0, %v3510
    %3512 = vdwg.mxu0
    %v3513 = vand.u32 %v3433, 4294901760
    %v3514 = vsub.f32 %v3433, %v3513
    %v3515 = vand.u32 %v3514, 4294901760
    %v3516 = vsub.f32 %v3514, %v3515
    %v3517 = vand.u32 %v3516, 4294901760
    %3518 = vmatprep.subr.mxu0 %v3517
    %v3519 = vand.u32 %v3431, 4294901760
    %v3520 = vsub.f32 %v3431, %v3519
    %v3521 = vand.u32 %v3520, 4294901760
    %v3522 = vsub.f32 %v3520, %v3521
    %v3523 = vand.u32 %v3522, 4294901760
    %3524 = vmatpush1.msra.mxu0 %v3523
    %3525 = vmatprep.subr.mxu0 0.0
    %3526 = vmatpush1.msra.mxu0 0.0
    %3527 = vmatprep.subr.mxu0 0.0
    %3528 = vmatpush1.msra.mxu0 0.0
    %3529 = vmatprep.subr.mxu0 0.0
    %3530 = vmatpush1.msra.mxu0 0.0
    %3531 = vmatprep.subr.mxu0 0.0
    %3532 = vmatpush1.msra.mxu0 0.0
    %3533 = vmatprep.subr.mxu0 0.0
    %3534 = vmatpush1.msra.mxu0 0.0
    %3535 = vmatprep.subr.mxu0 0.0
    %3536 = vmatpush1.msra.mxu0 0.0
    %3537 = vmatprep.subr.mxu0 0.0
    %3538 = vmatpush1.msra.mxu0 0.0
    %3539 = vmatprep.subr.mxu0 0.0
    %3540 = vmatpush1.msra.mxu0 0.0
    %3541 = vmatprep.subr.mxu0 0.0
    %3542 = vmatpush1.msra.mxu0 0.0
    %3543 = vmatprep.subr.mxu0 0.0
    %3544 = vmatpush1.msra.mxu0 0.0
    %3545 = vmatprep.subr.mxu0 0.0
    %3546 = vmatpush1.msra.mxu0 0.0
    %3547 = vmatprep.subr.mxu0 0.0
    %3548 = vmatpush1.msra.mxu0 0.0
    %3549 = vmatprep.subr.mxu0 0.0
    %3550 = vmatpush1.msra.mxu0 0.0
    %3551 = vmatprep.subr.mxu0 0.0
    %3552 = vmatpush1.msra.mxu0 0.0
    %3553 = vmatprep.subr.mxu0 0.0
    %3554 = vmatpush1.msra.mxu0 0.0
    %3555 = vmatprep.subr.mxu0 0.0
    %3556 = vmatpush1.msra.mxu0 0.0
    %3557 = vmatprep.subr.mxu0 0.0
    %3558 = vmatpush1.msra.mxu0 0.0
    %3559 = vmatprep.subr.mxu0 0.0
    %3560 = vmatpush1.msra.mxu0 0.0
    %3561 = vmatprep.subr.mxu0 0.0
    %3562 = vmatpush1.msra.mxu0 0.0
    %3563 = vmatprep.subr.mxu0 0.0
    %3564 = vmatpush1.msra.mxu0 0.0
    %3565 = vmatprep.subr.mxu0 0.0
    %3566 = vmatpush1.msra.mxu0 0.0
    %3567 = vmatprep.subr.mxu0 0.0
    %3568 = vmatpush1.msra.mxu0 0.0
    %3569 = vmatprep.subr.mxu0 0.0
    %3570 = vmatpush1.msra.mxu0 0.0
    %3571 = vmatprep.subr.mxu0 0.0
    %3572 = vmatpush1.msra.mxu0 0.0
    %3573 = vmatprep.subr.mxu0 0.0
    %3574 = vmatpush1.msra.mxu0 0.0
    %3575 = vmatprep.subr.mxu0 0.0
    %3576 = vmatpush1.msra.mxu0 0.0
    %3577 = vmatprep.subr.mxu0 0.0
    %3578 = vmatpush1.msra.mxu0 0.0
    %3579 = vmatprep.subr.mxu0 0.0
    %3580 = vmatpush1.msra.mxu0 0.0
    %3581 = vmatprep.subr.mxu0 0.0
    %3582 = vmatpush1.msra.mxu0 0.0
    %3583 = vmatprep.subr.mxu0 0.0
    %3584 = vmatpush1.msra.mxu0 0.0
    %3585 = vmatprep.subr.mxu0 0.0
    %3586 = vmatpush1.msra.mxu0 0.0
    %3587 = vmatprep.mubr.f32.mxu0 0.0
    %v3588 = vand.u32 %v858, 4294901760
    %3589 = vmatmul.mubr.f32.gmra.mrb[0].mxu0 %v3588
    %v3590 = vpop.f32.mrb[0].mxu0
    %v3591 = vadd.f32 %v3509, %v3590
    %v3592 = vpop.f32.mrb[0].mxu0
    %v3593 = vadd.f32 %v3511, %v3592
    %3594 = vdwg.mxu0
    %v3595 = vand.u32 %v3433, 4294901760
    %v3596 = vsub.f32 %v3433, %v3595
    %3597 = vmatprep.subr.mxu0 %v3596
    %v3598 = vand.u32 %v3431, 4294901760
    %v3599 = vsub.f32 %v3431, %v3598
    %3600 = vmatpush1.msra.mxu0 %v3599
    %3601 = vmatprep.subr.mxu0 0.0
    %3602 = vmatpush1.msra.mxu0 0.0
    %3603 = vmatprep.subr.mxu0 0.0
    %3604 = vmatpush1.msra.mxu0 0.0
    %3605 = vmatprep.subr.mxu0 0.0
    %3606 = vmatpush1.msra.mxu0 0.0
    %3607 = vmatprep.subr.mxu0 0.0
    %3608 = vmatpush1.msra.mxu0 0.0
    %3609 = vmatprep.subr.mxu0 0.0
    %3610 = vmatpush1.msra.mxu0 0.0
    %3611 = vmatprep.subr.mxu0 0.0
    %3612 = vmatpush1.msra.mxu0 0.0
    %3613 = vmatprep.subr.mxu0 0.0
    %3614 = vmatpush1.msra.mxu0 0.0
    %3615 = vmatprep.subr.mxu0 0.0
    %3616 = vmatpush1.msra.mxu0 0.0
    %3617 = vmatprep.subr.mxu0 0.0
    %3618 = vmatpush1.msra.mxu0 0.0
    %3619 = vmatprep.subr.mxu0 0.0
    %3620 = vmatpush1.msra.mxu0 0.0
    %3621 = vmatprep.subr.mxu0 0.0
    %3622 = vmatpush1.msra.mxu0 0.0
    %3623 = vmatprep.subr.mxu0 0.0
    %3624 = vmatpush1.msra.mxu0 0.0
    %3625 = vmatprep.subr.mxu0 0.0
    %3626 = vmatpush1.msra.mxu0 0.0
    %3627 = vmatprep.subr.mxu0 0.0
    %3628 = vmatpush1.msra.mxu0 0.0
    %3629 = vmatprep.subr.mxu0 0.0
    %3630 = vmatpush1.msra.mxu0 0.0
    %3631 = vmatprep.subr.mxu0 0.0
    %3632 = vmatpush1.msra.mxu0 0.0
    %3633 = vmatprep.subr.mxu0 0.0
    %3634 = vmatpush1.msra.mxu0 0.0
    %3635 = vmatprep.subr.mxu0 0.0
    %3636 = vmatpush1.msra.mxu0 0.0
    %3637 = vmatprep.subr.mxu0 0.0
    %3638 = vmatpush1.msra.mxu0 0.0
    %3639 = vmatprep.subr.mxu0 0.0
    %3640 = vmatpush1.msra.mxu0 0.0
    %3641 = vmatprep.subr.mxu0 0.0
    %3642 = vmatpush1.msra.mxu0 0.0
    %3643 = vmatprep.subr.mxu0 0.0
    %3644 = vmatpush1.msra.mxu0 0.0
    %3645 = vmatprep.subr.mxu0 0.0
    %3646 = vmatpush1.msra.mxu0 0.0
    %3647 = vmatprep.subr.mxu0 0.0
    %3648 = vmatpush1.msra.mxu0 0.0
    %3649 = vmatprep.subr.mxu0 0.0
    %3650 = vmatpush1.msra.mxu0 0.0
    %3651 = vmatprep.subr.mxu0 0.0
    %3652 = vmatpush1.msra.mxu0 0.0
    %3653 = vmatprep.subr.mxu0 0.0
    %3654 = vmatpush1.msra.mxu0 0.0
    %3655 = vmatprep.subr.mxu0 0.0
    %3656 = vmatpush1.msra.mxu0 0.0
    %3657 = vmatprep.subr.mxu0 0.0
    %3658 = vmatpush1.msra.mxu0 0.0
    %3659 = vmatprep.subr.mxu0 0.0
    %3660 = vmatpush1.msra.mxu0 0.0
    %3661 = vmatprep.subr.mxu0 0.0
    %3662 = vmatpush1.msra.mxu0 0.0
    %3663 = vmatprep.mubr.f32.mxu0 0.0
    %v3664 = vand.u32 %v858, 4294901760
    %v3665 = vsub.f32 %v858, %v3664
    %3666 = vmatmul.mubr.f32.gmra.mrb[0].mxu0 %v3665
    %v3667 = vpop.f32.mrb[0].mxu0
    %v3668 = vadd.f32 %v3591, %v3667
    %v3669 = vpop.f32.mrb[0].mxu0
    %v3670 = vadd.f32 %v3593, %v3669
    %3671 = vdwg.mxu0
    %v3672 = vand.u32 %v3433, 4294901760
    %3673 = vmatprep.subr.mxu0 %v3672
    %v3674 = vand.u32 %v3431, 4294901760
    %3675 = vmatpush1.msra.mxu0 %v3674
    %3676 = vmatprep.subr.mxu0 0.0
    %3677 = vmatpush1.msra.mxu0 0.0
    %3678 = vmatprep.subr.mxu0 0.0
    %3679 = vmatpush1.msra.mxu0 0.0
    %3680 = vmatprep.subr.mxu0 0.0
    %3681 = vmatpush1.msra.mxu0 0.0
    %3682 = vmatprep.subr.mxu0 0.0
    %3683 = vmatpush1.msra.mxu0 0.0
    %3684 = vmatprep.subr.mxu0 0.0
    %3685 = vmatpush1.msra.mxu0 0.0
    %3686 = vmatprep.subr.mxu0 0.0
    %3687 = vmatpush1.msra.mxu0 0.0
    %3688 = vmatprep.subr.mxu0 0.0
    %3689 = vmatpush1.msra.mxu0 0.0
    %3690 = vmatprep.subr.mxu0 0.0
    %3691 = vmatpush1.msra.mxu0 0.0
    %3692 = vmatprep.subr.mxu0 0.0
    %3693 = vmatpush1.msra.mxu0 0.0
    %3694 = vmatprep.subr.mxu0 0.0
    %3695 = vmatpush1.msra.mxu0 0.0
    %3696 = vmatprep.subr.mxu0 0.0
    %3697 = vmatpush1.msra.mxu0 0.0
    %3698 = vmatprep.subr.mxu0 0.0
    %3699 = vmatpush1.msra.mxu0 0.0
    %3700 = vmatprep.subr.mxu0 0.0
    %3701 = vmatpush1.msra.mxu0 0.0
    %3702 = vmatprep.subr.mxu0 0.0
    %3703 = vmatpush1.msra.mxu0 0.0
    %3704 = vmatprep.subr.mxu0 0.0
    %3705 = vmatpush1.msra.mxu0 0.0
    %3706 = vmatprep.subr.mxu0 0.0
    %3707 = vmatpush1.msra.mxu0 0.0
    %3708 = vmatprep.subr.mxu0 0.0
    %3709 = vmatpush1.msra.mxu0 0.0
    %3710 = vmatprep.subr.mxu0 0.0
    %3711 = vmatpush1.msra.mxu0 0.0
    %3712 = vmatprep.subr.mxu0 0.0
    %3713 = vmatpush1.msra.mxu0 0.0
    %3714 = vmatprep.subr.mxu0 0.0
    %3715 = vmatpush1.msra.mxu0 0.0
    %3716 = vmatprep.subr.mxu0 0.0
    %3717 = vmatpush1.msra.mxu0 0.0
    %3718 = vmatprep.subr.mxu0 0.0
    %3719 = vmatpush1.msra.mxu0 0.0
    %3720 = vmatprep.subr.mxu0 0.0
    %3721 = vmatpush1.msra.mxu0 0.0
    %3722 = vmatprep.subr.mxu0 0.0
    %3723 = vmatpush1.msra.mxu0 0.0
    %3724 = vmatprep.subr.mxu0 0.0
    %3725 = vmatpush1.msra.mxu0 0.0
    %3726 = vmatprep.subr.mxu0 0.0
    %3727 = vmatpush1.msra.mxu0 0.0
    %3728 = vmatprep.subr.mxu0 0.0
    %3729 = vmatpush1.msra.mxu0 0.0
    %3730 = vmatprep.subr.mxu0 0.0
    %3731 = vmatpush1.msra.mxu0 0.0
    %3732 = vmatprep.subr.mxu0 0.0
    %3733 = vmatpush1.msra.mxu0 0.0
    %3734 = vmatprep.subr.mxu0 0.0
    %3735 = vmatpush1.msra.mxu0 0.0
    %3736 = vmatprep.subr.mxu0 0.0
    %3737 = vmatpush1.msra.mxu0 0.0
    %3738 = vmatprep.mubr.f32.mxu0 0.0
    %v3739 = vand.u32 %v858, 4294901760
    %v3740 = vsub.f32 %v858, %v3739
    %v3741 = vand.u32 %v3740, 4294901760
    %3742 = vmatmul.mubr.f32.gmra.mrb[0].mxu0 %v3741
    %v3743 = vpop.f32.mrb[0].mxu0
    %v3744 = vadd.f32 %v3668, %v3743
    %v3745 = vpop.f32.mrb[0].mxu0
    %v3746 = vadd.f32 %v3670, %v3745
    %3747 = vdwg.mxu0
    %v3748 = vand.u32 %v3433, 4294901760
    %v3749 = vsub.f32 %v3433, %v3748
    %v3750 = vand.u32 %v3749, 4294901760
    %3751 = vmatprep.subr.mxu0 %v3750
    %v3752 = vand.u32 %v3431, 4294901760
    %v3753 = vsub.f32 %v3431, %v3752
    %v3754 = vand.u32 %v3753, 4294901760
    %3755 = vmatpush1.msra.mxu0 %v3754
    %3756 = vmatprep.subr.mxu0 0.0
    %3757 = vmatpush1.msra.mxu0 0.0
    %3758 = vmatprep.subr.mxu0 0.0
    %3759 = vmatpush1.msra.mxu0 0.0
    %3760 = vmatprep.subr.mxu0 0.0
    %3761 = vmatpush1.msra.mxu0 0.0
    %3762 = vmatprep.subr.mxu0 0.0
    %3763 = vmatpush1.msra.mxu0 0.0
    %3764 = vmatprep.subr.mxu0 0.0
    %3765 = vmatpush1.msra.mxu0 0.0
    %3766 = vmatprep.subr.mxu0 0.0
    %3767 = vmatpush1.msra.mxu0 0.0
    %3768 = vmatprep.subr.mxu0 0.0
    %3769 = vmatpush1.msra.mxu0 0.0
    %3770 = vmatprep.subr.mxu0 0.0
    %3771 = vmatpush1.msra.mxu0 0.0
    %3772 = vmatprep.subr.mxu0 0.0
    %3773 = vmatpush1.msra.mxu0 0.0
    %3774 = vmatprep.subr.mxu0 0.0
    %3775 = vmatpush1.msra.mxu0 0.0
    %3776 = vmatprep.subr.mxu0 0.0
    %3777 = vmatpush1.msra.mxu0 0.0
    %3778 = vmatprep.subr.mxu0 0.0
    %3779 = vmatpush1.msra.mxu0 0.0
    %3780 = vmatprep.subr.mxu0 0.0
    %3781 = vmatpush1.msra.mxu0 0.0
    %3782 = vmatprep.subr.mxu0 0.0
    %3783 = vmatpush1.msra.mxu0 0.0
    %3784 = vmatprep.subr.mxu0 0.0
    %3785 = vmatpush1.msra.mxu0 0.0
    %3786 = vmatprep.subr.mxu0 0.0
    %3787 = vmatpush1.msra.mxu0 0.0
    %3788 = vmatprep.subr.mxu0 0.0
    %3789 = vmatpush1.msra.mxu0 0.0
    %3790 = vmatprep.subr.mxu0 0.0
    %3791 = vmatpush1.msra.mxu0 0.0
    %3792 = vmatprep.subr.mxu0 0.0
    %3793 = vmatpush1.msra.mxu0 0.0
    %3794 = vmatprep.subr.mxu0 0.0
    %3795 = vmatpush1.msra.mxu0 0.0
    %3796 = vmatprep.subr.mxu0 0.0
    %3797 = vmatpush1.msra.mxu0 0.0
    %3798 = vmatprep.subr.mxu0 0.0
    %3799 = vmatpush1.msra.mxu0 0.0
    %3800 = vmatprep.subr.mxu0 0.0
    %3801 = vmatpush1.msra.mxu0 0.0
    %3802 = vmatprep.subr.mxu0 0.0
    %3803 = vmatpush1.msra.mxu0 0.0
    %3804 = vmatprep.subr.mxu0 0.0
    %3805 = vmatpush1.msra.mxu0 0.0
    %3806 = vmatprep.subr.mxu0 0.0
    %3807 = vmatpush1.msra.mxu0 0.0
    %3808 = vmatprep.subr.mxu0 0.0
    %3809 = vmatpush1.msra.mxu0 0.0
    %3810 = vmatprep.subr.mxu0 0.0
    %3811 = vmatpush1.msra.mxu0 0.0
    %3812 = vmatprep.subr.mxu0 0.0
    %3813 = vmatpush1.msra.mxu0 0.0
    %3814 = vmatprep.subr.mxu0 0.0
    %3815 = vmatpush1.msra.mxu0 0.0
    %3816 = vmatprep.subr.mxu0 0.0
    %3817 = vmatpush1.msra.mxu0 0.0
    %3818 = vmatprep.mubr.f32.mxu0 0.0
    %v3819 = vand.u32 %v858, 4294901760
    %3820 = vmatmul.mubr.f32.gmra.mrb[0].mxu0 %v3819
    %v3821 = vpop.f32.mrb[0].mxu0
    %v3822 = vadd.f32 %v3744, %v3821
    %v3823 = vpop.f32.mrb[0].mxu0
    %v3824 = vadd.f32 %v3746, %v3823
    %3825 = vdwg.mxu0
    %v3826 = vand.u32 %v3433, 4294901760
    %3827 = vmatprep.subr.mxu0 %v3826
    %v3828 = vand.u32 %v3431, 4294901760
    %3829 = vmatpush1.msra.mxu0 %v3828
    %3830 = vmatprep.subr.mxu0 0.0
    %3831 = vmatpush1.msra.mxu0 0.0
    %3832 = vmatprep.subr.mxu0 0.0
    %3833 = vmatpush1.msra.mxu0 0.0
    %3834 = vmatprep.subr.mxu0 0.0
    %3835 = vmatpush1.msra.mxu0 0.0
    %3836 = vmatprep.subr.mxu0 0.0
    %3837 = vmatpush1.msra.mxu0 0.0
    %3838 = vmatprep.subr.mxu0 0.0
    %3839 = vmatpush1.msra.mxu0 0.0
    %3840 = vmatprep.subr.mxu0 0.0
    %3841 = vmatpush1.msra.mxu0 0.0
    %3842 = vmatprep.subr.mxu0 0.0
    %3843 = vmatpush1.msra.mxu0 0.0
    %3844 = vmatprep.subr.mxu0 0.0
    %3845 = vmatpush1.msra.mxu0 0.0
    %3846 = vmatprep.subr.mxu0 0.0
    %3847 = vmatpush1.msra.mxu0 0.0
    %3848 = vmatprep.subr.mxu0 0.0
    %3849 = vmatpush1.msra.mxu0 0.0
    %3850 = vmatprep.subr.mxu0 0.0
    %3851 = vmatpush1.msra.mxu0 0.0
    %3852 = vmatprep.subr.mxu0 0.0
    %3853 = vmatpush1.msra.mxu0 0.0
    %3854 = vmatprep.subr.mxu0 0.0
    %3855 = vmatpush1.msra.mxu0 0.0
    %3856 = vmatprep.subr.mxu0 0.0
    %3857 = vmatpush1.msra.mxu0 0.0
    %3858 = vmatprep.subr.mxu0 0.0
    %3859 = vmatpush1.msra.mxu0 0.0
    %3860 = vmatprep.subr.mxu0 0.0
    %3861 = vmatpush1.msra.mxu0 0.0
    %3862 = vmatprep.subr.mxu0 0.0
    %3863 = vmatpush1.msra.mxu0 0.0
    %3864 = vmatprep.subr.mxu0 0.0
    %3865 = vmatpush1.msra.mxu0 0.0
    %3866 = vmatprep.subr.mxu0 0.0
    %3867 = vmatpush1.msra.mxu0 0.0
    %3868 = vmatprep.subr.mxu0 0.0
    %3869 = vmatpush1.msra.mxu0 0.0
    %3870 = vmatprep.subr.mxu0 0.0
    %3871 = vmatpush1.msra.mxu0 0.0
    %3872 = vmatprep.subr.mxu0 0.0
    %3873 = vmatpush1.msra.mxu0 0.0
    %3874 = vmatprep.subr.mxu0 0.0
    %3875 = vmatpush1.msra.mxu0 0.0
    %3876 = vmatprep.subr.mxu0 0.0
    %3877 = vmatpush1.msra.mxu0 0.0
    %3878 = vmatprep.subr.mxu0 0.0
    %3879 = vmatpush1.msra.mxu0 0.0
    %3880 = vmatprep.subr.mxu0 0.0
    %3881 = vmatpush1.msra.mxu0 0.0
    %3882 = vmatprep.subr.mxu0 0.0
    %3883 = vmatpush1.msra.mxu0 0.0
    %3884 = vmatprep.subr.mxu0 0.0
    %3885 = vmatpush1.msra.mxu0 0.0
    %3886 = vmatprep.subr.mxu0 0.0
    %3887 = vmatpush1.msra.mxu0 0.0
    %3888 = vmatprep.subr.mxu0 0.0
    %3889 = vmatpush1.msra.mxu0 0.0
    %3890 = vmatprep.subr.mxu0 0.0
    %3891 = vmatpush1.msra.mxu0 0.0
    %3892 = vmatprep.mubr.f32.mxu0 0.0
    %v3893 = vand.u32 %v858, 4294901760
    %3894 = vmatmul.mubr.f32.gmra.mrb[0].mxu0 %v3893
    %v3895 = vpop.f32.mrb[0].mxu0
    %v3896 = vadd.f32 %v3822, %v3895
    %v3897 = vpop.f32.mrb[0].mxu0
    %v3898 = vadd.f32 %v3824, %v3897
    %3899 = vdwg.mxu0
    %v3900 = vadd.f32 %v3896, %v3898
    %3901 = vadd.xlane.f32.xlu0 %v3900
    %v3902 = vpop.xlane.xlu0 %3901
    %v3903 = vmul.f32 %v3431, %v3431
    %v3904 = vmul.f32 %v3433, %v3433
    %v3905 = vand.u32 %v3904, 4294901760
    %3906 = vmatprep.subr.mxu0 %v3905
    %v3907 = vand.u32 %v3903, 4294901760
    %3908 = vmatpush1.msra.mxu0 %v3907
    %3909 = vmatprep.subr.mxu0 0.0
    %3910 = vmatpush1.msra.mxu0 0.0
    %3911 = vmatprep.subr.mxu0 0.0
    %3912 = vmatpush1.msra.mxu0 0.0
    %3913 = vmatprep.subr.mxu0 0.0
    %3914 = vmatpush1.msra.mxu0 0.0
    %3915 = vmatprep.subr.mxu0 0.0
    %3916 = vmatpush1.msra.mxu0 0.0
    %3917 = vmatprep.subr.mxu0 0.0
    %3918 = vmatpush1.msra.mxu0 0.0
    %3919 = vmatprep.subr.mxu0 0.0
    %3920 = vmatpush1.msra.mxu0 0.0
    %3921 = vmatprep.subr.mxu0 0.0
    %3922 = vmatpush1.msra.mxu0 0.0
    %3923 = vmatprep.subr.mxu0 0.0
    %3924 = vmatpush1.msra.mxu0 0.0
    %3925 = vmatprep.subr.mxu0 0.0
    %3926 = vmatpush1.msra.mxu0 0.0
    %3927 = vmatprep.subr.mxu0 0.0
    %3928 = vmatpush1.msra.mxu0 0.0
    %3929 = vmatprep.subr.mxu0 0.0
    %3930 = vmatpush1.msra.mxu0 0.0
    %3931 = vmatprep.subr.mxu0 0.0
    %3932 = vmatpush1.msra.mxu0 0.0
    %3933 = vmatprep.subr.mxu0 0.0
    %3934 = vmatpush1.msra.mxu0 0.0
    %3935 = vmatprep.subr.mxu0 0.0
    %3936 = vmatpush1.msra.mxu0 0.0
    %3937 = vmatprep.subr.mxu0 0.0
    %3938 = vmatpush1.msra.mxu0 0.0
    %3939 = vmatprep.subr.mxu0 0.0
    %3940 = vmatpush1.msra.mxu0 0.0
    %3941 = vmatprep.subr.mxu0 0.0
    %3942 = vmatpush1.msra.mxu0 0.0
    %3943 = vmatprep.subr.mxu0 0.0
    %3944 = vmatpush1.msra.mxu0 0.0
    %3945 = vmatprep.subr.mxu0 0.0
    %3946 = vmatpush1.msra.mxu0 0.0
    %3947 = vmatprep.subr.mxu0 0.0
    %3948 = vmatpush1.msra.mxu0 0.0
    %3949 = vmatprep.subr.mxu0 0.0
    %3950 = vmatpush1.msra.mxu0 0.0
    %3951 = vmatprep.subr.mxu0 0.0
    %3952 = vmatpush1.msra.mxu0 0.0
    %3953 = vmatprep.subr.mxu0 0.0
    %3954 = vmatpush1.msra.mxu0 0.0
    %3955 = vmatprep.subr.mxu0 0.0
    %3956 = vmatpush1.msra.mxu0 0.0
    %3957 = vmatprep.subr.mxu0 0.0
    %3958 = vmatpush1.msra.mxu0 0.0
    %3959 = vmatprep.subr.mxu0 0.0
    %3960 = vmatpush1.msra.mxu0 0.0
    %3961 = vmatprep.subr.mxu0 0.0
    %3962 = vmatpush1.msra.mxu0 0.0
    %3963 = vmatprep.subr.mxu0 0.0
    %3964 = vmatpush1.msra.mxu0 0.0
    %3965 = vmatprep.subr.mxu0 0.0
    %3966 = vmatpush1.msra.mxu0 0.0
    %3967 = vmatprep.subr.mxu0 0.0
    %3968 = vmatpush1.msra.mxu0 0.0
    %3969 = vmatprep.subr.mxu0 0.0
    %3970 = vmatpush1.msra.mxu0 0.0
    %3971 = vmatprep.mubr.f32.mxu0 0.0
    %v3972 = vand.u32 %v858, 4294901760
    %v3973 = vsub.f32 %v858, %v3972
    %v3974 = vand.u32 %v3973, 4294901760
    %v3975 = vsub.f32 %v3973, %v3974
    %v3976 = vand.u32 %v3975, 4294901760
    %3977 = vmatmul.mubr.f32.gmra.mrb[0].mxu0 %v3976
    %v3978 = vpop.f32.mrb[0].mxu0
    %v3979 = vadd.f32 0.0, %v3978
    %v3980 = vpop.f32.mrb[0].mxu0
    %v3981 = vadd.f32 0.0, %v3980
    %3982 = vdwg.mxu0
    %v3983 = vand.u32 %v3904, 4294901760
    %v3984 = vsub.f32 %v3904, %v3983
    %v3985 = vand.u32 %v3984, 4294901760
    %v3986 = vsub.f32 %v3984, %v3985
    %v3987 = vand.u32 %v3986, 4294901760
    %3988 = vmatprep.subr.mxu0 %v3987
    %v3989 = vand.u32 %v3903, 4294901760
    %v3990 = vsub.f32 %v3903, %v3989
    %v3991 = vand.u32 %v3990, 4294901760
    %v3992 = vsub.f32 %v3990, %v3991
    %v3993 = vand.u32 %v3992, 4294901760
    %3994 = vmatpush1.msra.mxu0 %v3993
    %3995 = vmatprep.subr.mxu0 0.0
    %3996 = vmatpush1.msra.mxu0 0.0
    %3997 = vmatprep.subr.mxu0 0.0
    %3998 = vmatpush1.msra.mxu0 0.0
    %3999 = vmatprep.subr.mxu0 0.0
    %4000 = vmatpush1.msra.mxu0 0.0
    %4001 = vmatprep.subr.mxu0 0.0
    %4002 = vmatpush1.msra.mxu0 0.0
    %4003 = vmatprep.subr.mxu0 0.0
    %4004 = vmatpush1.msra.mxu0 0.0
    %4005 = vmatprep.subr.mxu0 0.0
    %4006 = vmatpush1.msra.mxu0 0.0
    %4007 = vmatprep.subr.mxu0 0.0
    %4008 = vmatpush1.msra.mxu0 0.0
    %4009 = vmatprep.subr.mxu0 0.0
    %4010 = vmatpush1.msra.mxu0 0.0
    %4011 = vmatprep.subr.mxu0 0.0
    %4012 = vmatpush1.msra.mxu0 0.0
    %4013 = vmatprep.subr.mxu0 0.0
    %4014 = vmatpush1.msra.mxu0 0.0
    %4015 = vmatprep.subr.mxu0 0.0
    %4016 = vmatpush1.msra.mxu0 0.0
    %4017 = vmatprep.subr.mxu0 0.0
    %4018 = vmatpush1.msra.mxu0 0.0
    %4019 = vmatprep.subr.mxu0 0.0
    %4020 = vmatpush1.msra.mxu0 0.0
    %4021 = vmatprep.subr.mxu0 0.0
    %4022 = vmatpush1.msra.mxu0 0.0
    %4023 = vmatprep.subr.mxu0 0.0
    %4024 = vmatpush1.msra.mxu0 0.0
    %4025 = vmatprep.subr.mxu0 0.0
    %4026 = vmatpush1.msra.mxu0 0.0
    %4027 = vmatprep.subr.mxu0 0.0
    %4028 = vmatpush1.msra.mxu0 0.0
    %4029 = vmatprep.subr.mxu0 0.0
    %4030 = vmatpush1.msra.mxu0 0.0
    %4031 = vmatprep.subr.mxu0 0.0
    %4032 = vmatpush1.msra.mxu0 0.0
    %4033 = vmatprep.subr.mxu0 0.0
    %4034 = vmatpush1.msra.mxu0 0.0
    %4035 = vmatprep.subr.mxu0 0.0
    %4036 = vmatpush1.msra.mxu0 0.0
    %4037 = vmatprep.subr.mxu0 0.0
    %4038 = vmatpush1.msra.mxu0 0.0
    %4039 = vmatprep.subr.mxu0 0.0
    %4040 = vmatpush1.msra.mxu0 0.0
    %4041 = vmatprep.subr.mxu0 0.0
    %4042 = vmatpush1.msra.mxu0 0.0
    %4043 = vmatprep.subr.mxu0 0.0
    %4044 = vmatpush1.msra.mxu0 0.0
    %4045 = vmatprep.subr.mxu0 0.0
    %4046 = vmatpush1.msra.mxu0 0.0
    %4047 = vmatprep.subr.mxu0 0.0
    %4048 = vmatpush1.msra.mxu0 0.0
    %4049 = vmatprep.subr.mxu0 0.0
    %4050 = vmatpush1.msra.mxu0 0.0
    %4051 = vmatprep.subr.mxu0 0.0
    %4052 = vmatpush1.msra.mxu0 0.0
    %4053 = vmatprep.subr.mxu0 0.0
    %4054 = vmatpush1.msra.mxu0 0.0
    %4055 = vmatprep.subr.mxu0 0.0
    %4056 = vmatpush1.msra.mxu0 0.0
    %4057 = vmatprep.mubr.f32.mxu0 0.0
    %v4058 = vand.u32 %v858, 4294901760
    %4059 = vmatmul.mubr.f32.gmra.mrb[0].mxu0 %v4058
    %v4060 = vpop.f32.mrb[0].mxu0
    %v4061 = vadd.f32 %v3979, %v4060
    %v4062 = vpop.f32.mrb[0].mxu0
    %v4063 = vadd.f32 %v3981, %v4062
    %4064 = vdwg.mxu0
    %v4065 = vand.u32 %v3904, 4294901760
    %v4066 = vsub.f32 %v3904, %v4065
    %4067 = vmatprep.subr.mxu0 %v4066
    %v4068 = vand.u32 %v3903, 4294901760
    %v4069 = vsub.f32 %v3903, %v4068
    %4070 = vmatpush1.msra.mxu0 %v4069
    %4071 = vmatprep.subr.mxu0 0.0
    %4072 = vmatpush1.msra.mxu0 0.0
    %4073 = vmatprep.subr.mxu0 0.0
    %4074 = vmatpush1.msra.mxu0 0.0
    %4075 = vmatprep.subr.mxu0 0.0
    %4076 = vmatpush1.msra.mxu0 0.0
    %4077 = vmatprep.subr.mxu0 0.0
    %4078 = vmatpush1.msra.mxu0 0.0
    %4079 = vmatprep.subr.mxu0 0.0
    %4080 = vmatpush1.msra.mxu0 0.0
    %4081 = vmatprep.subr.mxu0 0.0
    %4082 = vmatpush1.msra.mxu0 0.0
    %4083 = vmatprep.subr.mxu0 0.0
    %4084 = vmatpush1.msra.mxu0 0.0
    %4085 = vmatprep.subr.mxu0 0.0
    %4086 = vmatpush1.msra.mxu0 0.0
    %4087 = vmatprep.subr.mxu0 0.0
    %4088 = vmatpush1.msra.mxu0 0.0
    %4089 = vmatprep.subr.mxu0 0.0
    %4090 = vmatpush1.msra.mxu0 0.0
    %4091 = vmatprep.subr.mxu0 0.0
    %4092 = vmatpush1.msra.mxu0 0.0
    %4093 = vmatprep.subr.mxu0 0.0
    %4094 = vmatpush1.msra.mxu0 0.0
    %4095 = vmatprep.subr.mxu0 0.0
    %4096 = vmatpush1.msra.mxu0 0.0
    %4097 = vmatprep.subr.mxu0 0.0
    %4098 = vmatpush1.msra.mxu0 0.0
    %4099 = vmatprep.subr.mxu0 0.0
    %4100 = vmatpush1.msra.mxu0 0.0
    %4101 = vmatprep.subr.mxu0 0.0
    %4102 = vmatpush1.msra.mxu0 0.0
    %4103 = vmatprep.subr.mxu0 0.0
    %4104 = vmatpush1.msra.mxu0 0.0
    %4105 = vmatprep.subr.mxu0 0.0
    %4106 = vmatpush1.msra.mxu0 0.0
    %4107 = vmatprep.subr.mxu0 0.0
    %4108 = vmatpush1.msra.mxu0 0.0
    %4109 = vmatprep.subr.mxu0 0.0
    %4110 = vmatpush1.msra.mxu0 0.0
    %4111 = vmatprep.subr.mxu0 0.0
    %4112 = vmatpush1.msra.mxu0 0.0
    %4113 = vmatprep.subr.mxu0 0.0
    %4114 = vmatpush1.msra.mxu0 0.0
    %4115 = vmatprep.subr.mxu0 0.0
    %4116 = vmatpush1.msra.mxu0 0.0
    %4117 = vmatprep.subr.mxu0 0.0
    %4118 = vmatpush1.msra.mxu0 0.0
    %4119 = vmatprep.subr.mxu0 0.0
    %4120 = vmatpush1.msra.mxu0 0.0
    %4121 = vmatprep.subr.mxu0 0.0
    %4122 = vmatpush1.msra.mxu0 0.0
    %4123 = vmatprep.subr.mxu0 0.0
    %4124 = vmatpush1.msra.mxu0 0.0
    %4125 = vmatprep.subr.mxu0 0.0
    %4126 = vmatpush1.msra.mxu0 0.0
    %4127 = vmatprep.subr.mxu0 0.0
    %4128 = vmatpush1.msra.mxu0 0.0
    %4129 = vmatprep.subr.mxu0 0.0
    %4130 = vmatpush1.msra.mxu0 0.0
    %4131 = vmatprep.subr.mxu0 0.0
    %4132 = vmatpush1.msra.mxu0 0.0
    %4133 = vmatprep.mubr.f32.mxu0 0.0
    %v4134 = vand.u32 %v858, 4294901760
    %v4135 = vsub.f32 %v858, %v4134
    %4136 = vmatmul.mubr.f32.gmra.mrb[0].mxu0 %v4135
    %v4137 = vpop.f32.mrb[0].mxu0
    %v4138 = vadd.f32 %v4061, %v4137
    %v4139 = vpop.f32.mrb[0].mxu0
    %v4140 = vadd.f32 %v4063, %v4139
    %4141 = vdwg.mxu0
    %v4142 = vand.u32 %v3904, 4294901760
    %4143 = vmatprep.subr.mxu0 %v4142
    %v4144 = vand.u32 %v3903, 4294901760
    %4145 = vmatpush1.msra.mxu0 %v4144
    %4146 = vmatprep.subr.mxu0 0.0
    %4147 = vmatpush1.msra.mxu0 0.0
    %4148 = vmatprep.subr.mxu0 0.0
    %4149 = vmatpush1.msra.mxu0 0.0
    %4150 = vmatprep.subr.mxu0 0.0
    %4151 = vmatpush1.msra.mxu0 0.0
    %4152 = vmatprep.subr.mxu0 0.0
    %4153 = vmatpush1.msra.mxu0 0.0
    %4154 = vmatprep.subr.mxu0 0.0
    %4155 = vmatpush1.msra.mxu0 0.0
    %4156 = vmatprep.subr.mxu0 0.0
    %4157 = vmatpush1.msra.mxu0 0.0
    %4158 = vmatprep.subr.mxu0 0.0
    %4159 = vmatpush1.msra.mxu0 0.0
    %4160 = vmatprep.subr.mxu0 0.0
    %4161 = vmatpush1.msra.mxu0 0.0
    %4162 = vmatprep.subr.mxu0 0.0
    %4163 = vmatpush1.msra.mxu0 0.0
    %4164 = vmatprep.subr.mxu0 0.0
    %4165 = vmatpush1.msra.mxu0 0.0
    %4166 = vmatprep.subr.mxu0 0.0
    %4167 = vmatpush1.msra.mxu0 0.0
    %4168 = vmatprep.subr.mxu0 0.0
    %4169 = vmatpush1.msra.mxu0 0.0
    %4170 = vmatprep.subr.mxu0 0.0
    %4171 = vmatpush1.msra.mxu0 0.0
    %4172 = vmatprep.subr.mxu0 0.0
    %4173 = vmatpush1.msra.mxu0 0.0
    %4174 = vmatprep.subr.mxu0 0.0
    %4175 = vmatpush1.msra.mxu0 0.0
    %4176 = vmatprep.subr.mxu0 0.0
    %4177 = vmatpush1.msra.mxu0 0.0
    %4178 = vmatprep.subr.mxu0 0.0
    %4179 = vmatpush1.msra.mxu0 0.0
    %4180 = vmatprep.subr.mxu0 0.0
    %4181 = vmatpush1.msra.mxu0 0.0
    %4182 = vmatprep.subr.mxu0 0.0
    %4183 = vmatpush1.msra.mxu0 0.0
    %4184 = vmatprep.subr.mxu0 0.0
    %4185 = vmatpush1.msra.mxu0 0.0
    %4186 = vmatprep.subr.mxu0 0.0
    %4187 = vmatpush1.msra.mxu0 0.0
    %4188 = vmatprep.subr.mxu0 0.0
    %4189 = vmatpush1.msra.mxu0 0.0
    %4190 = vmatprep.subr.mxu0 0.0
    %4191 = vmatpush1.msra.mxu0 0.0
    %4192 = vmatprep.subr.mxu0 0.0
    %4193 = vmatpush1.msra.mxu0 0.0
    %4194 = vmatprep.subr.mxu0 0.0
    %4195 = vmatpush1.msra.mxu0 0.0
    %4196 = vmatprep.subr.mxu0 0.0
    %4197 = vmatpush1.msra.mxu0 0.0
    %4198 = vmatprep.subr.mxu0 0.0
    %4199 = vmatpush1.msra.mxu0 0.0
    %4200 = vmatprep.subr.mxu0 0.0
    %4201 = vmatpush1.msra.mxu0 0.0
    %4202 = vmatprep.subr.mxu0 0.0
    %4203 = vmatpush1.msra.mxu0 0.0
    %4204 = vmatprep.subr.mxu0 0.0
    %4205 = vmatpush1.msra.mxu0 0.0
    %4206 = vmatprep.subr.mxu0 0.0
    %4207 = vmatpush1.msra.mxu0 0.0
    %4208 = vmatprep.mubr.f32.mxu0 0.0
    %v4209 = vand.u32 %v858, 4294901760
    %v4210 = vsub.f32 %v858, %v4209
    %v4211 = vand.u32 %v4210, 4294901760
    %4212 = vmatmul.mubr.f32.gmra.mrb[0].mxu0 %v4211
    %v4213 = vpop.f32.mrb[0].mxu0
    %v4214 = vadd.f32 %v4138, %v4213
    %v4215 = vpop.f32.mrb[0].mxu0
    %v4216 = vadd.f32 %v4140, %v4215
    %4217 = vdwg.mxu0
    %v4218 = vand.u32 %v3904, 4294901760
    %v4219 = vsub.f32 %v3904, %v4218
    %v4220 = vand.u32 %v4219, 4294901760
    %4221 = vmatprep.subr.mxu0 %v4220
    %v4222 = vand.u32 %v3903, 4294901760
    %v4223 = vsub.f32 %v3903, %v4222
    %v4224 = vand.u32 %v4223, 4294901760
    %4225 = vmatpush1.msra.mxu0 %v4224
    %4226 = vmatprep.subr.mxu0 0.0
    %4227 = vmatpush1.msra.mxu0 0.0
    %4228 = vmatprep.subr.mxu0 0.0
    %4229 = vmatpush1.msra.mxu0 0.0
    %4230 = vmatprep.subr.mxu0 0.0
    %4231 = vmatpush1.msra.mxu0 0.0
    %4232 = vmatprep.subr.mxu0 0.0
    %4233 = vmatpush1.msra.mxu0 0.0
    %4234 = vmatprep.subr.mxu0 0.0
    %4235 = vmatpush1.msra.mxu0 0.0
    %4236 = vmatprep.subr.mxu0 0.0
    %4237 = vmatpush1.msra.mxu0 0.0
    %4238 = vmatprep.subr.mxu0 0.0
    %4239 = vmatpush1.msra.mxu0 0.0
    %4240 = vmatprep.subr.mxu0 0.0
    %4241 = vmatpush1.msra.mxu0 0.0
    %4242 = vmatprep.subr.mxu0 0.0
    %4243 = vmatpush1.msra.mxu0 0.0
    %4244 = vmatprep.subr.mxu0 0.0
    %4245 = vmatpush1.msra.mxu0 0.0
    %4246 = vmatprep.subr.mxu0 0.0
    %4247 = vmatpush1.msra.mxu0 0.0
    %4248 = vmatprep.subr.mxu0 0.0
    %4249 = vmatpush1.msra.mxu0 0.0
    %4250 = vmatprep.subr.mxu0 0.0
    %4251 = vmatpush1.msra.mxu0 0.0
    %4252 = vmatprep.subr.mxu0 0.0
    %4253 = vmatpush1.msra.mxu0 0.0
    %4254 = vmatprep.subr.mxu0 0.0
    %4255 = vmatpush1.msra.mxu0 0.0
    %4256 = vmatprep.subr.mxu0 0.0
    %4257 = vmatpush1.msra.mxu0 0.0
    %4258 = vmatprep.subr.mxu0 0.0
    %4259 = vmatpush1.msra.mxu0 0.0
    %4260 = vmatprep.subr.mxu0 0.0
    %4261 = vmatpush1.msra.mxu0 0.0
    %4262 = vmatprep.subr.mxu0 0.0
    %4263 = vmatpush1.msra.mxu0 0.0
    %4264 = vmatprep.subr.mxu0 0.0
    %4265 = vmatpush1.msra.mxu0 0.0
    %4266 = vmatprep.subr.mxu0 0.0
    %4267 = vmatpush1.msra.mxu0 0.0
    %4268 = vmatprep.subr.mxu0 0.0
    %4269 = vmatpush1.msra.mxu0 0.0
    %4270 = vmatprep.subr.mxu0 0.0
    %4271 = vmatpush1.msra.mxu0 0.0
    %4272 = vmatprep.subr.mxu0 0.0
    %4273 = vmatpush1.msra.mxu0 0.0
    %4274 = vmatprep.subr.mxu0 0.0
    %4275 = vmatpush1.msra.mxu0 0.0
    %4276 = vmatprep.subr.mxu0 0.0
    %4277 = vmatpush1.msra.mxu0 0.0
    %4278 = vmatprep.subr.mxu0 0.0
    %4279 = vmatpush1.msra.mxu0 0.0
    %4280 = vmatprep.subr.mxu0 0.0
    %4281 = vmatpush1.msra.mxu0 0.0
    %4282 = vmatprep.subr.mxu0 0.0
    %4283 = vmatpush1.msra.mxu0 0.0
    %4284 = vmatprep.subr.mxu0 0.0
    %4285 = vmatpush1.msra.mxu0 0.0
    %4286 = vmatprep.subr.mxu0 0.0
    %4287 = vmatpush1.msra.mxu0 0.0
    %4288 = vmatprep.mubr.f32.mxu0 0.0
    %v4289 = vand.u32 %v858, 4294901760
    %4290 = vmatmul.mubr.f32.gmra.mrb[0].mxu0 %v4289
    %v4291 = vpop.f32.mrb[0].mxu0
    %v4292 = vadd.f32 %v4214, %v4291
    %v4293 = vpop.f32.mrb[0].mxu0
    %v4294 = vadd.f32 %v4216, %v4293
    %4295 = vdwg.mxu0
    %v4296 = vand.u32 %v3904, 4294901760
    %4297 = vmatprep.subr.mxu0 %v4296
    %v4298 = vand.u32 %v3903, 4294901760
    %4299 = vmatpush1.msra.mxu0 %v4298
    %4300 = vmatprep.subr.mxu0 0.0
    %4301 = vmatpush1.msra.mxu0 0.0
    %4302 = vmatprep.subr.mxu0 0.0
    %4303 = vmatpush1.msra.mxu0 0.0
    %4304 = vmatprep.subr.mxu0 0.0
    %4305 = vmatpush1.msra.mxu0 0.0
    %4306 = vmatprep.subr.mxu0 0.0
    %4307 = vmatpush1.msra.mxu0 0.0
    %4308 = vmatprep.subr.mxu0 0.0
    %4309 = vmatpush1.msra.mxu0 0.0
    %4310 = vmatprep.subr.mxu0 0.0
    %4311 = vmatpush1.msra.mxu0 0.0
    %4312 = vmatprep.subr.mxu0 0.0
    %4313 = vmatpush1.msra.mxu0 0.0
    %4314 = vmatprep.subr.mxu0 0.0
    %4315 = vmatpush1.msra.mxu0 0.0
    %4316 = vmatprep.subr.mxu0 0.0
    %4317 = vmatpush1.msra.mxu0 0.0
    %4318 = vmatprep.subr.mxu0 0.0
    %4319 = vmatpush1.msra.mxu0 0.0
    %4320 = vmatprep.subr.mxu0 0.0
    %4321 = vmatpush1.msra.mxu0 0.0
    %4322 = vmatprep.subr.mxu0 0.0
    %4323 = vmatpush1.msra.mxu0 0.0
    %4324 = vmatprep.subr.mxu0 0.0
    %4325 = vmatpush1.msra.mxu0 0.0
    %4326 = vmatprep.subr.mxu0 0.0
    %4327 = vmatpush1.msra.mxu0 0.0
    %4328 = vmatprep.subr.mxu0 0.0
    %4329 = vmatpush1.msra.mxu0 0.0
    %4330 = vmatprep.subr.mxu0 0.0
    %4331 = vmatpush1.msra.mxu0 0.0
    %4332 = vmatprep.subr.mxu0 0.0
    %4333 = vmatpush1.msra.mxu0 0.0
    %4334 = vmatprep.subr.mxu0 0.0
    %4335 = vmatpush1.msra.mxu0 0.0
    %4336 = vmatprep.subr.mxu0 0.0
    %4337 = vmatpush1.msra.mxu0 0.0
    %4338 = vmatprep.subr.mxu0 0.0
    %4339 = vmatpush1.msra.mxu0 0.0
    %4340 = vmatprep.subr.mxu0 0.0
    %4341 = vmatpush1.msra.mxu0 0.0
    %4342 = vmatprep.subr.mxu0 0.0
    %4343 = vmatpush1.msra.mxu0 0.0
    %4344 = vmatprep.subr.mxu0 0.0
    %4345 = vmatpush1.msra.mxu0 0.0
    %4346 = vmatprep.subr.mxu0 0.0
    %4347 = vmatpush1.msra.mxu0 0.0
    %4348 = vmatprep.subr.mxu0 0.0
    %4349 = vmatpush1.msra.mxu0 0.0
    %4350 = vmatprep.subr.mxu0 0.0
    %4351 = vmatpush1.msra.mxu0 0.0
    %4352 = vmatprep.subr.mxu0 0.0
    %4353 = vmatpush1.msra.mxu0 0.0
    %4354 = vmatprep.subr.mxu0 0.0
    %4355 = vmatpush1.msra.mxu0 0.0
    %4356 = vmatprep.subr.mxu0 0.0
    %4357 = vmatpush1.msra.mxu0 0.0
    %4358 = vmatprep.subr.mxu0 0.0
    %4359 = vmatpush1.msra.mxu0 0.0
    %4360 = vmatprep.subr.mxu0 0.0
    %4361 = vmatpush1.msra.mxu0 0.0
    %4362 = vmatprep.mubr.f32.mxu0 0.0
    %v4363 = vand.u32 %v858, 4294901760
    %4364 = vmatmul.mubr.f32.gmra.mrb[0].mxu0 %v4363
    %v4365 = vpop.f32.mrb[0].mxu0
    %v4366 = vadd.f32 %v4292, %v4365
    %v4367 = vpop.f32.mrb[0].mxu0
    %v4368 = vadd.f32 %v4294, %v4367
    %4369 = vdwg.mxu0
    %v4370 = vadd.f32 %v4366, %v4368
    %4371 = vadd.xlane.f32.xlu0 %v4370
    %v4372 = vpop.xlane.xlu0 %4371
    %v4373 = vmul.f32 %v3902, %v3902
    %v4374 = vsub.f32 %v4372, %v4373
    %v4375 = vld [vmem:[%s9] sm:$0xff]
    %v4376 = vld [vmem:[%s10] sm:$0xff]
    %v4377 = vsub.f32 %v3431, %v3902
    %v4378 = vsub.f32 %v3433, %v3902
    %v4379 = vadd.f32 %v4374, 1e-05
    %v4380 = vrsqrt.pop %v4379
    %v4381 = vmul.f32 %v4375, %v4380
    %4383 = vset.pattern.permute.xlu0 0
    %4384 = vperm.xlu0 %4383, %v4381
    %v4385 = vpop.permute.xlu0 %4384
    %v4387 = vmul.f32 %v4377, %v4385
    %v4388 = vmul.f32 %v4378, %v4385
    %4390 = vset.pattern.permute.xlu0 0
    %4391 = vperm.xlu0 %4390, %v4376
    %v4392 = vpop.permute.xlu0 %4391
    %v4394 = vadd.f32 %v4387, %v4392
    %v4395 = vadd.f32 %v4388, %v4392
    %vm4396 = vcmp.ge.f32.partialorder %v4394, 0.0
    %vm4397 = vcmp.ge.f32.partialorder %v4395, 0.0
    %v4398 = vmul.f32 %v4394, 0.2
    %v4399 = vmul.f32 %v4395, 0.2
    %v4400 = vsel %vm4396, %v4394, %v4398
    %v4401 = vsel %vm4397, %v4395, %v4399
    %v4402 = vadd.f32 %v4400, %v2296
    %v4403 = vadd.f32 %v4401, %v2297
    %v4404 = vand.u32 %v4403, 4294901760
    %4405 = vmatprep.subr.mxu0 %v4404
    %v4406 = vand.u32 %v4402, 4294901760
    %4407 = vmatpush1.msra.mxu0 %v4406
    %4408 = vmatprep.subr.mxu0 0.0
    %4409 = vmatpush1.msra.mxu0 0.0
    %4410 = vmatprep.subr.mxu0 0.0
    %4411 = vmatpush1.msra.mxu0 0.0
    %4412 = vmatprep.subr.mxu0 0.0
    %4413 = vmatpush1.msra.mxu0 0.0
    %4414 = vmatprep.subr.mxu0 0.0
    %4415 = vmatpush1.msra.mxu0 0.0
    %4416 = vmatprep.subr.mxu0 0.0
    %4417 = vmatpush1.msra.mxu0 0.0
    %4418 = vmatprep.subr.mxu0 0.0
    %4419 = vmatpush1.msra.mxu0 0.0
    %4420 = vmatprep.subr.mxu0 0.0
    %4421 = vmatpush1.msra.mxu0 0.0
    %4422 = vmatprep.subr.mxu0 0.0
    %4423 = vmatpush1.msra.mxu0 0.0
    %4424 = vmatprep.subr.mxu0 0.0
    %4425 = vmatpush1.msra.mxu0 0.0
    %4426 = vmatprep.subr.mxu0 0.0
    %4427 = vmatpush1.msra.mxu0 0.0
    %4428 = vmatprep.subr.mxu0 0.0
    %4429 = vmatpush1.msra.mxu0 0.0
    %4430 = vmatprep.subr.mxu0 0.0
    %4431 = vmatpush1.msra.mxu0 0.0
    %4432 = vmatprep.subr.mxu0 0.0
    %4433 = vmatpush1.msra.mxu0 0.0
    %4434 = vmatprep.subr.mxu0 0.0
    %4435 = vmatpush1.msra.mxu0 0.0
    %4436 = vmatprep.subr.mxu0 0.0
    %4437 = vmatpush1.msra.mxu0 0.0
    %4438 = vmatprep.subr.mxu0 0.0
    %4439 = vmatpush1.msra.mxu0 0.0
    %4440 = vmatprep.subr.mxu0 0.0
    %4441 = vmatpush1.msra.mxu0 0.0
    %4442 = vmatprep.subr.mxu0 0.0
    %4443 = vmatpush1.msra.mxu0 0.0
    %4444 = vmatprep.subr.mxu0 0.0
    %4445 = vmatpush1.msra.mxu0 0.0
    %4446 = vmatprep.subr.mxu0 0.0
    %4447 = vmatpush1.msra.mxu0 0.0
    %4448 = vmatprep.subr.mxu0 0.0
    %4449 = vmatpush1.msra.mxu0 0.0
    %4450 = vmatprep.subr.mxu0 0.0
    %4451 = vmatpush1.msra.mxu0 0.0
    %4452 = vmatprep.subr.mxu0 0.0
    %4453 = vmatpush1.msra.mxu0 0.0
    %4454 = vmatprep.subr.mxu0 0.0
    %4455 = vmatpush1.msra.mxu0 0.0
    %4456 = vmatprep.subr.mxu0 0.0
    %4457 = vmatpush1.msra.mxu0 0.0
    %4458 = vmatprep.subr.mxu0 0.0
    %4459 = vmatpush1.msra.mxu0 0.0
    %4460 = vmatprep.subr.mxu0 0.0
    %4461 = vmatpush1.msra.mxu0 0.0
    %4462 = vmatprep.subr.mxu0 0.0
    %4463 = vmatpush1.msra.mxu0 0.0
    %4464 = vmatprep.subr.mxu0 0.0
    %4465 = vmatpush1.msra.mxu0 0.0
    %4466 = vmatprep.subr.mxu0 0.0
    %4467 = vmatpush1.msra.mxu0 0.0
    %4468 = vmatprep.subr.mxu0 0.0
    %4469 = vmatpush1.msra.mxu0 0.0
    %4470 = vmatprep.mubr.f32.mxu0 0.0
    %v4471 = vand.u32 %v858, 4294901760
    %v4472 = vsub.f32 %v858, %v4471
    %v4473 = vand.u32 %v4472, 4294901760
    %v4474 = vsub.f32 %v4472, %v4473
    %v4475 = vand.u32 %v4474, 4294901760
    %4476 = vmatmul.mubr.f32.gmra.mrb[0].mxu0 %v4475
    %v4477 = vpop.f32.mrb[0].mxu0
    %v4478 = vadd.f32 0.0, %v4477
    %v4479 = vpop.f32.mrb[0].mxu0
    %v4480 = vadd.f32 0.0, %v4479
    %4481 = vdwg.mxu0
    %v4482 = vand.u32 %v4403, 4294901760
    %v4483 = vsub.f32 %v4403, %v4482
    %v4484 = vand.u32 %v4483, 4294901760
    %v4485 = vsub.f32 %v4483, %v4484
    %v4486 = vand.u32 %v4485, 4294901760
    %4487 = vmatprep.subr.mxu0 %v4486
    %v4488 = vand.u32 %v4402, 4294901760
    %v4489 = vsub.f32 %v4402, %v4488
    %v4490 = vand.u32 %v4489, 4294901760
    %v4491 = vsub.f32 %v4489, %v4490
    %v4492 = vand.u32 %v4491, 4294901760
    %4493 = vmatpush1.msra.mxu0 %v4492
    %4494 = vmatprep.subr.mxu0 0.0
    %4495 = vmatpush1.msra.mxu0 0.0
    %4496 = vmatprep.subr.mxu0 0.0
    %4497 = vmatpush1.msra.mxu0 0.0
    %4498 = vmatprep.subr.mxu0 0.0
    %4499 = vmatpush1.msra.mxu0 0.0
    %4500 = vmatprep.subr.mxu0 0.0
    %4501 = vmatpush1.msra.mxu0 0.0
    %4502 = vmatprep.subr.mxu0 0.0
    %4503 = vmatpush1.msra.mxu0 0.0
    %4504 = vmatprep.subr.mxu0 0.0
    %4505 = vmatpush1.msra.mxu0 0.0
    %4506 = vmatprep.subr.mxu0 0.0
    %4507 = vmatpush1.msra.mxu0 0.0
    %4508 = vmatprep.subr.mxu0 0.0
    %4509 = vmatpush1.msra.mxu0 0.0
    %4510 = vmatprep.subr.mxu0 0.0
    %4511 = vmatpush1.msra.mxu0 0.0
    %4512 = vmatprep.subr.mxu0 0.0
    %4513 = vmatpush1.msra.mxu0 0.0
    %4514 = vmatprep.subr.mxu0 0.0
    %4515 = vmatpush1.msra.mxu0 0.0
    %4516 = vmatprep.subr.mxu0 0.0
    %4517 = vmatpush1.msra.mxu0 0.0
    %4518 = vmatprep.subr.mxu0 0.0
    %4519 = vmatpush1.msra.mxu0 0.0
    %4520 = vmatprep.subr.mxu0 0.0
    %4521 = vmatpush1.msra.mxu0 0.0
    %4522 = vmatprep.subr.mxu0 0.0
    %4523 = vmatpush1.msra.mxu0 0.0
    %4524 = vmatprep.subr.mxu0 0.0
    %4525 = vmatpush1.msra.mxu0 0.0
    %4526 = vmatprep.subr.mxu0 0.0
    %4527 = vmatpush1.msra.mxu0 0.0
    %4528 = vmatprep.subr.mxu0 0.0
    %4529 = vmatpush1.msra.mxu0 0.0
    %4530 = vmatprep.subr.mxu0 0.0
    %4531 = vmatpush1.msra.mxu0 0.0
    %4532 = vmatprep.subr.mxu0 0.0
    %4533 = vmatpush1.msra.mxu0 0.0
    %4534 = vmatprep.subr.mxu0 0.0
    %4535 = vmatpush1.msra.mxu0 0.0
    %4536 = vmatprep.subr.mxu0 0.0
    %4537 = vmatpush1.msra.mxu0 0.0
    %4538 = vmatprep.subr.mxu0 0.0
    %4539 = vmatpush1.msra.mxu0 0.0
    %4540 = vmatprep.subr.mxu0 0.0
    %4541 = vmatpush1.msra.mxu0 0.0
    %4542 = vmatprep.subr.mxu0 0.0
    %4543 = vmatpush1.msra.mxu0 0.0
    %4544 = vmatprep.subr.mxu0 0.0
    %4545 = vmatpush1.msra.mxu0 0.0
    %4546 = vmatprep.subr.mxu0 0.0
    %4547 = vmatpush1.msra.mxu0 0.0
    %4548 = vmatprep.subr.mxu0 0.0
    %4549 = vmatpush1.msra.mxu0 0.0
    %4550 = vmatprep.subr.mxu0 0.0
    %4551 = vmatpush1.msra.mxu0 0.0
    %4552 = vmatprep.subr.mxu0 0.0
    %4553 = vmatpush1.msra.mxu0 0.0
    %4554 = vmatprep.subr.mxu0 0.0
    %4555 = vmatpush1.msra.mxu0 0.0
    %4556 = vmatprep.mubr.f32.mxu0 0.0
    %v4557 = vand.u32 %v858, 4294901760
    %4558 = vmatmul.mubr.f32.gmra.mrb[0].mxu0 %v4557
    %v4559 = vpop.f32.mrb[0].mxu0
    %v4560 = vadd.f32 %v4478, %v4559
    %v4561 = vpop.f32.mrb[0].mxu0
    %v4562 = vadd.f32 %v4480, %v4561
    %4563 = vdwg.mxu0
    %v4564 = vand.u32 %v4403, 4294901760
    %v4565 = vsub.f32 %v4403, %v4564
    %4566 = vmatprep.subr.mxu0 %v4565
    %v4567 = vand.u32 %v4402, 4294901760
    %v4568 = vsub.f32 %v4402, %v4567
    %4569 = vmatpush1.msra.mxu0 %v4568
    %4570 = vmatprep.subr.mxu0 0.0
    %4571 = vmatpush1.msra.mxu0 0.0
    %4572 = vmatprep.subr.mxu0 0.0
    %4573 = vmatpush1.msra.mxu0 0.0
    %4574 = vmatprep.subr.mxu0 0.0
    %4575 = vmatpush1.msra.mxu0 0.0
    %4576 = vmatprep.subr.mxu0 0.0
    %4577 = vmatpush1.msra.mxu0 0.0
    %4578 = vmatprep.subr.mxu0 0.0
    %4579 = vmatpush1.msra.mxu0 0.0
    %4580 = vmatprep.subr.mxu0 0.0
    %4581 = vmatpush1.msra.mxu0 0.0
    %4582 = vmatprep.subr.mxu0 0.0
    %4583 = vmatpush1.msra.mxu0 0.0
    %4584 = vmatprep.subr.mxu0 0.0
    %4585 = vmatpush1.msra.mxu0 0.0
    %4586 = vmatprep.subr.mxu0 0.0
    %4587 = vmatpush1.msra.mxu0 0.0
    %4588 = vmatprep.subr.mxu0 0.0
    %4589 = vmatpush1.msra.mxu0 0.0
    %4590 = vmatprep.subr.mxu0 0.0
    %4591 = vmatpush1.msra.mxu0 0.0
    %4592 = vmatprep.subr.mxu0 0.0
    %4593 = vmatpush1.msra.mxu0 0.0
    %4594 = vmatprep.subr.mxu0 0.0
    %4595 = vmatpush1.msra.mxu0 0.0
    %4596 = vmatprep.subr.mxu0 0.0
    %4597 = vmatpush1.msra.mxu0 0.0
    %4598 = vmatprep.subr.mxu0 0.0
    %4599 = vmatpush1.msra.mxu0 0.0
    %4600 = vmatprep.subr.mxu0 0.0
    %4601 = vmatpush1.msra.mxu0 0.0
    %4602 = vmatprep.subr.mxu0 0.0
    %4603 = vmatpush1.msra.mxu0 0.0
    %4604 = vmatprep.subr.mxu0 0.0
    %4605 = vmatpush1.msra.mxu0 0.0
    %4606 = vmatprep.subr.mxu0 0.0
    %4607 = vmatpush1.msra.mxu0 0.0
    %4608 = vmatprep.subr.mxu0 0.0
    %4609 = vmatpush1.msra.mxu0 0.0
    %4610 = vmatprep.subr.mxu0 0.0
    %4611 = vmatpush1.msra.mxu0 0.0
    %4612 = vmatprep.subr.mxu0 0.0
    %4613 = vmatpush1.msra.mxu0 0.0
    %4614 = vmatprep.subr.mxu0 0.0
    %4615 = vmatpush1.msra.mxu0 0.0
    %4616 = vmatprep.subr.mxu0 0.0
    %4617 = vmatpush1.msra.mxu0 0.0
    %4618 = vmatprep.subr.mxu0 0.0
    %4619 = vmatpush1.msra.mxu0 0.0
    %4620 = vmatprep.subr.mxu0 0.0
    %4621 = vmatpush1.msra.mxu0 0.0
    %4622 = vmatprep.subr.mxu0 0.0
    %4623 = vmatpush1.msra.mxu0 0.0
    %4624 = vmatprep.subr.mxu0 0.0
    %4625 = vmatpush1.msra.mxu0 0.0
    %4626 = vmatprep.subr.mxu0 0.0
    %4627 = vmatpush1.msra.mxu0 0.0
    %4628 = vmatprep.subr.mxu0 0.0
    %4629 = vmatpush1.msra.mxu0 0.0
    %4630 = vmatprep.subr.mxu0 0.0
    %4631 = vmatpush1.msra.mxu0 0.0
    %4632 = vmatprep.mubr.f32.mxu0 0.0
    %v4633 = vand.u32 %v858, 4294901760
    %v4634 = vsub.f32 %v858, %v4633
    %4635 = vmatmul.mubr.f32.gmra.mrb[0].mxu0 %v4634
    %v4636 = vpop.f32.mrb[0].mxu0
    %v4637 = vadd.f32 %v4560, %v4636
    %v4638 = vpop.f32.mrb[0].mxu0
    %v4639 = vadd.f32 %v4562, %v4638
    %4640 = vdwg.mxu0
    %v4641 = vand.u32 %v4403, 4294901760
    %4642 = vmatprep.subr.mxu0 %v4641
    %v4643 = vand.u32 %v4402, 4294901760
    %4644 = vmatpush1.msra.mxu0 %v4643
    %4645 = vmatprep.subr.mxu0 0.0
    %4646 = vmatpush1.msra.mxu0 0.0
    %4647 = vmatprep.subr.mxu0 0.0
    %4648 = vmatpush1.msra.mxu0 0.0
    %4649 = vmatprep.subr.mxu0 0.0
    %4650 = vmatpush1.msra.mxu0 0.0
    %4651 = vmatprep.subr.mxu0 0.0
    %4652 = vmatpush1.msra.mxu0 0.0
    %4653 = vmatprep.subr.mxu0 0.0
    %4654 = vmatpush1.msra.mxu0 0.0
    %4655 = vmatprep.subr.mxu0 0.0
    %4656 = vmatpush1.msra.mxu0 0.0
    %4657 = vmatprep.subr.mxu0 0.0
    %4658 = vmatpush1.msra.mxu0 0.0
    %4659 = vmatprep.subr.mxu0 0.0
    %4660 = vmatpush1.msra.mxu0 0.0
    %4661 = vmatprep.subr.mxu0 0.0
    %4662 = vmatpush1.msra.mxu0 0.0
    %4663 = vmatprep.subr.mxu0 0.0
    %4664 = vmatpush1.msra.mxu0 0.0
    %4665 = vmatprep.subr.mxu0 0.0
    %4666 = vmatpush1.msra.mxu0 0.0
    %4667 = vmatprep.subr.mxu0 0.0
    %4668 = vmatpush1.msra.mxu0 0.0
    %4669 = vmatprep.subr.mxu0 0.0
    %4670 = vmatpush1.msra.mxu0 0.0
    %4671 = vmatprep.subr.mxu0 0.0
    %4672 = vmatpush1.msra.mxu0 0.0
    %4673 = vmatprep.subr.mxu0 0.0
    %4674 = vmatpush1.msra.mxu0 0.0
    %4675 = vmatprep.subr.mxu0 0.0
    %4676 = vmatpush1.msra.mxu0 0.0
    %4677 = vmatprep.subr.mxu0 0.0
    %4678 = vmatpush1.msra.mxu0 0.0
    %4679 = vmatprep.subr.mxu0 0.0
    %4680 = vmatpush1.msra.mxu0 0.0
    %4681 = vmatprep.subr.mxu0 0.0
    %4682 = vmatpush1.msra.mxu0 0.0
    %4683 = vmatprep.subr.mxu0 0.0
    %4684 = vmatpush1.msra.mxu0 0.0
    %4685 = vmatprep.subr.mxu0 0.0
    %4686 = vmatpush1.msra.mxu0 0.0
    %4687 = vmatprep.subr.mxu0 0.0
    %4688 = vmatpush1.msra.mxu0 0.0
    %4689 = vmatprep.subr.mxu0 0.0
    %4690 = vmatpush1.msra.mxu0 0.0
    %4691 = vmatprep.subr.mxu0 0.0
    %4692 = vmatpush1.msra.mxu0 0.0
    %4693 = vmatprep.subr.mxu0 0.0
    %4694 = vmatpush1.msra.mxu0 0.0
    %4695 = vmatprep.subr.mxu0 0.0
    %4696 = vmatpush1.msra.mxu0 0.0
    %4697 = vmatprep.subr.mxu0 0.0
    %4698 = vmatpush1.msra.mxu0 0.0
    %4699 = vmatprep.subr.mxu0 0.0
    %4700 = vmatpush1.msra.mxu0 0.0
    %4701 = vmatprep.subr.mxu0 0.0
    %4702 = vmatpush1.msra.mxu0 0.0
    %4703 = vmatprep.subr.mxu0 0.0
    %4704 = vmatpush1.msra.mxu0 0.0
    %4705 = vmatprep.subr.mxu0 0.0
    %4706 = vmatpush1.msra.mxu0 0.0
    %4707 = vmatprep.mubr.f32.mxu0 0.0
    %v4708 = vand.u32 %v858, 4294901760
    %v4709 = vsub.f32 %v858, %v4708
    %v4710 = vand.u32 %v4709, 4294901760
    %4711 = vmatmul.mubr.f32.gmra.mrb[0].mxu0 %v4710
    %v4712 = vpop.f32.mrb[0].mxu0
    %v4713 = vadd.f32 %v4637, %v4712
    %v4714 = vpop.f32.mrb[0].mxu0
    %v4715 = vadd.f32 %v4639, %v4714
    %4716 = vdwg.mxu0
    %v4717 = vand.u32 %v4403, 4294901760
    %v4718 = vsub.f32 %v4403, %v4717
    %v4719 = vand.u32 %v4718, 4294901760
    %4720 = vmatprep.subr.mxu0 %v4719
    %v4721 = vand.u32 %v4402, 4294901760
    %v4722 = vsub.f32 %v4402, %v4721
    %v4723 = vand.u32 %v4722, 4294901760
    %4724 = vmatpush1.msra.mxu0 %v4723
    %4725 = vmatprep.subr.mxu0 0.0
    %4726 = vmatpush1.msra.mxu0 0.0
    %4727 = vmatprep.subr.mxu0 0.0
    %4728 = vmatpush1.msra.mxu0 0.0
    %4729 = vmatprep.subr.mxu0 0.0
    %4730 = vmatpush1.msra.mxu0 0.0
    %4731 = vmatprep.subr.mxu0 0.0
    %4732 = vmatpush1.msra.mxu0 0.0
    %4733 = vmatprep.subr.mxu0 0.0
    %4734 = vmatpush1.msra.mxu0 0.0
    %4735 = vmatprep.subr.mxu0 0.0
    %4736 = vmatpush1.msra.mxu0 0.0
    %4737 = vmatprep.subr.mxu0 0.0
    %4738 = vmatpush1.msra.mxu0 0.0
    %4739 = vmatprep.subr.mxu0 0.0
    %4740 = vmatpush1.msra.mxu0 0.0
    %4741 = vmatprep.subr.mxu0 0.0
    %4742 = vmatpush1.msra.mxu0 0.0
    %4743 = vmatprep.subr.mxu0 0.0
    %4744 = vmatpush1.msra.mxu0 0.0
    %4745 = vmatprep.subr.mxu0 0.0
    %4746 = vmatpush1.msra.mxu0 0.0
    %4747 = vmatprep.subr.mxu0 0.0
    %4748 = vmatpush1.msra.mxu0 0.0
    %4749 = vmatprep.subr.mxu0 0.0
    %4750 = vmatpush1.msra.mxu0 0.0
    %4751 = vmatprep.subr.mxu0 0.0
    %4752 = vmatpush1.msra.mxu0 0.0
    %4753 = vmatprep.subr.mxu0 0.0
    %4754 = vmatpush1.msra.mxu0 0.0
    %4755 = vmatprep.subr.mxu0 0.0
    %4756 = vmatpush1.msra.mxu0 0.0
    %4757 = vmatprep.subr.mxu0 0.0
    %4758 = vmatpush1.msra.mxu0 0.0
    %4759 = vmatprep.subr.mxu0 0.0
    %4760 = vmatpush1.msra.mxu0 0.0
    %4761 = vmatprep.subr.mxu0 0.0
    %4762 = vmatpush1.msra.mxu0 0.0
    %4763 = vmatprep.subr.mxu0 0.0
    %4764 = vmatpush1.msra.mxu0 0.0
    %4765 = vmatprep.subr.mxu0 0.0
    %4766 = vmatpush1.msra.mxu0 0.0
    %4767 = vmatprep.subr.mxu0 0.0
    %4768 = vmatpush1.msra.mxu0 0.0
    %4769 = vmatprep.subr.mxu0 0.0
    %4770 = vmatpush1.msra.mxu0 0.0
    %4771 = vmatprep.subr.mxu0 0.0
    %4772 = vmatpush1.msra.mxu0 0.0
    %4773 = vmatprep.subr.mxu0 0.0
    %4774 = vmatpush1.msra.mxu0 0.0
    %4775 = vmatprep.subr.mxu0 0.0
    %4776 = vmatpush1.msra.mxu0 0.0
    %4777 = vmatprep.subr.mxu0 0.0
    %4778 = vmatpush1.msra.mxu0 0.0
    %4779 = vmatprep.subr.mxu0 0.0
    %4780 = vmatpush1.msra.mxu0 0.0
    %4781 = vmatprep.subr.mxu0 0.0
    %4782 = vmatpush1.msra.mxu0 0.0
    %4783 = vmatprep.subr.mxu0 0.0
    %4784 = vmatpush1.msra.mxu0 0.0
    %4785 = vmatprep.subr.mxu0 0.0
    %4786 = vmatpush1.msra.mxu0 0.0
    %4787 = vmatprep.mubr.f32.mxu0 0.0
    %v4788 = vand.u32 %v858, 4294901760
    %4789 = vmatmul.mubr.f32.gmra.mrb[0].mxu0 %v4788
    %v4790 = vpop.f32.mrb[0].mxu0
    %v4791 = vadd.f32 %v4713, %v4790
    %v4792 = vpop.f32.mrb[0].mxu0
    %v4793 = vadd.f32 %v4715, %v4792
    %4794 = vdwg.mxu0
    %v4795 = vand.u32 %v4403, 4294901760
    %4796 = vmatprep.subr.mxu0 %v4795
    %v4797 = vand.u32 %v4402, 4294901760
    %4798 = vmatpush1.msra.mxu0 %v4797
    %4799 = vmatprep.subr.mxu0 0.0
    %4800 = vmatpush1.msra.mxu0 0.0
    %4801 = vmatprep.subr.mxu0 0.0
    %4802 = vmatpush1.msra.mxu0 0.0
    %4803 = vmatprep.subr.mxu0 0.0
    %4804 = vmatpush1.msra.mxu0 0.0
    %4805 = vmatprep.subr.mxu0 0.0
    %4806 = vmatpush1.msra.mxu0 0.0
    %4807 = vmatprep.subr.mxu0 0.0
    %4808 = vmatpush1.msra.mxu0 0.0
    %4809 = vmatprep.subr.mxu0 0.0
    %4810 = vmatpush1.msra.mxu0 0.0
    %4811 = vmatprep.subr.mxu0 0.0
    %4812 = vmatpush1.msra.mxu0 0.0
    %4813 = vmatprep.subr.mxu0 0.0
    %4814 = vmatpush1.msra.mxu0 0.0
    %4815 = vmatprep.subr.mxu0 0.0
    %4816 = vmatpush1.msra.mxu0 0.0
    %4817 = vmatprep.subr.mxu0 0.0
    %4818 = vmatpush1.msra.mxu0 0.0
    %4819 = vmatprep.subr.mxu0 0.0
    %4820 = vmatpush1.msra.mxu0 0.0
    %4821 = vmatprep.subr.mxu0 0.0
    %4822 = vmatpush1.msra.mxu0 0.0
    %4823 = vmatprep.subr.mxu0 0.0
    %4824 = vmatpush1.msra.mxu0 0.0
    %4825 = vmatprep.subr.mxu0 0.0
    %4826 = vmatpush1.msra.mxu0 0.0
    %4827 = vmatprep.subr.mxu0 0.0
    %4828 = vmatpush1.msra.mxu0 0.0
    %4829 = vmatprep.subr.mxu0 0.0
    %4830 = vmatpush1.msra.mxu0 0.0
    %4831 = vmatprep.subr.mxu0 0.0
    %4832 = vmatpush1.msra.mxu0 0.0
    %4833 = vmatprep.subr.mxu0 0.0
    %4834 = vmatpush1.msra.mxu0 0.0
    %4835 = vmatprep.subr.mxu0 0.0
    %4836 = vmatpush1.msra.mxu0 0.0
    %4837 = vmatprep.subr.mxu0 0.0
    %4838 = vmatpush1.msra.mxu0 0.0
    %4839 = vmatprep.subr.mxu0 0.0
    %4840 = vmatpush1.msra.mxu0 0.0
    %4841 = vmatprep.subr.mxu0 0.0
    %4842 = vmatpush1.msra.mxu0 0.0
    %4843 = vmatprep.subr.mxu0 0.0
    %4844 = vmatpush1.msra.mxu0 0.0
    %4845 = vmatprep.subr.mxu0 0.0
    %4846 = vmatpush1.msra.mxu0 0.0
    %4847 = vmatprep.subr.mxu0 0.0
    %4848 = vmatpush1.msra.mxu0 0.0
    %4849 = vmatprep.subr.mxu0 0.0
    %4850 = vmatpush1.msra.mxu0 0.0
    %4851 = vmatprep.subr.mxu0 0.0
    %4852 = vmatpush1.msra.mxu0 0.0
    %4853 = vmatprep.subr.mxu0 0.0
    %4854 = vmatpush1.msra.mxu0 0.0
    %4855 = vmatprep.subr.mxu0 0.0
    %4856 = vmatpush1.msra.mxu0 0.0
    %4857 = vmatprep.subr.mxu0 0.0
    %4858 = vmatpush1.msra.mxu0 0.0
    %4859 = vmatprep.subr.mxu0 0.0
    %4860 = vmatpush1.msra.mxu0 0.0
    %4861 = vmatprep.mubr.f32.mxu0 0.0
    %v4862 = vand.u32 %v858, 4294901760
    %4863 = vmatmul.mubr.f32.gmra.mrb[0].mxu0 %v4862
    %v4864 = vpop.f32.mrb[0].mxu0
    %v4865 = vadd.f32 %v4791, %v4864
    %v4866 = vpop.f32.mrb[0].mxu0
    %v4867 = vadd.f32 %v4793, %v4866
    %4868 = vdwg.mxu0
    %v4869 = vadd.f32 %v4865, %v4867
    %4870 = vadd.xlane.f32.xlu0 %v4869
    %v4871 = vpop.xlane.xlu0 %4870
    %v4872 = vmul.f32 %v4402, %v4402
    %v4873 = vmul.f32 %v4403, %v4403
    %v4874 = vand.u32 %v4873, 4294901760
    %4875 = vmatprep.subr.mxu0 %v4874
    %v4876 = vand.u32 %v4872, 4294901760
    %4877 = vmatpush1.msra.mxu0 %v4876
    %4878 = vmatprep.subr.mxu0 0.0
    %4879 = vmatpush1.msra.mxu0 0.0
    %4880 = vmatprep.subr.mxu0 0.0
    %4881 = vmatpush1.msra.mxu0 0.0
    %4882 = vmatprep.subr.mxu0 0.0
    %4883 = vmatpush1.msra.mxu0 0.0
    %4884 = vmatprep.subr.mxu0 0.0
    %4885 = vmatpush1.msra.mxu0 0.0
    %4886 = vmatprep.subr.mxu0 0.0
    %4887 = vmatpush1.msra.mxu0 0.0
    %4888 = vmatprep.subr.mxu0 0.0
    %4889 = vmatpush1.msra.mxu0 0.0
    %4890 = vmatprep.subr.mxu0 0.0
    %4891 = vmatpush1.msra.mxu0 0.0
    %4892 = vmatprep.subr.mxu0 0.0
    %4893 = vmatpush1.msra.mxu0 0.0
    %4894 = vmatprep.subr.mxu0 0.0
    %4895 = vmatpush1.msra.mxu0 0.0
    %4896 = vmatprep.subr.mxu0 0.0
    %4897 = vmatpush1.msra.mxu0 0.0
    %4898 = vmatprep.subr.mxu0 0.0
    %4899 = vmatpush1.msra.mxu0 0.0
    %4900 = vmatprep.subr.mxu0 0.0
    %4901 = vmatpush1.msra.mxu0 0.0
    %4902 = vmatprep.subr.mxu0 0.0
    %4903 = vmatpush1.msra.mxu0 0.0
    %4904 = vmatprep.subr.mxu0 0.0
    %4905 = vmatpush1.msra.mxu0 0.0
    %4906 = vmatprep.subr.mxu0 0.0
    %4907 = vmatpush1.msra.mxu0 0.0
    %4908 = vmatprep.subr.mxu0 0.0
    %4909 = vmatpush1.msra.mxu0 0.0
    %4910 = vmatprep.subr.mxu0 0.0
    %4911 = vmatpush1.msra.mxu0 0.0
    %4912 = vmatprep.subr.mxu0 0.0
    %4913 = vmatpush1.msra.mxu0 0.0
    %4914 = vmatprep.subr.mxu0 0.0
    %4915 = vmatpush1.msra.mxu0 0.0
    %4916 = vmatprep.subr.mxu0 0.0
    %4917 = vmatpush1.msra.mxu0 0.0
    %4918 = vmatprep.subr.mxu0 0.0
    %4919 = vmatpush1.msra.mxu0 0.0
    %4920 = vmatprep.subr.mxu0 0.0
    %4921 = vmatpush1.msra.mxu0 0.0
    %4922 = vmatprep.subr.mxu0 0.0
    %4923 = vmatpush1.msra.mxu0 0.0
    %4924 = vmatprep.subr.mxu0 0.0
    %4925 = vmatpush1.msra.mxu0 0.0
    %4926 = vmatprep.subr.mxu0 0.0
    %4927 = vmatpush1.msra.mxu0 0.0
    %4928 = vmatprep.subr.mxu0 0.0
    %4929 = vmatpush1.msra.mxu0 0.0
    %4930 = vmatprep.subr.mxu0 0.0
    %4931 = vmatpush1.msra.mxu0 0.0
    %4932 = vmatprep.subr.mxu0 0.0
    %4933 = vmatpush1.msra.mxu0 0.0
    %4934 = vmatprep.subr.mxu0 0.0
    %4935 = vmatpush1.msra.mxu0 0.0
    %4936 = vmatprep.subr.mxu0 0.0
    %4937 = vmatpush1.msra.mxu0 0.0
    %4938 = vmatprep.subr.mxu0 0.0
    %4939 = vmatpush1.msra.mxu0 0.0
    %4940 = vmatprep.mubr.f32.mxu0 0.0
    %v4941 = vand.u32 %v858, 4294901760
    %v4942 = vsub.f32 %v858, %v4941
    %v4943 = vand.u32 %v4942, 4294901760
    %v4944 = vsub.f32 %v4942, %v4943
    %v4945 = vand.u32 %v4944, 4294901760
    %4946 = vmatmul.mubr.f32.gmra.mrb[0].mxu0 %v4945
    %v4947 = vpop.f32.mrb[0].mxu0
    %v4948 = vadd.f32 0.0, %v4947
    %v4949 = vpop.f32.mrb[0].mxu0
    %v4950 = vadd.f32 0.0, %v4949
    %4951 = vdwg.mxu0
    %v4952 = vand.u32 %v4873, 4294901760
    %v4953 = vsub.f32 %v4873, %v4952
    %v4954 = vand.u32 %v4953, 4294901760
    %v4955 = vsub.f32 %v4953, %v4954
    %v4956 = vand.u32 %v4955, 4294901760
    %4957 = vmatprep.subr.mxu0 %v4956
    %v4958 = vand.u32 %v4872, 4294901760
    %v4959 = vsub.f32 %v4872, %v4958
    %v4960 = vand.u32 %v4959, 4294901760
    %v4961 = vsub.f32 %v4959, %v4960
    %v4962 = vand.u32 %v4961, 4294901760
    %4963 = vmatpush1.msra.mxu0 %v4962
    %4964 = vmatprep.subr.mxu0 0.0
    %4965 = vmatpush1.msra.mxu0 0.0
    %4966 = vmatprep.subr.mxu0 0.0
    %4967 = vmatpush1.msra.mxu0 0.0
    %4968 = vmatprep.subr.mxu0 0.0
    %4969 = vmatpush1.msra.mxu0 0.0
    %4970 = vmatprep.subr.mxu0 0.0
    %4971 = vmatpush1.msra.mxu0 0.0
    %4972 = vmatprep.subr.mxu0 0.0
    %4973 = vmatpush1.msra.mxu0 0.0
    %4974 = vmatprep.subr.mxu0 0.0
    %4975 = vmatpush1.msra.mxu0 0.0
    %4976 = vmatprep.subr.mxu0 0.0
    %4977 = vmatpush1.msra.mxu0 0.0
    %4978 = vmatprep.subr.mxu0 0.0
    %4979 = vmatpush1.msra.mxu0 0.0
    %4980 = vmatprep.subr.mxu0 0.0
    %4981 = vmatpush1.msra.mxu0 0.0
    %4982 = vmatprep.subr.mxu0 0.0
    %4983 = vmatpush1.msra.mxu0 0.0
    %4984 = vmatprep.subr.mxu0 0.0
    %4985 = vmatpush1.msra.mxu0 0.0
    %4986 = vmatprep.subr.mxu0 0.0
    %4987 = vmatpush1.msra.mxu0 0.0
    %4988 = vmatprep.subr.mxu0 0.0
    %4989 = vmatpush1.msra.mxu0 0.0
    %4990 = vmatprep.subr.mxu0 0.0
    %4991 = vmatpush1.msra.mxu0 0.0
    %4992 = vmatprep.subr.mxu0 0.0
    %4993 = vmatpush1.msra.mxu0 0.0
    %4994 = vmatprep.subr.mxu0 0.0
    %4995 = vmatpush1.msra.mxu0 0.0
    %4996 = vmatprep.subr.mxu0 0.0
    %4997 = vmatpush1.msra.mxu0 0.0
    %4998 = vmatprep.subr.mxu0 0.0
    %4999 = vmatpush1.msra.mxu0 0.0
    %5000 = vmatprep.subr.mxu0 0.0
    %5001 = vmatpush1.msra.mxu0 0.0
    %5002 = vmatprep.subr.mxu0 0.0
    %5003 = vmatpush1.msra.mxu0 0.0
    %5004 = vmatprep.subr.mxu0 0.0
    %5005 = vmatpush1.msra.mxu0 0.0
    %5006 = vmatprep.subr.mxu0 0.0
    %5007 = vmatpush1.msra.mxu0 0.0
    %5008 = vmatprep.subr.mxu0 0.0
    %5009 = vmatpush1.msra.mxu0 0.0
    %5010 = vmatprep.subr.mxu0 0.0
    %5011 = vmatpush1.msra.mxu0 0.0
    %5012 = vmatprep.subr.mxu0 0.0
    %5013 = vmatpush1.msra.mxu0 0.0
    %5014 = vmatprep.subr.mxu0 0.0
    %5015 = vmatpush1.msra.mxu0 0.0
    %5016 = vmatprep.subr.mxu0 0.0
    %5017 = vmatpush1.msra.mxu0 0.0
    %5018 = vmatprep.subr.mxu0 0.0
    %5019 = vmatpush1.msra.mxu0 0.0
    %5020 = vmatprep.subr.mxu0 0.0
    %5021 = vmatpush1.msra.mxu0 0.0
    %5022 = vmatprep.subr.mxu0 0.0
    %5023 = vmatpush1.msra.mxu0 0.0
    %5024 = vmatprep.subr.mxu0 0.0
    %5025 = vmatpush1.msra.mxu0 0.0
    %5026 = vmatprep.mubr.f32.mxu0 0.0
    %v5027 = vand.u32 %v858, 4294901760
    %5028 = vmatmul.mubr.f32.gmra.mrb[0].mxu0 %v5027
    %v5029 = vpop.f32.mrb[0].mxu0
    %v5030 = vadd.f32 %v4948, %v5029
    %v5031 = vpop.f32.mrb[0].mxu0
    %v5032 = vadd.f32 %v4950, %v5031
    %5033 = vdwg.mxu0
    %v5034 = vand.u32 %v4873, 4294901760
    %v5035 = vsub.f32 %v4873, %v5034
    %5036 = vmatprep.subr.mxu0 %v5035
    %v5037 = vand.u32 %v4872, 4294901760
    %v5038 = vsub.f32 %v4872, %v5037
    %5039 = vmatpush1.msra.mxu0 %v5038
    %5040 = vmatprep.subr.mxu0 0.0
    %5041 = vmatpush1.msra.mxu0 0.0
    %5042 = vmatprep.subr.mxu0 0.0
    %5043 = vmatpush1.msra.mxu0 0.0
    %5044 = vmatprep.subr.mxu0 0.0
    %5045 = vmatpush1.msra.mxu0 0.0
    %5046 = vmatprep.subr.mxu0 0.0
    %5047 = vmatpush1.msra.mxu0 0.0
    %5048 = vmatprep.subr.mxu0 0.0
    %5049 = vmatpush1.msra.mxu0 0.0
    %5050 = vmatprep.subr.mxu0 0.0
    %5051 = vmatpush1.msra.mxu0 0.0
    %5052 = vmatprep.subr.mxu0 0.0
    %5053 = vmatpush1.msra.mxu0 0.0
    %5054 = vmatprep.subr.mxu0 0.0
    %5055 = vmatpush1.msra.mxu0 0.0
    %5056 = vmatprep.subr.mxu0 0.0
    %5057 = vmatpush1.msra.mxu0 0.0
    %5058 = vmatprep.subr.mxu0 0.0
    %5059 = vmatpush1.msra.mxu0 0.0
    %5060 = vmatprep.subr.mxu0 0.0
    %5061 = vmatpush1.msra.mxu0 0.0
    %5062 = vmatprep.subr.mxu0 0.0
    %5063 = vmatpush1.msra.mxu0 0.0
    %5064 = vmatprep.subr.mxu0 0.0
    %5065 = vmatpush1.msra.mxu0 0.0
    %5066 = vmatprep.subr.mxu0 0.0
    %5067 = vmatpush1.msra.mxu0 0.0
    %5068 = vmatprep.subr.mxu0 0.0
    %5069 = vmatpush1.msra.mxu0 0.0
    %5070 = vmatprep.subr.mxu0 0.0
    %5071 = vmatpush1.msra.mxu0 0.0
    %5072 = vmatprep.subr.mxu0 0.0
    %5073 = vmatpush1.msra.mxu0 0.0
    %5074 = vmatprep.subr.mxu0 0.0
    %5075 = vmatpush1.msra.mxu0 0.0
    %5076 = vmatprep.subr.mxu0 0.0
    %5077 = vmatpush1.msra.mxu0 0.0
    %5078 = vmatprep.subr.mxu0 0.0
    %5079 = vmatpush1.msra.mxu0 0.0
    %5080 = vmatprep.subr.mxu0 0.0
    %5081 = vmatpush1.msra.mxu0 0.0
    %5082 = vmatprep.subr.mxu0 0.0
    %5083 = vmatpush1.msra.mxu0 0.0
    %5084 = vmatprep.subr.mxu0 0.0
    %5085 = vmatpush1.msra.mxu0 0.0
    %5086 = vmatprep.subr.mxu0 0.0
    %5087 = vmatpush1.msra.mxu0 0.0
    %5088 = vmatprep.subr.mxu0 0.0
    %5089 = vmatpush1.msra.mxu0 0.0
    %5090 = vmatprep.subr.mxu0 0.0
    %5091 = vmatpush1.msra.mxu0 0.0
    %5092 = vmatprep.subr.mxu0 0.0
    %5093 = vmatpush1.msra.mxu0 0.0
    %5094 = vmatprep.subr.mxu0 0.0
    %5095 = vmatpush1.msra.mxu0 0.0
    %5096 = vmatprep.subr.mxu0 0.0
    %5097 = vmatpush1.msra.mxu0 0.0
    %5098 = vmatprep.subr.mxu0 0.0
    %5099 = vmatpush1.msra.mxu0 0.0
    %5100 = vmatprep.subr.mxu0 0.0
    %5101 = vmatpush1.msra.mxu0 0.0
    %5102 = vmatprep.mubr.f32.mxu0 0.0
    %v5103 = vand.u32 %v858, 4294901760
    %v5104 = vsub.f32 %v858, %v5103
    %5105 = vmatmul.mubr.f32.gmra.mrb[0].mxu0 %v5104
    %v5106 = vpop.f32.mrb[0].mxu0
    %v5107 = vadd.f32 %v5030, %v5106
    %v5108 = vpop.f32.mrb[0].mxu0
    %v5109 = vadd.f32 %v5032, %v5108
    %5110 = vdwg.mxu0
    %v5111 = vand.u32 %v4873, 4294901760
    %5112 = vmatprep.subr.mxu0 %v5111
    %v5113 = vand.u32 %v4872, 4294901760
    %5114 = vmatpush1.msra.mxu0 %v5113
    %5115 = vmatprep.subr.mxu0 0.0
    %5116 = vmatpush1.msra.mxu0 0.0
    %5117 = vmatprep.subr.mxu0 0.0
    %5118 = vmatpush1.msra.mxu0 0.0
    %5119 = vmatprep.subr.mxu0 0.0
    %5120 = vmatpush1.msra.mxu0 0.0
    %5121 = vmatprep.subr.mxu0 0.0
    %5122 = vmatpush1.msra.mxu0 0.0
    %5123 = vmatprep.subr.mxu0 0.0
    %5124 = vmatpush1.msra.mxu0 0.0
    %5125 = vmatprep.subr.mxu0 0.0
    %5126 = vmatpush1.msra.mxu0 0.0
    %5127 = vmatprep.subr.mxu0 0.0
    %5128 = vmatpush1.msra.mxu0 0.0
    %5129 = vmatprep.subr.mxu0 0.0
    %5130 = vmatpush1.msra.mxu0 0.0
    %5131 = vmatprep.subr.mxu0 0.0
    %5132 = vmatpush1.msra.mxu0 0.0
    %5133 = vmatprep.subr.mxu0 0.0
    %5134 = vmatpush1.msra.mxu0 0.0
    %5135 = vmatprep.subr.mxu0 0.0
    %5136 = vmatpush1.msra.mxu0 0.0
    %5137 = vmatprep.subr.mxu0 0.0
    %5138 = vmatpush1.msra.mxu0 0.0
    %5139 = vmatprep.subr.mxu0 0.0
    %5140 = vmatpush1.msra.mxu0 0.0
    %5141 = vmatprep.subr.mxu0 0.0
    %5142 = vmatpush1.msra.mxu0 0.0
    %5143 = vmatprep.subr.mxu0 0.0
    %5144 = vmatpush1.msra.mxu0 0.0
    %5145 = vmatprep.subr.mxu0 0.0
    %5146 = vmatpush1.msra.mxu0 0.0
    %5147 = vmatprep.subr.mxu0 0.0
    %5148 = vmatpush1.msra.mxu0 0.0
    %5149 = vmatprep.subr.mxu0 0.0
    %5150 = vmatpush1.msra.mxu0 0.0
    %5151 = vmatprep.subr.mxu0 0.0
    %5152 = vmatpush1.msra.mxu0 0.0
    %5153 = vmatprep.subr.mxu0 0.0
    %5154 = vmatpush1.msra.mxu0 0.0
    %5155 = vmatprep.subr.mxu0 0.0
    %5156 = vmatpush1.msra.mxu0 0.0
    %5157 = vmatprep.subr.mxu0 0.0
    %5158 = vmatpush1.msra.mxu0 0.0
    %5159 = vmatprep.subr.mxu0 0.0
    %5160 = vmatpush1.msra.mxu0 0.0
    %5161 = vmatprep.subr.mxu0 0.0
    %5162 = vmatpush1.msra.mxu0 0.0
    %5163 = vmatprep.subr.mxu0 0.0
    %5164 = vmatpush1.msra.mxu0 0.0
    %5165 = vmatprep.subr.mxu0 0.0
    %5166 = vmatpush1.msra.mxu0 0.0
    %5167 = vmatprep.subr.mxu0 0.0
    %5168 = vmatpush1.msra.mxu0 0.0
    %5169 = vmatprep.subr.mxu0 0.0
    %5170 = vmatpush1.msra.mxu0 0.0
    %5171 = vmatprep.subr.mxu0 0.0
    %5172 = vmatpush1.msra.mxu0 0.0
    %5173 = vmatprep.subr.mxu0 0.0
    %5174 = vmatpush1.msra.mxu0 0.0
    %5175 = vmatprep.subr.mxu0 0.0
    %5176 = vmatpush1.msra.mxu0 0.0
    %5177 = vmatprep.mubr.f32.mxu0 0.0
    %v5178 = vand.u32 %v858, 4294901760
    %v5179 = vsub.f32 %v858, %v5178
    %v5180 = vand.u32 %v5179, 4294901760
    %5181 = vmatmul.mubr.f32.gmra.mrb[0].mxu0 %v5180
    %v5182 = vpop.f32.mrb[0].mxu0
    %v5183 = vadd.f32 %v5107, %v5182
    %v5184 = vpop.f32.mrb[0].mxu0
    %v5185 = vadd.f32 %v5109, %v5184
    %5186 = vdwg.mxu0
    %v5187 = vand.u32 %v4873, 4294901760
    %v5188 = vsub.f32 %v4873, %v5187
    %v5189 = vand.u32 %v5188, 4294901760
    %5190 = vmatprep.subr.mxu0 %v5189
    %v5191 = vand.u32 %v4872, 4294901760
    %v5192 = vsub.f32 %v4872, %v5191
    %v5193 = vand.u32 %v5192, 4294901760
    %5194 = vmatpush1.msra.mxu0 %v5193
    %5195 = vmatprep.subr.mxu0 0.0
    %5196 = vmatpush1.msra.mxu0 0.0
    %5197 = vmatprep.subr.mxu0 0.0
    %5198 = vmatpush1.msra.mxu0 0.0
    %5199 = vmatprep.subr.mxu0 0.0
    %5200 = vmatpush1.msra.mxu0 0.0
    %5201 = vmatprep.subr.mxu0 0.0
    %5202 = vmatpush1.msra.mxu0 0.0
    %5203 = vmatprep.subr.mxu0 0.0
    %5204 = vmatpush1.msra.mxu0 0.0
    %5205 = vmatprep.subr.mxu0 0.0
    %5206 = vmatpush1.msra.mxu0 0.0
    %5207 = vmatprep.subr.mxu0 0.0
    %5208 = vmatpush1.msra.mxu0 0.0
    %5209 = vmatprep.subr.mxu0 0.0
    %5210 = vmatpush1.msra.mxu0 0.0
    %5211 = vmatprep.subr.mxu0 0.0
    %5212 = vmatpush1.msra.mxu0 0.0
    %5213 = vmatprep.subr.mxu0 0.0
    %5214 = vmatpush1.msra.mxu0 0.0
    %5215 = vmatprep.subr.mxu0 0.0
    %5216 = vmatpush1.msra.mxu0 0.0
    %5217 = vmatprep.subr.mxu0 0.0
    %5218 = vmatpush1.msra.mxu0 0.0
    %5219 = vmatprep.subr.mxu0 0.0
    %5220 = vmatpush1.msra.mxu0 0.0
    %5221 = vmatprep.subr.mxu0 0.0
    %5222 = vmatpush1.msra.mxu0 0.0
    %5223 = vmatprep.subr.mxu0 0.0
    %5224 = vmatpush1.msra.mxu0 0.0
    %5225 = vmatprep.subr.mxu0 0.0
    %5226 = vmatpush1.msra.mxu0 0.0
    %5227 = vmatprep.subr.mxu0 0.0
    %5228 = vmatpush1.msra.mxu0 0.0
    %5229 = vmatprep.subr.mxu0 0.0
    %5230 = vmatpush1.msra.mxu0 0.0
    %5231 = vmatprep.subr.mxu0 0.0
    %5232 = vmatpush1.msra.mxu0 0.0
    %5233 = vmatprep.subr.mxu0 0.0
    %5234 = vmatpush1.msra.mxu0 0.0
    %5235 = vmatprep.subr.mxu0 0.0
    %5236 = vmatpush1.msra.mxu0 0.0
    %5237 = vmatprep.subr.mxu0 0.0
    %5238 = vmatpush1.msra.mxu0 0.0
    %5239 = vmatprep.subr.mxu0 0.0
    %5240 = vmatpush1.msra.mxu0 0.0
    %5241 = vmatprep.subr.mxu0 0.0
    %5242 = vmatpush1.msra.mxu0 0.0
    %5243 = vmatprep.subr.mxu0 0.0
    %5244 = vmatpush1.msra.mxu0 0.0
    %5245 = vmatprep.subr.mxu0 0.0
    %5246 = vmatpush1.msra.mxu0 0.0
    %5247 = vmatprep.subr.mxu0 0.0
    %5248 = vmatpush1.msra.mxu0 0.0
    %5249 = vmatprep.subr.mxu0 0.0
    %5250 = vmatpush1.msra.mxu0 0.0
    %5251 = vmatprep.subr.mxu0 0.0
    %5252 = vmatpush1.msra.mxu0 0.0
    %5253 = vmatprep.subr.mxu0 0.0
    %5254 = vmatpush1.msra.mxu0 0.0
    %5255 = vmatprep.subr.mxu0 0.0
    %5256 = vmatpush1.msra.mxu0 0.0
    %5257 = vmatprep.mubr.f32.mxu0 0.0
    %v5258 = vand.u32 %v858, 4294901760
    %5259 = vmatmul.mubr.f32.gmra.mrb[0].mxu0 %v5258
    %v5260 = vpop.f32.mrb[0].mxu0
    %v5261 = vadd.f32 %v5183, %v5260
    %v5262 = vpop.f32.mrb[0].mxu0
    %v5263 = vadd.f32 %v5185, %v5262
    %5264 = vdwg.mxu0
    %v5265 = vand.u32 %v4873, 4294901760
    %5266 = vmatprep.subr.mxu0 %v5265
    %v5267 = vand.u32 %v4872, 4294901760
    %5268 = vmatpush1.msra.mxu0 %v5267
    %5269 = vmatprep.subr.mxu0 0.0
    %5270 = vmatpush1.msra.mxu0 0.0
    %5271 = vmatprep.subr.mxu0 0.0
    %5272 = vmatpush1.msra.mxu0 0.0
    %5273 = vmatprep.subr.mxu0 0.0
    %5274 = vmatpush1.msra.mxu0 0.0
    %5275 = vmatprep.subr.mxu0 0.0
    %5276 = vmatpush1.msra.mxu0 0.0
    %5277 = vmatprep.subr.mxu0 0.0
    %5278 = vmatpush1.msra.mxu0 0.0
    %5279 = vmatprep.subr.mxu0 0.0
    %5280 = vmatpush1.msra.mxu0 0.0
    %5281 = vmatprep.subr.mxu0 0.0
    %5282 = vmatpush1.msra.mxu0 0.0
    %5283 = vmatprep.subr.mxu0 0.0
    %5284 = vmatpush1.msra.mxu0 0.0
    %5285 = vmatprep.subr.mxu0 0.0
    %5286 = vmatpush1.msra.mxu0 0.0
    %5287 = vmatprep.subr.mxu0 0.0
    %5288 = vmatpush1.msra.mxu0 0.0
    %5289 = vmatprep.subr.mxu0 0.0
    %5290 = vmatpush1.msra.mxu0 0.0
    %5291 = vmatprep.subr.mxu0 0.0
    %5292 = vmatpush1.msra.mxu0 0.0
    %5293 = vmatprep.subr.mxu0 0.0
    %5294 = vmatpush1.msra.mxu0 0.0
    %5295 = vmatprep.subr.mxu0 0.0
    %5296 = vmatpush1.msra.mxu0 0.0
    %5297 = vmatprep.subr.mxu0 0.0
    %5298 = vmatpush1.msra.mxu0 0.0
    %5299 = vmatprep.subr.mxu0 0.0
    %5300 = vmatpush1.msra.mxu0 0.0
    %5301 = vmatprep.subr.mxu0 0.0
    %5302 = vmatpush1.msra.mxu0 0.0
    %5303 = vmatprep.subr.mxu0 0.0
    %5304 = vmatpush1.msra.mxu0 0.0
    %5305 = vmatprep.subr.mxu0 0.0
    %5306 = vmatpush1.msra.mxu0 0.0
    %5307 = vmatprep.subr.mxu0 0.0
    %5308 = vmatpush1.msra.mxu0 0.0
    %5309 = vmatprep.subr.mxu0 0.0
    %5310 = vmatpush1.msra.mxu0 0.0
    %5311 = vmatprep.subr.mxu0 0.0
    %5312 = vmatpush1.msra.mxu0 0.0
    %5313 = vmatprep.subr.mxu0 0.0
    %5314 = vmatpush1.msra.mxu0 0.0
    %5315 = vmatprep.subr.mxu0 0.0
    %5316 = vmatpush1.msra.mxu0 0.0
    %5317 = vmatprep.subr.mxu0 0.0
    %5318 = vmatpush1.msra.mxu0 0.0
    %5319 = vmatprep.subr.mxu0 0.0
    %5320 = vmatpush1.msra.mxu0 0.0
    %5321 = vmatprep.subr.mxu0 0.0
    %5322 = vmatpush1.msra.mxu0 0.0
    %5323 = vmatprep.subr.mxu0 0.0
    %5324 = vmatpush1.msra.mxu0 0.0
    %5325 = vmatprep.subr.mxu0 0.0
    %5326 = vmatpush1.msra.mxu0 0.0
    %5327 = vmatprep.subr.mxu0 0.0
    %5328 = vmatpush1.msra.mxu0 0.0
    %5329 = vmatprep.subr.mxu0 0.0
    %5330 = vmatpush1.msra.mxu0 0.0
    %5331 = vmatprep.mubr.f32.mxu0 0.0
    %v5332 = vand.u32 %v858, 4294901760
    %5333 = vmatmul.mubr.f32.gmra.mrb[0].mxu0 %v5332
    %v5334 = vpop.f32.mrb[0].mxu0
    %v5335 = vadd.f32 %v5261, %v5334
    %v5336 = vpop.f32.mrb[0].mxu0
    %v5337 = vadd.f32 %v5263, %v5336
    %5338 = vdwg.mxu0
    %v5339 = vadd.f32 %v5335, %v5337
    %5340 = vadd.xlane.f32.xlu0 %v5339
    %v5341 = vpop.xlane.xlu0 %5340
    %v5342 = vmul.f32 %v4871, %v4871
    %v5343 = vsub.f32 %v5341, %v5342
    %v5344 = vld [vmem:[%s11] sm:$0xff]
    %v5345 = vld [vmem:[%s12] sm:$0xff]
    %v5346 = vsub.f32 %v4402, %v4871
    %v5347 = vsub.f32 %v4403, %v4871
    %v5348 = vadd.f32 %v5343, 1e-05
    %v5349 = vrsqrt.pop %v5348
    %v5350 = vmul.f32 %v5344, %v5349
    %5352 = vset.pattern.permute.xlu0 0
    %5353 = vperm.xlu0 %5352, %v5350
    %v5354 = vpop.permute.xlu0 %5353
    %v5356 = vmul.f32 %v5346, %v5354
    %v5357 = vmul.f32 %v5347, %v5354
    %5359 = vset.pattern.permute.xlu0 0
    %5360 = vperm.xlu0 %5359, %v5345
    %v5361 = vpop.permute.xlu0 %5360
    %v5363 = vadd.f32 %v5356, %v5361
    %v5364 = vadd.f32 %v5357, %v5361
    %5365 = vst [vmem:[#allocation6] sm:$0xff] %v5363
    %5366 = vst [vmem:[#allocation6 + $0x8] sm:$0xff] %v5364
    // Predicated region
    $region58: #{tpu_custom_call.1} parent=1 // pred_check
      _
    $region59: #{tpu_custom_call.1} parent=1 // pred_check_branch
      %5368 = sbr.rel (0) target = $region61
    $region60: #{tpu_custom_call.1} parent=1 // pred_region
      %s5370 = ssub.s32 256, 256
      %5371 = vsyncadd [#allocation5], %s5370
      %s5373 = sshll.u32 [#allocation6], 4
      %s5374 = int_to_ptr.vmem [resolvable:$true] %s5373
      %5376 = dma.vmem_to_hbm [thread:$0]  %s5374, 256, %s13, [#allocation5]
    $region61: #{tpu_custom_call.1} parent=1 // pred_fallthru
      _
    // Predicated region
    $region62: #{tpu_custom_call.1} parent=1 // pred_check
      _
    $region63: #{tpu_custom_call.1} parent=1 // pred_check_branch
      %5378 = sbr.rel (0) target = $region65
    $region64: #{tpu_custom_call.1} parent=1 // pred_region
      %5379 = dma.done [#allocation5], 256
    $region65: #{tpu_custom_call.1} parent=1 // pred_fallthru
      _
    %5380 = vsyncpa [#allocation4], 1
    %5381 = vsyncpa [#allocation5], 1

</llo_original>
